<compile_context>
chip_gen: v6e
topology: v6e:2x2x1
jax: 0.10.0
libtpu: 0.0.40
codegen_flags: <defaults>
</compile_context>

<pallas_src>
import math
import jax
import jax.numpy as jnp
from jax.experimental import pallas as pl
from jax.experimental.pallas import tpu as pltpu

TRANSFORMER_HDIM = 768


def _round_up(x, m):
    return ((x + m - 1) // m) * m


def _neuromod_mlp_kernel(cls_ref, w1_ref, b1_ref, w2_ref, b2_ref, out_ref):
    # cls_ref: (tm, H) bf16 | w1/w2: (H, H) bf16 | b1/b2: (1, H) f32 | out: (tm, H)
    h = jnp.dot(cls_ref[...], w1_ref[...],
                preferred_element_type=jnp.float32) + b1_ref[...]
    h = jnp.maximum(h, 0.0)                                        # ReLU (VPU)
    o = jnp.dot(h.astype(jnp.bfloat16), w2_ref[...],
                preferred_element_type=jnp.float32) + b2_ref[...]
    # sigmoid(o) = 1 / (1 + exp(-o)): exp on the EUP, divide via the approx
    # reciprocal (EUP slot) instead of the VALU Newton sequence of jax.nn.sigmoid.
    sig = pl.reciprocal(1.0 + jnp.exp(-o), approx=True)
    out_ref[...] = sig.astype(out_ref.dtype)


def prepare_head_params(w1, b1, w2, b2):
    """One-time parameter prep — call OUTSIDE the per-step hot path.

    Weights are stored bf16 (native MXU dtype; halves the dominant HBM weight
    stream); biases stay f32, reshaped to lane-dense (1, H) rows and added to
    the f32 accumulator inside the kernel.
    # TODO(synk): v7x could use fp8(e4m3) weights (int8 on v5e/v6e) with
    # per-output-channel scales folded into the bias for another 2x on the
    # weight stream.
    """
    return (w1.astype(jnp.bfloat16),
            b1.reshape(1, -1).astype(jnp.float32),
            w2.astype(jnp.bfloat16),
            b2.reshape(1, -1).astype(jnp.float32))


def neuromodulator_head(last_hidden_state, w1, b1_2d, w2, b2_2d, *,
                        max_tm=512, out_dtype=jnp.float32):
    """Pallas implementation of the TransformerNeuromodulator head.

    last_hidden_state: [B, S, H] (encoder output, f32 or bf16)
    w1, w2:            [H, H] bf16 (in_features x out_features, from prepare_head_params)
    b1_2d, b2_2d:      [1, H] f32  (from prepare_head_params)
    returns:           [B, H] out_dtype (f32 by default, matching the PyTorch module)
    """
    B, S, H = last_hidden_state.shape
    assert H == TRANSFORMER_HDIM

    # CLS slice fused with the bf16 downcast: one bf16 [B, H] HBM round trip
    # instead of an f32 one (and no silent upcast if the encoder emits bf16).
    # TODO(synk): folding the slice into the first BlockSpec would need a
    # size-1 second-minor block on the (B, S, H) array, which violates the
    # (8,128) block-shape constraint, so it stays as fused XLA glue.
    cls = last_hidden_state[:, 0, :].astype(jnp.bfloat16)          # [B, H] bf16

    # Balanced batch tiling, no explicit padding: Pallas masks the ragged last
    # block, and rows are independent so pad-row garbage cannot leak into valid
    # rows. Worst-case waste < 8 rows per tile.
    n_steps = pl.cdiv(B, max_tm)
    tm = min(_round_up(pl.cdiv(B, n_steps), 8), max_tm)
    grid = (pl.cdiv(B, tm),)

    # Megacore split duplicates the ~2.3 MB weight DMA across the two v7x
    # TensorCores; only worth it once per-core activation bytes dominate.
    semantics = ("parallel",) if B >= 2048 else ("arbitrary",)

    out_itemsize = jnp.dtype(out_dtype).itemsize
    cost = pl.CostEstimate(
        flops=2 * 2 * B * H * H,                     # two GEMMs
        transcendentals=B * H,                       # exp in the sigmoid
        bytes_accessed=(B * H * 2                    # bf16 cls in
                        + 2 * H * H * 2              # bf16 weights
                        + 2 * H * 4                  # f32 biases
                        + B * H * out_itemsize),     # output
    )

    return pl.pallas_call(
        _neuromod_mlp_kernel,
        out_shape=jax.ShapeDtypeStruct((B, H), out_dtype),
        grid_spec=pltpu.PrefetchScalarGridSpec(
            num_scalar_prefetch=0,
            grid=grid,
            in_specs=[
                pl.BlockSpec((tm, H), lambda i: (i, 0)),   # cls tile (bf16)
                pl.BlockSpec((H, H), lambda i: (0, 0)),    # W1 (bf16, grid-invariant)
                pl.BlockSpec((1, H), lambda i: (0, 0)),    # b1 (f32)
                pl.BlockSpec((H, H), lambda i: (0, 0)),    # W2 (bf16, grid-invariant)
                pl.BlockSpec((1, H), lambda i: (0, 0)),    # b2 (f32)
            ],
            out_specs=pl.BlockSpec((tm, H), lambda i: (i, 0)),
        ),
        compiler_params=pltpu.CompilerParams(
            dimension_semantics=semantics,
            vmem_limit_bytes=32 * 1024 * 1024,       # covers tm=512 on v5e's 16 MiB default
        ),
        cost_estimate=cost,
    )(cls, w1, b1_2d, w2, b2_2d)


def _init_linear_params(key, fan_in, fan_out):
    """Deterministic init matching torch.nn.Linear defaults (Kaiming-uniform-ish)."""
    kw, kb = jax.random.split(key)
    bound = 1.0 / math.sqrt(fan_in)
    # Stored transposed relative to PyTorch: [in_features, out_features].
    w = jax.random.uniform(kw, (fan_in, fan_out), jnp.float32, -bound, bound)
    b = jax.random.uniform(kb, (fan_out,), jnp.float32, -bound, bound)
    return w, b


def reference_head(last_hidden_state, w1, b1, w2, b2):
    cls = last_hidden_state[:, 0, :].astype(jnp.float32)
    h = jnp.maximum(cls @ w1 + b1, 0.0)
    return jax.nn.sigmoid(h @ w2 + b2)


if __name__ == "__main__":
    # TODO(synk): the frozen pretrained HuggingFace encoder is not reproducible
    # in-script; its output (last_hidden_state) is synthesized here instead.
    B, S, H = 6, 16, TRANSFORMER_HDIM   # B=6 exercises the ragged last-block path (tm=8)

    key = jax.random.PRNGKey(0)
    k_x, k_l1, k_l2 = jax.random.split(key, 3)

    last_hidden_state = jax.random.normal(k_x, (B, S, H), jnp.float32)
    w1, b1 = _init_linear_params(k_l1, H, H)
    w2, b2 = _init_linear_params(k_l2, H, H)

    # One-time bf16 parameter prep (outside the hot path).
    w1_bf, b1_2d, w2_bf, b2_2d = prepare_head_params(w1, b1, w2, b2)

    out = neuromodulator_head(last_hidden_state, w1_bf, b1_2d, w2_bf, b2_2d)
    out = jax.block_until_ready(out)

    ref = reference_head(last_hidden_state, w1, b1, w2, b2)   # full-f32 reference
    assert out.shape == (B, H)
    # bf16 matmul operands / f32 accumulation / approx reciprocal: loosened tolerance.
    assert jnp.allclose(out, ref, atol=2e-2), "mismatch vs reference"

    print("KERNEL_OK")
</pallas_src>

<mosaic_0001>
module attributes {stable_mosaic.version = 11 : i64} {
  func.func @_neuromod_mlp_kernel(%arg0: i32, %arg1: memref<8x768xbf16, #tpu.memory_space<vmem>>, %arg2: memref<768x768xbf16, #tpu.memory_space<vmem>>, %arg3: memref<1x768xf32, #tpu.memory_space<vmem>>, %arg4: memref<768x768xbf16, #tpu.memory_space<vmem>>, %arg5: memref<1x768xf32, #tpu.memory_space<vmem>>, %arg6: memref<8x768xf32, #tpu.memory_space<vmem>>) attributes {dimension_semantics = [#tpu.dimension_semantics<arbitrary>], iteration_bounds = array<i64: 1>, scalar_prefetch = 0 : i64, scratch_operands = 0 : i64, tpu.core_type = #tpu.core_type<tc>, window_params = [{transform_indices = @transform_0, window_bounds = array<i64: 8, 768>}, {pipeline_mode = #tpu.pipeline_mode<synchronous>, transform_indices = @transform_1, window_bounds = array<i64: 768, 768>}, {pipeline_mode = #tpu.pipeline_mode<synchronous>, transform_indices = @transform_2, window_bounds = array<i64: 1, 768>}, {pipeline_mode = #tpu.pipeline_mode<synchronous>, transform_indices = @transform_3, window_bounds = array<i64: 768, 768>}, {pipeline_mode = #tpu.pipeline_mode<synchronous>, transform_indices = @transform_4, window_bounds = array<i64: 1, 768>}, {transform_indices = @transform_5, window_bounds = array<i64: 8, 768>}]} {
    %c0 = arith.constant 0 : index
    %c0_0 = arith.constant 0 : index
    %0 = vector.load %arg1[%c0, %c0_0] : memref<8x768xbf16, #tpu.memory_space<vmem>>, vector<8x768xbf16>
    %c0_1 = arith.constant 0 : index
    %c0_2 = arith.constant 0 : index
    %1 = vector.load %arg2[%c0_1, %c0_2] : memref<768x768xbf16, #tpu.memory_space<vmem>>, vector<768x768xbf16>
    %cst = arith.constant dense<0.000000e+00> : vector<8x768xf32>
    %2 = tpu.matmul %0, %1, %cst {dimension_numbers = #tpu.dot_dimension_numbers<[1], [0], [0], [1], [0, 0, 1, 1], [], []>} : vector<8x768xbf16>, vector<768x768xbf16>, vector<8x768xf32> -> vector<8x768xf32>
    %c0_3 = arith.constant 0 : index
    %c0_4 = arith.constant 0 : index
    %3 = vector.load %arg3[%c0_3, %c0_4] : memref<1x768xf32, #tpu.memory_space<vmem>>, vector<1x768xf32>
    %4 = vector.broadcast %3 : vector<1x768xf32> to vector<8x768xf32>
    %5 = arith.addf %2, %4 : vector<8x768xf32>
    %cst_5 = arith.constant 0.000000e+00 : f32
    %6 = vector.broadcast %cst_5 : f32 to vector<8x768xf32>
    %7 = arith.maximumf %5, %6 : vector<8x768xf32>
    %8 = arith.truncf %7 : vector<8x768xf32> to vector<8x768xbf16>
    %c0_6 = arith.constant 0 : index
    %c0_7 = arith.constant 0 : index
    %9 = vector.load %arg4[%c0_6, %c0_7] : memref<768x768xbf16, #tpu.memory_space<vmem>>, vector<768x768xbf16>
    %cst_8 = arith.constant dense<0.000000e+00> : vector<8x768xf32>
    %10 = tpu.matmul %8, %9, %cst_8 {dimension_numbers = #tpu.dot_dimension_numbers<[1], [0], [0], [1], [0, 0, 1, 1], [], []>} : vector<8x768xbf16>, vector<768x768xbf16>, vector<8x768xf32> -> vector<8x768xf32>
    %c0_9 = arith.constant 0 : index
    %c0_10 = arith.constant 0 : index
    %11 = vector.load %arg5[%c0_9, %c0_10] : memref<1x768xf32, #tpu.memory_space<vmem>>, vector<1x768xf32>
    %12 = vector.broadcast %11 : vector<1x768xf32> to vector<8x768xf32>
    %13 = arith.addf %10, %12 : vector<8x768xf32>
    %cst_11 = arith.constant 0.000000e+00 : f32
    %14 = vector.broadcast %cst_11 : f32 to vector<8x768xf32>
    %15 = arith.subf %14, %13 : vector<8x768xf32>
    %16 = math.exp %15 : vector<8x768xf32>
    %cst_12 = arith.constant 1.000000e+00 : f32
    %17 = vector.broadcast %cst_12 : f32 to vector<8x768xf32>
    %18 = arith.addf %17, %16 : vector<8x768xf32>
    %19 = tpu.reciprocal %18 {approx = true} : vector<8x768xf32> -> vector<8x768xf32>
    %c0_13 = arith.constant 0 : index
    %c0_14 = arith.constant 0 : index
    %20 = vector.load %arg6[%c0_13, %c0_14] : memref<8x768xf32, #tpu.memory_space<vmem>>, vector<8x768xf32>
    tpu.vector_store %arg6[%c0_13, %c0_14], %19 {strides = array<i32>} : memref<8x768xf32, #tpu.memory_space<vmem>>, vector<8x768xf32>,
    return
  }
  func.func @transform_0(%arg0: i32) -> (i32, i32) {
    %c0_i32 = arith.constant 0 : i32
    %c0_i32_0 = arith.constant 0 : i32
    return %arg0, %c0_i32 : i32, i32
  }
  func.func @transform_1(%arg0: i32) -> (i32, i32) {
    %c0_i32 = arith.constant 0 : i32
    %c0_i32_0 = arith.constant 0 : i32
    %c0_i32_1 = arith.constant 0 : i32
    return %c0_i32, %c0_i32_0 : i32, i32
  }
  func.func @transform_2(%arg0: i32) -> (i32, i32) {
    %c0_i32 = arith.constant 0 : i32
    %c0_i32_0 = arith.constant 0 : i32
    %c0_i32_1 = arith.constant 0 : i32
    return %c0_i32, %c0_i32_0 : i32, i32
  }
  func.func @transform_3(%arg0: i32) -> (i32, i32) {
    %c0_i32 = arith.constant 0 : i32
    %c0_i32_0 = arith.constant 0 : i32
    %c0_i32_1 = arith.constant 0 : i32
    return %c0_i32, %c0_i32_0 : i32, i32
  }
  func.func @transform_4(%arg0: i32) -> (i32, i32) {
    %c0_i32 = arith.constant 0 : i32
    %c0_i32_0 = arith.constant 0 : i32
    %c0_i32_1 = arith.constant 0 : i32
    return %c0_i32, %c0_i32_0 : i32, i32
  }
  func.func @transform_5(%arg0: i32) -> (i32, i32) {
    %c0_i32 = arith.constant 0 : i32
    %c0_i32_0 = arith.constant 0 : i32
    return %arg0, %c0_i32 : i32, i32
  }
}

</mosaic_0001>

<llo_original>
// kernel: tpu_custom_call.1
$region0: #{tpu_custom_call.1}
  #allocation0 [shape = 'u32[]', space=smem, size = 0x4, offset = 0x4, fixed_abs, tag = 'smem constant byte address 0x4 - core index']
  #allocation1 [shape = 'u32[144,128]{1,0:T(1,128)}', space=vmem, size = 0x12000, scoped, tag = 'internal scratch']
  %s0 = inlined_call_operand.hbm [shape: bf16[6,768], index: 0, kind: input, shape index: {}]
  %s1 = inlined_call_operand.hbm [shape: bf16[768,768], index: 1, kind: input, shape index: {}]
  %s2 = inlined_call_operand.hbm [shape: f32[1,768], index: 2, kind: input, shape index: {}]
  %s3 = inlined_call_operand.hbm [shape: bf16[768,768], index: 3, kind: input, shape index: {}]
  %s4 = inlined_call_operand.hbm [shape: f32[1,768], index: 4, kind: input, shape index: {}]
  %s5 = inlined_call_operand.hbm [shape: f32[6,768], index: 5, kind: output, shape index: {}]
  %s6 = sld [smem:[#allocation0]]
  $region50: #{tpu_custom_call.1} parent=0
    _
  %s8 = ssub.s32 1, %s6
  %s9 = scalar_select 0, %s8, %s6
  $region1: #{tpu_custom_call.1} parent=0
    #allocation2 [shape = 'u8[12288]{0}', space=vmem, size = 0x3000, scoped, tag = 'input window, operand 0, single buffered']
    #allocation3 [shape = 's32[1]{0}', space=sflag, size = 0x4, scoped, tag = 'scoped memory for tpu_custom_call.1']
    #allocation4 [shape = 's32[1]{0}', space=sflag, size = 0x4, scoped, tag = 'scoped memory for tpu_custom_call.1']
    #allocation5 [shape = 'u8[1179648]{0}', space=vmem, size = 0x120000, scoped, tag = 'input window, operand 1, single buffered']
    #allocation6 [shape = 's32[1]{0}', space=sflag, size = 0x4, scoped, tag = 'scoped memory for tpu_custom_call.1']
    #allocation7 [shape = 'u8[3072]{0}', space=vmem, size = 0xc00, scoped, tag = 'input window, operand 2, single buffered']
    #allocation8 [shape = 'u8[1179648]{0}', space=vmem, size = 0x120000, scoped, tag = 'input window, operand 3, single buffered']
    #allocation9 [shape = 's32[1]{0}', space=sflag, size = 0x4, scoped, tag = 'scoped memory for tpu_custom_call.1']
    #allocation10 [shape = 'u8[3072]{0}', space=vmem, size = 0xc00, scoped, tag = 'input window, operand 4, single buffered']
    #allocation11 [shape = 'u8[24576]{0}', space=vmem, size = 0x6000, scoped, tag = 'output window, operand 0, single buffered']
    %10 = vsyncpa [#allocation3], 0
    %11 = vsyncpa [#allocation6], 0
    %12 = vsyncpa [#allocation9], 0
    %13 = vsyncpa [#allocation4], 0
    // Predicated region
    $region2: #{tpu_custom_call.1} parent=1 // pred_check
      _
    $region3: #{tpu_custom_call.1} parent=1 // pred_check_branch
      %15 = sbr.rel (0) target = $region5
    $region4: #{tpu_custom_call.1} parent=1 // pred_region
      %s17 = ssub.s32 384, 384
      %18 = vsyncadd [#allocation3], %s17
      %s20 = sshll.u32 [#allocation2], 4
      %s21 = int_to_ptr.vmem [resolvable:$true] %s20
      %23 = dma.hbm_to_vmem [thread:$0]  %s0, 384, %s21, [#allocation3]
    $region5: #{tpu_custom_call.1} parent=1 // pred_fallthru
      _
    // Predicated region
    $region6: #{tpu_custom_call.1} parent=1 // pred_check
      _
    $region7: #{tpu_custom_call.1} parent=1 // pred_check_branch
      %25 = sbr.rel (0) target = $region9
    $region8: #{tpu_custom_call.1} parent=1 // pred_region
      %s27 = ssub.s32 36864, 36864
      %28 = vsyncadd [#allocation6], %s27
      %s29 = sshll.u32 [#allocation5], 4
      %s30 = int_to_ptr.vmem [resolvable:$true] %s29
      %35 = dma.hbm_to_vmem [thread:$0]  %s1, 36864, %s30, [#allocation6], 384, 384, 24
    $region9: #{tpu_custom_call.1} parent=1 // pred_fallthru
      _
    // Predicated region
    $region10: #{tpu_custom_call.1} parent=1 // pred_check
      _
    $region11: #{tpu_custom_call.1} parent=1 // pred_check_branch
      %37 = sbr.rel (0) target = $region13
    $region12: #{tpu_custom_call.1} parent=1 // pred_region
      %s39 = ssub.s32 96, 96
      %40 = vsyncadd [#allocation6], %s39
      %s42 = sshll.u32 [#allocation7], 4
      %s43 = int_to_ptr.vmem [resolvable:$true] %s42
      %45 = dma.hbm_to_vmem [thread:$0]  %s2, 96, %s43, [#allocation6]
    $region13: #{tpu_custom_call.1} parent=1 // pred_fallthru
      _
    // Predicated region
    $region14: #{tpu_custom_call.1} parent=1 // pred_check
      _
    $region15: #{tpu_custom_call.1} parent=1 // pred_check_branch
      %47 = sbr.rel (0) target = $region17
    $region16: #{tpu_custom_call.1} parent=1 // pred_region
      %s49 = ssub.s32 36864, 36864
      %50 = vsyncadd [#allocation9], %s49
      %s51 = sshll.u32 [#allocation8], 4
      %s52 = int_to_ptr.vmem [resolvable:$true] %s51
      %57 = dma.hbm_to_vmem [thread:$0]  %s3, 36864, %s52, [#allocation9], 384, 384, 24
    $region17: #{tpu_custom_call.1} parent=1 // pred_fallthru
      _
    // Predicated region
    $region18: #{tpu_custom_call.1} parent=1 // pred_check
      _
    $region19: #{tpu_custom_call.1} parent=1 // pred_check_branch
      %59 = sbr.rel (0) target = $region21
    $region20: #{tpu_custom_call.1} parent=1 // pred_region
      %s61 = ssub.s32 96, 96
      %62 = vsyncadd [#allocation9], %s61
      %s64 = sshll.u32 [#allocation10], 4
      %s65 = int_to_ptr.vmem [resolvable:$true] %s64
      %67 = dma.hbm_to_vmem [thread:$0]  %s4, 96, %s65, [#allocation9]
    $region21: #{tpu_custom_call.1} parent=1 // pred_fallthru
      _
    // Predicated region
    $region22: #{tpu_custom_call.1} parent=1 // pred_check
      _
    $region23: #{tpu_custom_call.1} parent=1 // pred_check_branch
      %69 = sbr.rel (0) target = $region25
    $region24: #{tpu_custom_call.1} parent=1 // pred_region
      %70 = dma.done [#allocation3], 384
    $region25: #{tpu_custom_call.1} parent=1 // pred_fallthru
      _
    // Predicated region
    $region26: #{tpu_custom_call.1} parent=1 // pred_check
      _
    $region27: #{tpu_custom_call.1} parent=1 // pred_check_branch
      %72 = sbr.rel (0) target = $region29
    $region28: #{tpu_custom_call.1} parent=1 // pred_region
      %73 = dma.done [#allocation6], 36864
    $region29: #{tpu_custom_call.1} parent=1 // pred_fallthru
      _
    // Predicated region
    $region30: #{tpu_custom_call.1} parent=1 // pred_check
      _
    $region31: #{tpu_custom_call.1} parent=1 // pred_check_branch
      %75 = sbr.rel (0) target = $region33
    $region32: #{tpu_custom_call.1} parent=1 // pred_region
      %76 = dma.done [#allocation6], 96
    $region33: #{tpu_custom_call.1} parent=1 // pred_fallthru
      _
    // Predicated region
    $region34: #{tpu_custom_call.1} parent=1 // pred_check
      _
    $region35: #{tpu_custom_call.1} parent=1 // pred_check_branch
      %78 = sbr.rel (0) target = $region37
    $region36: #{tpu_custom_call.1} parent=1 // pred_region
      %79 = dma.done [#allocation9], 36864
    $region37: #{tpu_custom_call.1} parent=1 // pred_fallthru
      _
    // Predicated region
    $region38: #{tpu_custom_call.1} parent=1 // pred_check
      _
    $region39: #{tpu_custom_call.1} parent=1 // pred_check_branch
      %81 = sbr.rel (0) target = $region41
    $region40: #{tpu_custom_call.1} parent=1 // pred_region
      %82 = dma.done [#allocation9], 96
    $region41: #{tpu_custom_call.1} parent=1 // pred_fallthru
      _
    %v83 = vld [vmem:[#allocation2] sm:$0xff]
    %v84 = vld [vmem:[#allocation2 + $0x8] sm:$0xff]
    %v85 = vld [vmem:[#allocation2 + $0x10] sm:$0xff]
    %v86 = vld [vmem:[#allocation5] sm:$0xff]
    %v87 = vld [vmem:[#allocation5 + $0x8] sm:$0xff]
    %v88 = vld [vmem:[#allocation5 + $0x10] sm:$0xff]
    %v89 = vld [vmem:[#allocation5 + $0x18] sm:$0xff]
    %v90 = vld [vmem:[#allocation5 + $0x20] sm:$0xff]
    %v91 = vld [vmem:[#allocation5 + $0x28] sm:$0xff]
    %v92 = vld [vmem:[#allocation5 + $0x30] sm:$0xff]
    %v93 = vld [vmem:[#allocation5 + $0x38] sm:$0xff]
    %v94 = vld [vmem:[#allocation5 + $0x40] sm:$0xff]
    %v95 = vld [vmem:[#allocation5 + $0x48] sm:$0xff]
    %v96 = vld [vmem:[#allocation5 + $0x50] sm:$0xff]
    %v97 = vld [vmem:[#allocation5 + $0x58] sm:$0xff]
    %v98 = vld [vmem:[#allocation5 + $0x60] sm:$0xff]
    %v99 = vld [vmem:[#allocation5 + $0x68] sm:$0xff]
    %v100 = vld [vmem:[#allocation5 + $0x70] sm:$0xff]
    %v101 = vld [vmem:[#allocation5 + $0x78] sm:$0xff]
    %v102 = vld [vmem:[#allocation5 + $0x80] sm:$0xff]
    %v103 = vld [vmem:[#allocation5 + $0x88] sm:$0xff]
    %v104 = vld [vmem:[#allocation5 + $0x90] sm:$0xff]
    %v105 = vld [vmem:[#allocation5 + $0x98] sm:$0xff]
    %v106 = vld [vmem:[#allocation5 + $0xa0] sm:$0xff]
    %v107 = vld [vmem:[#allocation5 + $0xa8] sm:$0xff]
    %v108 = vld [vmem:[#allocation5 + $0xb0] sm:$0xff]
    %v109 = vld [vmem:[#allocation5 + $0xb8] sm:$0xff]
    %v110 = vld [vmem:[#allocation5 + $0xc0] sm:$0xff]
    %v111 = vld [vmem:[#allocation5 + $0xc8] sm:$0xff]
    %v112 = vld [vmem:[#allocation5 + $0xd0] sm:$0xff]
    %v113 = vld [vmem:[#allocation5 + $0xd8] sm:$0xff]
    %v114 = vld [vmem:[#allocation5 + $0xe0] sm:$0xff]
    %v115 = vld [vmem:[#allocation5 + $0xe8] sm:$0xff]
    %v116 = vld [vmem:[#allocation5 + $0xf0] sm:$0xff]
    %v117 = vld [vmem:[#allocation5 + $0xf8] sm:$0xff]
    %v118 = vld [vmem:[#allocation5 + $0x100] sm:$0xff]
    %v119 = vld [vmem:[#allocation5 + $0x108] sm:$0xff]
    %v120 = vld [vmem:[#allocation5 + $0x110] sm:$0xff]
    %v121 = vld [vmem:[#allocation5 + $0x118] sm:$0xff]
    %v122 = vld [vmem:[#allocation5 + $0x120] sm:$0xff]
    %v123 = vld [vmem:[#allocation5 + $0x128] sm:$0xff]
    %v124 = vld [vmem:[#allocation5 + $0x130] sm:$0xff]
    %v125 = vld [vmem:[#allocation5 + $0x138] sm:$0xff]
    %v126 = vld [vmem:[#allocation5 + $0x140] sm:$0xff]
    %v127 = vld [vmem:[#allocation5 + $0x148] sm:$0xff]
    %v128 = vld [vmem:[#allocation5 + $0x150] sm:$0xff]
    %v129 = vld [vmem:[#allocation5 + $0x158] sm:$0xff]
    %v130 = vld [vmem:[#allocation5 + $0x160] sm:$0xff]
    %v131 = vld [vmem:[#allocation5 + $0x168] sm:$0xff]
    %v132 = vld [vmem:[#allocation5 + $0x170] sm:$0xff]
    %v133 = vld [vmem:[#allocation5 + $0x178] sm:$0xff]
    %v134 = vld [vmem:[#allocation5 + $0x180] sm:$0xff]
    %v135 = vld [vmem:[#allocation5 + $0x188] sm:$0xff]
    %v136 = vld [vmem:[#allocation5 + $0x190] sm:$0xff]
    %v137 = vld [vmem:[#allocation5 + $0x198] sm:$0xff]
    %v138 = vld [vmem:[#allocation5 + $0x1a0] sm:$0xff]
    %v139 = vld [vmem:[#allocation5 + $0x1a8] sm:$0xff]
    %v140 = vld [vmem:[#allocation5 + $0x1b0] sm:$0xff]
    %v141 = vld [vmem:[#allocation5 + $0x1b8] sm:$0xff]
    %v142 = vld [vmem:[#allocation5 + $0x1c0] sm:$0xff]
    %v143 = vld [vmem:[#allocation5 + $0x1c8] sm:$0xff]
    %v144 = vld [vmem:[#allocation5 + $0x1d0] sm:$0xff]
    %v145 = vld [vmem:[#allocation5 + $0x1d8] sm:$0xff]
    %v146 = vld [vmem:[#allocation5 + $0x1e0] sm:$0xff]
    %v147 = vld [vmem:[#allocation5 + $0x1e8] sm:$0xff]
    %v148 = vld [vmem:[#allocation5 + $0x1f0] sm:$0xff]
    %v149 = vld [vmem:[#allocation5 + $0x1f8] sm:$0xff]
    %v150 = vld [vmem:[#allocation5 + $0x200] sm:$0xff]
    %v151 = vld [vmem:[#allocation5 + $0x208] sm:$0xff]
    %v152 = vld [vmem:[#allocation5 + $0x210] sm:$0xff]
    %v153 = vld [vmem:[#allocation5 + $0x218] sm:$0xff]
    %v154 = vld [vmem:[#allocation5 + $0x220] sm:$0xff]
    %v155 = vld [vmem:[#allocation5 + $0x228] sm:$0xff]
    %v156 = vld [vmem:[#allocation5 + $0x230] sm:$0xff]
    %v157 = vld [vmem:[#allocation5 + $0x238] sm:$0xff]
    %v158 = vld [vmem:[#allocation5 + $0x240] sm:$0xff]
    %v159 = vld [vmem:[#allocation5 + $0x248] sm:$0xff]
    %v160 = vld [vmem:[#allocation5 + $0x250] sm:$0xff]
    %v161 = vld [vmem:[#allocation5 + $0x258] sm:$0xff]
    %v162 = vld [vmem:[#allocation5 + $0x260] sm:$0xff]
    %v163 = vld [vmem:[#allocation5 + $0x268] sm:$0xff]
    %v164 = vld [vmem:[#allocation5 + $0x270] sm:$0xff]
    %v165 = vld [vmem:[#allocation5 + $0x278] sm:$0xff]
    %v166 = vld [vmem:[#allocation5 + $0x280] sm:$0xff]
    %v167 = vld [vmem:[#allocation5 + $0x288] sm:$0xff]
    %v168 = vld [vmem:[#allocation5 + $0x290] sm:$0xff]
    %v169 = vld [vmem:[#allocation5 + $0x298] sm:$0xff]
    %v170 = vld [vmem:[#allocation5 + $0x2a0] sm:$0xff]
    %v171 = vld [vmem:[#allocation5 + $0x2a8] sm:$0xff]
    %v172 = vld [vmem:[#allocation5 + $0x2b0] sm:$0xff]
    %v173 = vld [vmem:[#allocation5 + $0x2b8] sm:$0xff]
    %v174 = vld [vmem:[#allocation5 + $0x2c0] sm:$0xff]
    %v175 = vld [vmem:[#allocation5 + $0x2c8] sm:$0xff]
    %v176 = vld [vmem:[#allocation5 + $0x2d0] sm:$0xff]
    %v177 = vld [vmem:[#allocation5 + $0x2d8] sm:$0xff]
    %v178 = vld [vmem:[#allocation5 + $0x2e0] sm:$0xff]
    %v179 = vld [vmem:[#allocation5 + $0x2e8] sm:$0xff]
    %v180 = vld [vmem:[#allocation5 + $0x2f0] sm:$0xff]
    %v181 = vld [vmem:[#allocation5 + $0x2f8] sm:$0xff]
    %v182 = vld [vmem:[#allocation5 + $0x300] sm:$0xff]
    %v183 = vld [vmem:[#allocation5 + $0x308] sm:$0xff]
    %v184 = vld [vmem:[#allocation5 + $0x310] sm:$0xff]
    %v185 = vld [vmem:[#allocation5 + $0x318] sm:$0xff]
    %v186 = vld [vmem:[#allocation5 + $0x320] sm:$0xff]
    %v187 = vld [vmem:[#allocation5 + $0x328] sm:$0xff]
    %v188 = vld [vmem:[#allocation5 + $0x330] sm:$0xff]
    %v189 = vld [vmem:[#allocation5 + $0x338] sm:$0xff]
    %v190 = vld [vmem:[#allocation5 + $0x340] sm:$0xff]
    %v191 = vld [vmem:[#allocation5 + $0x348] sm:$0xff]
    %v192 = vld [vmem:[#allocation5 + $0x350] sm:$0xff]
    %v193 = vld [vmem:[#allocation5 + $0x358] sm:$0xff]
    %v194 = vld [vmem:[#allocation5 + $0x360] sm:$0xff]
    %v195 = vld [vmem:[#allocation5 + $0x368] sm:$0xff]
    %v196 = vld [vmem:[#allocation5 + $0x370] sm:$0xff]
    %v197 = vld [vmem:[#allocation5 + $0x378] sm:$0xff]
    %v198 = vld [vmem:[#allocation5 + $0x380] sm:$0xff]
    %v199 = vld [vmem:[#allocation5 + $0x388] sm:$0xff]
    %v200 = vld [vmem:[#allocation5 + $0x390] sm:$0xff]
    %v201 = vld [vmem:[#allocation5 + $0x398] sm:$0xff]
    %v202 = vld [vmem:[#allocation5 + $0x3a0] sm:$0xff]
    %v203 = vld [vmem:[#allocation5 + $0x3a8] sm:$0xff]
    %v204 = vld [vmem:[#allocation5 + $0x3b0] sm:$0xff]
    %v205 = vld [vmem:[#allocation5 + $0x3b8] sm:$0xff]
    %v206 = vld [vmem:[#allocation5 + $0x3c0] sm:$0xff]
    %v207 = vld [vmem:[#allocation5 + $0x3c8] sm:$0xff]
    %v208 = vld [vmem:[#allocation5 + $0x3d0] sm:$0xff]
    %v209 = vld [vmem:[#allocation5 + $0x3d8] sm:$0xff]
    %v210 = vld [vmem:[#allocation5 + $0x3e0] sm:$0xff]
    %v211 = vld [vmem:[#allocation5 + $0x3e8] sm:$0xff]
    %v212 = vld [vmem:[#allocation5 + $0x3f0] sm:$0xff]
    %v213 = vld [vmem:[#allocation5 + $0x3f8] sm:$0xff]
    %v214 = vld [vmem:[#allocation5 + $0x400] sm:$0xff]
    %v215 = vld [vmem:[#allocation5 + $0x408] sm:$0xff]
    %v216 = vld [vmem:[#allocation5 + $0x410] sm:$0xff]
    %v217 = vld [vmem:[#allocation5 + $0x418] sm:$0xff]
    %v218 = vld [vmem:[#allocation5 + $0x420] sm:$0xff]
    %v219 = vld [vmem:[#allocation5 + $0x428] sm:$0xff]
    %v220 = vld [vmem:[#allocation5 + $0x430] sm:$0xff]
    %v221 = vld [vmem:[#allocation5 + $0x438] sm:$0xff]
    %v222 = vld [vmem:[#allocation5 + $0x440] sm:$0xff]
    %v223 = vld [vmem:[#allocation5 + $0x448] sm:$0xff]
    %v224 = vld [vmem:[#allocation5 + $0x450] sm:$0xff]
    %v225 = vld [vmem:[#allocation5 + $0x458] sm:$0xff]
    %v226 = vld [vmem:[#allocation5 + $0x460] sm:$0xff]
    %v227 = vld [vmem:[#allocation5 + $0x468] sm:$0xff]
    %v228 = vld [vmem:[#allocation5 + $0x470] sm:$0xff]
    %v229 = vld [vmem:[#allocation5 + $0x478] sm:$0xff]
    %v230 = vld [vmem:[#allocation5 + $0x480] sm:$0xff]
    %v231 = vld [vmem:[#allocation5 + $0x488] sm:$0xff]
    %v232 = vld [vmem:[#allocation5 + $0x490] sm:$0xff]
    %v233 = vld [vmem:[#allocation5 + $0x498] sm:$0xff]
    %v234 = vld [vmem:[#allocation5 + $0x4a0] sm:$0xff]
    %v235 = vld [vmem:[#allocation5 + $0x4a8] sm:$0xff]
    %v236 = vld [vmem:[#allocation5 + $0x4b0] sm:$0xff]
    %v237 = vld [vmem:[#allocation5 + $0x4b8] sm:$0xff]
    %v238 = vld [vmem:[#allocation5 + $0x4c0] sm:$0xff]
    %v239 = vld [vmem:[#allocation5 + $0x4c8] sm:$0xff]
    %v240 = vld [vmem:[#allocation5 + $0x4d0] sm:$0xff]
    %v241 = vld [vmem:[#allocation5 + $0x4d8] sm:$0xff]
    %v242 = vld [vmem:[#allocation5 + $0x4e0] sm:$0xff]
    %v243 = vld [vmem:[#allocation5 + $0x4e8] sm:$0xff]
    %v244 = vld [vmem:[#allocation5 + $0x4f0] sm:$0xff]
    %v245 = vld [vmem:[#allocation5 + $0x4f8] sm:$0xff]
    %v246 = vld [vmem:[#allocation5 + $0x500] sm:$0xff]
    %v247 = vld [vmem:[#allocation5 + $0x508] sm:$0xff]
    %v248 = vld [vmem:[#allocation5 + $0x510] sm:$0xff]
    %v249 = vld [vmem:[#allocation5 + $0x518] sm:$0xff]
    %v250 = vld [vmem:[#allocation5 + $0x520] sm:$0xff]
    %v251 = vld [vmem:[#allocation5 + $0x528] sm:$0xff]
    %v252 = vld [vmem:[#allocation5 + $0x530] sm:$0xff]
    %v253 = vld [vmem:[#allocation5 + $0x538] sm:$0xff]
    %v254 = vld [vmem:[#allocation5 + $0x540] sm:$0xff]
    %v255 = vld [vmem:[#allocation5 + $0x548] sm:$0xff]
    %v256 = vld [vmem:[#allocation5 + $0x550] sm:$0xff]
    %v257 = vld [vmem:[#allocation5 + $0x558] sm:$0xff]
    %v258 = vld [vmem:[#allocation5 + $0x560] sm:$0xff]
    %v259 = vld [vmem:[#allocation5 + $0x568] sm:$0xff]
    %v260 = vld [vmem:[#allocation5 + $0x570] sm:$0xff]
    %v261 = vld [vmem:[#allocation5 + $0x578] sm:$0xff]
    %v262 = vld [vmem:[#allocation5 + $0x580] sm:$0xff]
    %v263 = vld [vmem:[#allocation5 + $0x588] sm:$0xff]
    %v264 = vld [vmem:[#allocation5 + $0x590] sm:$0xff]
    %v265 = vld [vmem:[#allocation5 + $0x598] sm:$0xff]
    %v266 = vld [vmem:[#allocation5 + $0x5a0] sm:$0xff]
    %v267 = vld [vmem:[#allocation5 + $0x5a8] sm:$0xff]
    %v268 = vld [vmem:[#allocation5 + $0x5b0] sm:$0xff]
    %v269 = vld [vmem:[#allocation5 + $0x5b8] sm:$0xff]
    %v270 = vld [vmem:[#allocation5 + $0x5c0] sm:$0xff]
    %v271 = vld [vmem:[#allocation5 + $0x5c8] sm:$0xff]
    %v272 = vld [vmem:[#allocation5 + $0x5d0] sm:$0xff]
    %v273 = vld [vmem:[#allocation5 + $0x5d8] sm:$0xff]
    %v274 = vld [vmem:[#allocation5 + $0x5e0] sm:$0xff]
    %v275 = vld [vmem:[#allocation5 + $0x5e8] sm:$0xff]
    %v276 = vld [vmem:[#allocation5 + $0x5f0] sm:$0xff]
    %v277 = vld [vmem:[#allocation5 + $0x5f8] sm:$0xff]
    %v278 = vld [vmem:[#allocation5 + $0x600] sm:$0xff]
    %v279 = vld [vmem:[#allocation5 + $0x608] sm:$0xff]
    %v280 = vld [vmem:[#allocation5 + $0x610] sm:$0xff]
    %v281 = vld [vmem:[#allocation5 + $0x618] sm:$0xff]
    %v282 = vld [vmem:[#allocation5 + $0x620] sm:$0xff]
    %v283 = vld [vmem:[#allocation5 + $0x628] sm:$0xff]
    %v284 = vld [vmem:[#allocation5 + $0x630] sm:$0xff]
    %v285 = vld [vmem:[#allocation5 + $0x638] sm:$0xff]
    %v286 = vld [vmem:[#allocation5 + $0x640] sm:$0xff]
    %v287 = vld [vmem:[#allocation5 + $0x648] sm:$0xff]
    %v288 = vld [vmem:[#allocation5 + $0x650] sm:$0xff]
    %v289 = vld [vmem:[#allocation5 + $0x658] sm:$0xff]
    %v290 = vld [vmem:[#allocation5 + $0x660] sm:$0xff]
    %v291 = vld [vmem:[#allocation5 + $0x668] sm:$0xff]
    %v292 = vld [vmem:[#allocation5 + $0x670] sm:$0xff]
    %v293 = vld [vmem:[#allocation5 + $0x678] sm:$0xff]
    %v294 = vld [vmem:[#allocation5 + $0x680] sm:$0xff]
    %v295 = vld [vmem:[#allocation5 + $0x688] sm:$0xff]
    %v296 = vld [vmem:[#allocation5 + $0x690] sm:$0xff]
    %v297 = vld [vmem:[#allocation5 + $0x698] sm:$0xff]
    %v298 = vld [vmem:[#allocation5 + $0x6a0] sm:$0xff]
    %v299 = vld [vmem:[#allocation5 + $0x6a8] sm:$0xff]
    %v300 = vld [vmem:[#allocation5 + $0x6b0] sm:$0xff]
    %v301 = vld [vmem:[#allocation5 + $0x6b8] sm:$0xff]
    %v302 = vld [vmem:[#allocation5 + $0x6c0] sm:$0xff]
    %v303 = vld [vmem:[#allocation5 + $0x6c8] sm:$0xff]
    %v304 = vld [vmem:[#allocation5 + $0x6d0] sm:$0xff]
    %v305 = vld [vmem:[#allocation5 + $0x6d8] sm:$0xff]
    %v306 = vld [vmem:[#allocation5 + $0x6e0] sm:$0xff]
    %v307 = vld [vmem:[#allocation5 + $0x6e8] sm:$0xff]
    %v308 = vld [vmem:[#allocation5 + $0x6f0] sm:$0xff]
    %v309 = vld [vmem:[#allocation5 + $0x6f8] sm:$0xff]
    %v310 = vld [vmem:[#allocation5 + $0x700] sm:$0xff]
    %v311 = vld [vmem:[#allocation5 + $0x708] sm:$0xff]
    %v312 = vld [vmem:[#allocation5 + $0x710] sm:$0xff]
    %v313 = vld [vmem:[#allocation5 + $0x718] sm:$0xff]
    %v314 = vld [vmem:[#allocation5 + $0x720] sm:$0xff]
    %v315 = vld [vmem:[#allocation5 + $0x728] sm:$0xff]
    %v316 = vld [vmem:[#allocation5 + $0x730] sm:$0xff]
    %v317 = vld [vmem:[#allocation5 + $0x738] sm:$0xff]
    %v318 = vld [vmem:[#allocation5 + $0x740] sm:$0xff]
    %v319 = vld [vmem:[#allocation5 + $0x748] sm:$0xff]
    %v320 = vld [vmem:[#allocation5 + $0x750] sm:$0xff]
    %v321 = vld [vmem:[#allocation5 + $0x758] sm:$0xff]
    %v322 = vld [vmem:[#allocation5 + $0x760] sm:$0xff]
    %v323 = vld [vmem:[#allocation5 + $0x768] sm:$0xff]
    %v324 = vld [vmem:[#allocation5 + $0x770] sm:$0xff]
    %v325 = vld [vmem:[#allocation5 + $0x778] sm:$0xff]
    %v326 = vld [vmem:[#allocation5 + $0x780] sm:$0xff]
    %v327 = vld [vmem:[#allocation5 + $0x788] sm:$0xff]
    %v328 = vld [vmem:[#allocation5 + $0x790] sm:$0xff]
    %v329 = vld [vmem:[#allocation5 + $0x798] sm:$0xff]
    %v330 = vld [vmem:[#allocation5 + $0x7a0] sm:$0xff]
    %v331 = vld [vmem:[#allocation5 + $0x7a8] sm:$0xff]
    %v332 = vld [vmem:[#allocation5 + $0x7b0] sm:$0xff]
    %v333 = vld [vmem:[#allocation5 + $0x7b8] sm:$0xff]
    %v334 = vld [vmem:[#allocation5 + $0x7c0] sm:$0xff]
    %v335 = vld [vmem:[#allocation5 + $0x7c8] sm:$0xff]
    %v336 = vld [vmem:[#allocation5 + $0x7d0] sm:$0xff]
    %v337 = vld [vmem:[#allocation5 + $0x7d8] sm:$0xff]
    %v338 = vld [vmem:[#allocation5 + $0x7e0] sm:$0xff]
    %v339 = vld [vmem:[#allocation5 + $0x7e8] sm:$0xff]
    %v340 = vld [vmem:[#allocation5 + $0x7f0] sm:$0xff]
    %v341 = vld [vmem:[#allocation5 + $0x7f8] sm:$0xff]
    %v342 = vld [vmem:[#allocation5 + $0x800] sm:$0xff]
    %v343 = vld [vmem:[#allocation5 + $0x808] sm:$0xff]
    %v344 = vld [vmem:[#allocation5 + $0x810] sm:$0xff]
    %v345 = vld [vmem:[#allocation5 + $0x818] sm:$0xff]
    %v346 = vld [vmem:[#allocation5 + $0x820] sm:$0xff]
    %v347 = vld [vmem:[#allocation5 + $0x828] sm:$0xff]
    %v348 = vld [vmem:[#allocation5 + $0x830] sm:$0xff]
    %v349 = vld [vmem:[#allocation5 + $0x838] sm:$0xff]
    %v350 = vld [vmem:[#allocation5 + $0x840] sm:$0xff]
    %v351 = vld [vmem:[#allocation5 + $0x848] sm:$0xff]
    %v352 = vld [vmem:[#allocation5 + $0x850] sm:$0xff]
    %v353 = vld [vmem:[#allocation5 + $0x858] sm:$0xff]
    %v354 = vld [vmem:[#allocation5 + $0x860] sm:$0xff]
    %v355 = vld [vmem:[#allocation5 + $0x868] sm:$0xff]
    %v356 = vld [vmem:[#allocation5 + $0x870] sm:$0xff]
    %v357 = vld [vmem:[#allocation5 + $0x878] sm:$0xff]
    %v358 = vld [vmem:[#allocation5 + $0x880] sm:$0xff]
    %v359 = vld [vmem:[#allocation5 + $0x888] sm:$0xff]
    %v360 = vld [vmem:[#allocation5 + $0x890] sm:$0xff]
    %v361 = vld [vmem:[#allocation5 + $0x898] sm:$0xff]
    %v362 = vld [vmem:[#allocation5 + $0x8a0] sm:$0xff]
    %v363 = vld [vmem:[#allocation5 + $0x8a8] sm:$0xff]
    %v364 = vld [vmem:[#allocation5 + $0x8b0] sm:$0xff]
    %v365 = vld [vmem:[#allocation5 + $0x8b8] sm:$0xff]
    %v366 = vld [vmem:[#allocation5 + $0x8c0] sm:$0xff]
    %v367 = vld [vmem:[#allocation5 + $0x8c8] sm:$0xff]
    %v368 = vld [vmem:[#allocation5 + $0x8d0] sm:$0xff]
    %v369 = vld [vmem:[#allocation5 + $0x8d8] sm:$0xff]
    %v370 = vld [vmem:[#allocation5 + $0x8e0] sm:$0xff]
    %v371 = vld [vmem:[#allocation5 + $0x8e8] sm:$0xff]
    %v372 = vld [vmem:[#allocation5 + $0x8f0] sm:$0xff]
    %v373 = vld [vmem:[#allocation5 + $0x8f8] sm:$0xff]
    %v374 = vld [vmem:[#allocation7] sm:$0x3f]
    %v376 = vlaneseq
    %v377 = vshrl.u32 %v376, 7
    %v378 = vsub.s32 0, %v377
    %v379 = vrot.slane %v374, %v378
    %v380 = vlaneseq
    %v381 = vshrl.u32 %v380, 7
    %v382 = vsub.s32 1, %v381
    %v383 = vrot.slane %v374, %v382
    %v384 = vlaneseq
    %v385 = vshrl.u32 %v384, 7
    %v386 = vsub.s32 2, %v385
    %v387 = vrot.slane %v374, %v386
    %v388 = vlaneseq
    %v389 = vshrl.u32 %v388, 7
    %v390 = vsub.s32 3, %v389
    %v391 = vrot.slane %v374, %v390
    %v392 = vlaneseq
    %v393 = vshrl.u32 %v392, 7
    %v394 = vsub.s32 4, %v393
    %v395 = vrot.slane %v374, %v394
    %v396 = vlaneseq
    %v397 = vshrl.u32 %v396, 7
    %v398 = vsub.s32 5, %v397
    %v399 = vrot.slane %v374, %v398
    %v409 = vunpack.c.l.b16 %v83
    %v410 = vunpack.c.h.b16 %v83
    %v411 = vunpack.c.l.b16 %v84
    %v412 = vunpack.c.h.b16 %v84
    %v413 = vunpack.c.l.b16 %v85
    %v414 = vunpack.c.h.b16 %v85
    %v415 = vpack.c.b16 %v409, %v409
    %v416 = vpack.c.b16 %v410, %v410
    %v417 = vpack.c.b16 %v411, %v411
    %v418 = vpack.c.b16 %v412, %v412
    %v419 = vpack.c.b16 %v413, %v413
    %v420 = vpack.c.b16 %v414, %v414
    %v715 = vunpack.c.l.b16 %v86
    %v716 = vunpack.c.h.b16 %v86
    %v717 = vunpack.c.l.b16 %v87
    %v718 = vunpack.c.h.b16 %v87
    %v719 = vunpack.c.l.b16 %v88
    %v720 = vunpack.c.h.b16 %v88
    %v721 = vunpack.c.l.b16 %v89
    %v722 = vunpack.c.h.b16 %v89
    %v723 = vunpack.c.l.b16 %v90
    %v724 = vunpack.c.h.b16 %v90
    %v725 = vunpack.c.l.b16 %v91
    %v726 = vunpack.c.h.b16 %v91
    %v727 = vunpack.c.l.b16 %v92
    %v728 = vunpack.c.h.b16 %v92
    %v729 = vunpack.c.l.b16 %v93
    %v730 = vunpack.c.h.b16 %v93
    %v731 = vunpack.c.l.b16 %v94
    %v732 = vunpack.c.h.b16 %v94
    %v733 = vunpack.c.l.b16 %v95
    %v734 = vunpack.c.h.b16 %v95
    %v735 = vunpack.c.l.b16 %v96
    %v736 = vunpack.c.h.b16 %v96
    %v737 = vunpack.c.l.b16 %v97
    %v738 = vunpack.c.h.b16 %v97
    %v739 = vunpack.c.l.b16 %v98
    %v740 = vunpack.c.h.b16 %v98
    %v741 = vunpack.c.l.b16 %v99
    %v742 = vunpack.c.h.b16 %v99
    %v743 = vunpack.c.l.b16 %v100
    %v744 = vunpack.c.h.b16 %v100
    %v745 = vunpack.c.l.b16 %v101
    %v746 = vunpack.c.h.b16 %v101
    %v747 = vunpack.c.l.b16 %v102
    %v748 = vunpack.c.h.b16 %v102
    %v749 = vunpack.c.l.b16 %v103
    %v750 = vunpack.c.h.b16 %v103
    %v751 = vunpack.c.l.b16 %v104
    %v752 = vunpack.c.h.b16 %v104
    %v753 = vunpack.c.l.b16 %v105
    %v754 = vunpack.c.h.b16 %v105
    %v755 = vunpack.c.l.b16 %v106
    %v756 = vunpack.c.h.b16 %v106
    %v757 = vunpack.c.l.b16 %v107
    %v758 = vunpack.c.h.b16 %v107
    %v759 = vunpack.c.l.b16 %v108
    %v760 = vunpack.c.h.b16 %v108
    %v761 = vunpack.c.l.b16 %v109
    %v762 = vunpack.c.h.b16 %v109
    %v763 = vunpack.c.l.b16 %v110
    %v764 = vunpack.c.h.b16 %v110
    %v765 = vunpack.c.l.b16 %v111
    %v766 = vunpack.c.h.b16 %v111
    %v767 = vunpack.c.l.b16 %v112
    %v768 = vunpack.c.h.b16 %v112
    %v769 = vunpack.c.l.b16 %v113
    %v770 = vunpack.c.h.b16 %v113
    %v771 = vunpack.c.l.b16 %v114
    %v772 = vunpack.c.h.b16 %v114
    %v773 = vunpack.c.l.b16 %v115
    %v774 = vunpack.c.h.b16 %v115
    %v775 = vunpack.c.l.b16 %v116
    %v776 = vunpack.c.h.b16 %v116
    %v777 = vunpack.c.l.b16 %v117
    %v778 = vunpack.c.h.b16 %v117
    %v779 = vunpack.c.l.b16 %v118
    %v780 = vunpack.c.h.b16 %v118
    %v781 = vunpack.c.l.b16 %v119
    %v782 = vunpack.c.h.b16 %v119
    %v783 = vunpack.c.l.b16 %v120
    %v784 = vunpack.c.h.b16 %v120
    %v785 = vunpack.c.l.b16 %v121
    %v786 = vunpack.c.h.b16 %v121
    %v787 = vunpack.c.l.b16 %v122
    %v788 = vunpack.c.h.b16 %v122
    %v789 = vunpack.c.l.b16 %v123
    %v790 = vunpack.c.h.b16 %v123
    %v791 = vunpack.c.l.b16 %v124
    %v792 = vunpack.c.h.b16 %v124
    %v793 = vunpack.c.l.b16 %v125
    %v794 = vunpack.c.h.b16 %v125
    %v795 = vunpack.c.l.b16 %v126
    %v796 = vunpack.c.h.b16 %v126
    %v797 = vunpack.c.l.b16 %v127
    %v798 = vunpack.c.h.b16 %v127
    %v799 = vunpack.c.l.b16 %v128
    %v800 = vunpack.c.h.b16 %v128
    %v801 = vunpack.c.l.b16 %v129
    %v802 = vunpack.c.h.b16 %v129
    %v803 = vunpack.c.l.b16 %v130
    %v804 = vunpack.c.h.b16 %v130
    %v805 = vunpack.c.l.b16 %v131
    %v806 = vunpack.c.h.b16 %v131
    %v807 = vunpack.c.l.b16 %v132
    %v808 = vunpack.c.h.b16 %v132
    %v809 = vunpack.c.l.b16 %v133
    %v810 = vunpack.c.h.b16 %v133
    %v811 = vunpack.c.l.b16 %v134
    %v812 = vunpack.c.h.b16 %v134
    %v813 = vunpack.c.l.b16 %v135
    %v814 = vunpack.c.h.b16 %v135
    %v815 = vunpack.c.l.b16 %v136
    %v816 = vunpack.c.h.b16 %v136
    %v817 = vunpack.c.l.b16 %v137
    %v818 = vunpack.c.h.b16 %v137
    %v819 = vunpack.c.l.b16 %v138
    %v820 = vunpack.c.h.b16 %v138
    %v821 = vunpack.c.l.b16 %v139
    %v822 = vunpack.c.h.b16 %v139
    %v823 = vunpack.c.l.b16 %v140
    %v824 = vunpack.c.h.b16 %v140
    %v825 = vunpack.c.l.b16 %v141
    %v826 = vunpack.c.h.b16 %v141
    %v827 = vunpack.c.l.b16 %v142
    %v828 = vunpack.c.h.b16 %v142
    %v829 = vunpack.c.l.b16 %v143
    %v830 = vunpack.c.h.b16 %v143
    %v831 = vunpack.c.l.b16 %v144
    %v832 = vunpack.c.h.b16 %v144
    %v833 = vunpack.c.l.b16 %v145
    %v834 = vunpack.c.h.b16 %v145
    %v835 = vunpack.c.l.b16 %v146
    %v836 = vunpack.c.h.b16 %v146
    %v837 = vunpack.c.l.b16 %v147
    %v838 = vunpack.c.h.b16 %v147
    %v839 = vunpack.c.l.b16 %v148
    %v840 = vunpack.c.h.b16 %v148
    %v841 = vunpack.c.l.b16 %v149
    %v842 = vunpack.c.h.b16 %v149
    %v843 = vunpack.c.l.b16 %v150
    %v844 = vunpack.c.h.b16 %v150
    %v845 = vunpack.c.l.b16 %v151
    %v846 = vunpack.c.h.b16 %v151
    %v847 = vunpack.c.l.b16 %v152
    %v848 = vunpack.c.h.b16 %v152
    %v849 = vunpack.c.l.b16 %v153
    %v850 = vunpack.c.h.b16 %v153
    %v851 = vunpack.c.l.b16 %v154
    %v852 = vunpack.c.h.b16 %v154
    %v853 = vunpack.c.l.b16 %v155
    %v854 = vunpack.c.h.b16 %v155
    %v855 = vunpack.c.l.b16 %v156
    %v856 = vunpack.c.h.b16 %v156
    %v857 = vunpack.c.l.b16 %v157
    %v858 = vunpack.c.h.b16 %v157
    %v859 = vunpack.c.l.b16 %v158
    %v860 = vunpack.c.h.b16 %v158
    %v861 = vunpack.c.l.b16 %v159
    %v862 = vunpack.c.h.b16 %v159
    %v863 = vunpack.c.l.b16 %v160
    %v864 = vunpack.c.h.b16 %v160
    %v865 = vunpack.c.l.b16 %v161
    %v866 = vunpack.c.h.b16 %v161
    %v867 = vunpack.c.l.b16 %v162
    %v868 = vunpack.c.h.b16 %v162
    %v869 = vunpack.c.l.b16 %v163
    %v870 = vunpack.c.h.b16 %v163
    %v871 = vunpack.c.l.b16 %v164
    %v872 = vunpack.c.h.b16 %v164
    %v873 = vunpack.c.l.b16 %v165
    %v874 = vunpack.c.h.b16 %v165
    %v875 = vunpack.c.l.b16 %v166
    %v876 = vunpack.c.h.b16 %v166
    %v877 = vunpack.c.l.b16 %v167
    %v878 = vunpack.c.h.b16 %v167
    %v879 = vunpack.c.l.b16 %v168
    %v880 = vunpack.c.h.b16 %v168
    %v881 = vunpack.c.l.b16 %v169
    %v882 = vunpack.c.h.b16 %v169
    %v883 = vunpack.c.l.b16 %v170
    %v884 = vunpack.c.h.b16 %v170
    %v885 = vunpack.c.l.b16 %v171
    %v886 = vunpack.c.h.b16 %v171
    %v887 = vunpack.c.l.b16 %v172
    %v888 = vunpack.c.h.b16 %v172
    %v889 = vunpack.c.l.b16 %v173
    %v890 = vunpack.c.h.b16 %v173
    %v891 = vunpack.c.l.b16 %v174
    %v892 = vunpack.c.h.b16 %v174
    %v893 = vunpack.c.l.b16 %v175
    %v894 = vunpack.c.h.b16 %v175
    %v895 = vunpack.c.l.b16 %v176
    %v896 = vunpack.c.h.b16 %v176
    %v897 = vunpack.c.l.b16 %v177
    %v898 = vunpack.c.h.b16 %v177
    %v899 = vunpack.c.l.b16 %v178
    %v900 = vunpack.c.h.b16 %v178
    %v901 = vunpack.c.l.b16 %v179
    %v902 = vunpack.c.h.b16 %v179
    %v903 = vunpack.c.l.b16 %v180
    %v904 = vunpack.c.h.b16 %v180
    %v905 = vunpack.c.l.b16 %v181
    %v906 = vunpack.c.h.b16 %v181
    %v907 = vunpack.c.l.b16 %v182
    %v908 = vunpack.c.h.b16 %v182
    %v909 = vunpack.c.l.b16 %v183
    %v910 = vunpack.c.h.b16 %v183
    %v911 = vunpack.c.l.b16 %v184
    %v912 = vunpack.c.h.b16 %v184
    %v913 = vunpack.c.l.b16 %v185
    %v914 = vunpack.c.h.b16 %v185
    %v915 = vunpack.c.l.b16 %v186
    %v916 = vunpack.c.h.b16 %v186
    %v917 = vunpack.c.l.b16 %v187
    %v918 = vunpack.c.h.b16 %v187
    %v919 = vunpack.c.l.b16 %v188
    %v920 = vunpack.c.h.b16 %v188
    %v921 = vunpack.c.l.b16 %v189
    %v922 = vunpack.c.h.b16 %v189
    %v923 = vunpack.c.l.b16 %v190
    %v924 = vunpack.c.h.b16 %v190
    %v925 = vunpack.c.l.b16 %v191
    %v926 = vunpack.c.h.b16 %v191
    %v927 = vunpack.c.l.b16 %v192
    %v928 = vunpack.c.h.b16 %v192
    %v929 = vunpack.c.l.b16 %v193
    %v930 = vunpack.c.h.b16 %v193
    %v931 = vunpack.c.l.b16 %v194
    %v932 = vunpack.c.h.b16 %v194
    %v933 = vunpack.c.l.b16 %v195
    %v934 = vunpack.c.h.b16 %v195
    %v935 = vunpack.c.l.b16 %v196
    %v936 = vunpack.c.h.b16 %v196
    %v937 = vunpack.c.l.b16 %v197
    %v938 = vunpack.c.h.b16 %v197
    %v939 = vunpack.c.l.b16 %v198
    %v940 = vunpack.c.h.b16 %v198
    %v941 = vunpack.c.l.b16 %v199
    %v942 = vunpack.c.h.b16 %v199
    %v943 = vunpack.c.l.b16 %v200
    %v944 = vunpack.c.h.b16 %v200
    %v945 = vunpack.c.l.b16 %v201
    %v946 = vunpack.c.h.b16 %v201
    %v947 = vunpack.c.l.b16 %v202
    %v948 = vunpack.c.h.b16 %v202
    %v949 = vunpack.c.l.b16 %v203
    %v950 = vunpack.c.h.b16 %v203
    %v951 = vunpack.c.l.b16 %v204
    %v952 = vunpack.c.h.b16 %v204
    %v953 = vunpack.c.l.b16 %v205
    %v954 = vunpack.c.h.b16 %v205
    %v955 = vunpack.c.l.b16 %v206
    %v956 = vunpack.c.h.b16 %v206
    %v957 = vunpack.c.l.b16 %v207
    %v958 = vunpack.c.h.b16 %v207
    %v959 = vunpack.c.l.b16 %v208
    %v960 = vunpack.c.h.b16 %v208
    %v961 = vunpack.c.l.b16 %v209
    %v962 = vunpack.c.h.b16 %v209
    %v963 = vunpack.c.l.b16 %v210
    %v964 = vunpack.c.h.b16 %v210
    %v965 = vunpack.c.l.b16 %v211
    %v966 = vunpack.c.h.b16 %v211
    %v967 = vunpack.c.l.b16 %v212
    %v968 = vunpack.c.h.b16 %v212
    %v969 = vunpack.c.l.b16 %v213
    %v970 = vunpack.c.h.b16 %v213
    %v971 = vunpack.c.l.b16 %v214
    %v972 = vunpack.c.h.b16 %v214
    %v973 = vunpack.c.l.b16 %v215
    %v974 = vunpack.c.h.b16 %v215
    %v975 = vunpack.c.l.b16 %v216
    %v976 = vunpack.c.h.b16 %v216
    %v977 = vunpack.c.l.b16 %v217
    %v978 = vunpack.c.h.b16 %v217
    %v979 = vunpack.c.l.b16 %v218
    %v980 = vunpack.c.h.b16 %v218
    %v981 = vunpack.c.l.b16 %v219
    %v982 = vunpack.c.h.b16 %v219
    %v983 = vunpack.c.l.b16 %v220
    %v984 = vunpack.c.h.b16 %v220
    %v985 = vunpack.c.l.b16 %v221
    %v986 = vunpack.c.h.b16 %v221
    %v987 = vunpack.c.l.b16 %v222
    %v988 = vunpack.c.h.b16 %v222
    %v989 = vunpack.c.l.b16 %v223
    %v990 = vunpack.c.h.b16 %v223
    %v991 = vunpack.c.l.b16 %v224
    %v992 = vunpack.c.h.b16 %v224
    %v993 = vunpack.c.l.b16 %v225
    %v994 = vunpack.c.h.b16 %v225
    %v995 = vunpack.c.l.b16 %v226
    %v996 = vunpack.c.h.b16 %v226
    %v997 = vunpack.c.l.b16 %v227
    %v998 = vunpack.c.h.b16 %v227
    %v999 = vunpack.c.l.b16 %v228
    %v1000 = vunpack.c.h.b16 %v228
    %v1001 = vunpack.c.l.b16 %v229
    %v1002 = vunpack.c.h.b16 %v229
    %v1003 = vunpack.c.l.b16 %v230
    %v1004 = vunpack.c.h.b16 %v230
    %v1005 = vunpack.c.l.b16 %v231
    %v1006 = vunpack.c.h.b16 %v231
    %v1007 = vunpack.c.l.b16 %v232
    %v1008 = vunpack.c.h.b16 %v232
    %v1009 = vunpack.c.l.b16 %v233
    %v1010 = vunpack.c.h.b16 %v233
    %v1011 = vunpack.c.l.b16 %v234
    %v1012 = vunpack.c.h.b16 %v234
    %v1013 = vunpack.c.l.b16 %v235
    %v1014 = vunpack.c.h.b16 %v235
    %v1015 = vunpack.c.l.b16 %v236
    %v1016 = vunpack.c.h.b16 %v236
    %v1017 = vunpack.c.l.b16 %v237
    %v1018 = vunpack.c.h.b16 %v237
    %v1019 = vunpack.c.l.b16 %v238
    %v1020 = vunpack.c.h.b16 %v238
    %v1021 = vunpack.c.l.b16 %v239
    %v1022 = vunpack.c.h.b16 %v239
    %v1023 = vunpack.c.l.b16 %v240
    %v1024 = vunpack.c.h.b16 %v240
    %v1025 = vunpack.c.l.b16 %v241
    %v1026 = vunpack.c.h.b16 %v241
    %v1027 = vunpack.c.l.b16 %v242
    %v1028 = vunpack.c.h.b16 %v242
    %v1029 = vunpack.c.l.b16 %v243
    %v1030 = vunpack.c.h.b16 %v243
    %v1031 = vunpack.c.l.b16 %v244
    %v1032 = vunpack.c.h.b16 %v244
    %v1033 = vunpack.c.l.b16 %v245
    %v1034 = vunpack.c.h.b16 %v245
    %v1035 = vunpack.c.l.b16 %v246
    %v1036 = vunpack.c.h.b16 %v246
    %v1037 = vunpack.c.l.b16 %v247
    %v1038 = vunpack.c.h.b16 %v247
    %v1039 = vunpack.c.l.b16 %v248
    %v1040 = vunpack.c.h.b16 %v248
    %v1041 = vunpack.c.l.b16 %v249
    %v1042 = vunpack.c.h.b16 %v249
    %v1043 = vunpack.c.l.b16 %v250
    %v1044 = vunpack.c.h.b16 %v250
    %v1045 = vunpack.c.l.b16 %v251
    %v1046 = vunpack.c.h.b16 %v251
    %v1047 = vunpack.c.l.b16 %v252
    %v1048 = vunpack.c.h.b16 %v252
    %v1049 = vunpack.c.l.b16 %v253
    %v1050 = vunpack.c.h.b16 %v253
    %v1051 = vunpack.c.l.b16 %v254
    %v1052 = vunpack.c.h.b16 %v254
    %v1053 = vunpack.c.l.b16 %v255
    %v1054 = vunpack.c.h.b16 %v255
    %v1055 = vunpack.c.l.b16 %v256
    %v1056 = vunpack.c.h.b16 %v256
    %v1057 = vunpack.c.l.b16 %v257
    %v1058 = vunpack.c.h.b16 %v257
    %v1059 = vunpack.c.l.b16 %v258
    %v1060 = vunpack.c.h.b16 %v258
    %v1061 = vunpack.c.l.b16 %v259
    %v1062 = vunpack.c.h.b16 %v259
    %v1063 = vunpack.c.l.b16 %v260
    %v1064 = vunpack.c.h.b16 %v260
    %v1065 = vunpack.c.l.b16 %v261
    %v1066 = vunpack.c.h.b16 %v261
    %v1067 = vunpack.c.l.b16 %v262
    %v1068 = vunpack.c.h.b16 %v262
    %v1069 = vunpack.c.l.b16 %v263
    %v1070 = vunpack.c.h.b16 %v263
    %v1071 = vunpack.c.l.b16 %v264
    %v1072 = vunpack.c.h.b16 %v264
    %v1073 = vunpack.c.l.b16 %v265
    %v1074 = vunpack.c.h.b16 %v265
    %v1075 = vunpack.c.l.b16 %v266
    %v1076 = vunpack.c.h.b16 %v266
    %v1077 = vunpack.c.l.b16 %v267
    %v1078 = vunpack.c.h.b16 %v267
    %v1079 = vunpack.c.l.b16 %v268
    %v1080 = vunpack.c.h.b16 %v268
    %v1081 = vunpack.c.l.b16 %v269
    %v1082 = vunpack.c.h.b16 %v269
    %v1083 = vunpack.c.l.b16 %v270
    %v1084 = vunpack.c.h.b16 %v270
    %v1085 = vunpack.c.l.b16 %v271
    %v1086 = vunpack.c.h.b16 %v271
    %v1087 = vunpack.c.l.b16 %v272
    %v1088 = vunpack.c.h.b16 %v272
    %v1089 = vunpack.c.l.b16 %v273
    %v1090 = vunpack.c.h.b16 %v273
    %v1091 = vunpack.c.l.b16 %v274
    %v1092 = vunpack.c.h.b16 %v274
    %v1093 = vunpack.c.l.b16 %v275
    %v1094 = vunpack.c.h.b16 %v275
    %v1095 = vunpack.c.l.b16 %v276
    %v1096 = vunpack.c.h.b16 %v276
    %v1097 = vunpack.c.l.b16 %v277
    %v1098 = vunpack.c.h.b16 %v277
    %v1099 = vunpack.c.l.b16 %v278
    %v1100 = vunpack.c.h.b16 %v278
    %v1101 = vunpack.c.l.b16 %v279
    %v1102 = vunpack.c.h.b16 %v279
    %v1103 = vunpack.c.l.b16 %v280
    %v1104 = vunpack.c.h.b16 %v280
    %v1105 = vunpack.c.l.b16 %v281
    %v1106 = vunpack.c.h.b16 %v281
    %v1107 = vunpack.c.l.b16 %v282
    %v1108 = vunpack.c.h.b16 %v282
    %v1109 = vunpack.c.l.b16 %v283
    %v1110 = vunpack.c.h.b16 %v283
    %v1111 = vunpack.c.l.b16 %v284
    %v1112 = vunpack.c.h.b16 %v284
    %v1113 = vunpack.c.l.b16 %v285
    %v1114 = vunpack.c.h.b16 %v285
    %v1115 = vunpack.c.l.b16 %v286
    %v1116 = vunpack.c.h.b16 %v286
    %v1117 = vunpack.c.l.b16 %v287
    %v1118 = vunpack.c.h.b16 %v287
    %v1119 = vunpack.c.l.b16 %v288
    %v1120 = vunpack.c.h.b16 %v288
    %v1121 = vunpack.c.l.b16 %v289
    %v1122 = vunpack.c.h.b16 %v289
    %v1123 = vunpack.c.l.b16 %v290
    %v1124 = vunpack.c.h.b16 %v290
    %v1125 = vunpack.c.l.b16 %v291
    %v1126 = vunpack.c.h.b16 %v291
    %v1127 = vunpack.c.l.b16 %v292
    %v1128 = vunpack.c.h.b16 %v292
    %v1129 = vunpack.c.l.b16 %v293
    %v1130 = vunpack.c.h.b16 %v293
    %v1131 = vunpack.c.l.b16 %v294
    %v1132 = vunpack.c.h.b16 %v294
    %v1133 = vunpack.c.l.b16 %v295
    %v1134 = vunpack.c.h.b16 %v295
    %v1135 = vunpack.c.l.b16 %v296
    %v1136 = vunpack.c.h.b16 %v296
    %v1137 = vunpack.c.l.b16 %v297
    %v1138 = vunpack.c.h.b16 %v297
    %v1139 = vunpack.c.l.b16 %v298
    %v1140 = vunpack.c.h.b16 %v298
    %v1141 = vunpack.c.l.b16 %v299
    %v1142 = vunpack.c.h.b16 %v299
    %v1143 = vunpack.c.l.b16 %v300
    %v1144 = vunpack.c.h.b16 %v300
    %v1145 = vunpack.c.l.b16 %v301
    %v1146 = vunpack.c.h.b16 %v301
    %v1147 = vunpack.c.l.b16 %v302
    %v1148 = vunpack.c.h.b16 %v302
    %v1149 = vunpack.c.l.b16 %v303
    %v1150 = vunpack.c.h.b16 %v303
    %v1151 = vunpack.c.l.b16 %v304
    %v1152 = vunpack.c.h.b16 %v304
    %v1153 = vunpack.c.l.b16 %v305
    %v1154 = vunpack.c.h.b16 %v305
    %v1155 = vunpack.c.l.b16 %v306
    %v1156 = vunpack.c.h.b16 %v306
    %v1157 = vunpack.c.l.b16 %v307
    %v1158 = vunpack.c.h.b16 %v307
    %v1159 = vunpack.c.l.b16 %v308
    %v1160 = vunpack.c.h.b16 %v308
    %v1161 = vunpack.c.l.b16 %v309
    %v1162 = vunpack.c.h.b16 %v309
    %v1163 = vunpack.c.l.b16 %v310
    %v1164 = vunpack.c.h.b16 %v310
    %v1165 = vunpack.c.l.b16 %v311
    %v1166 = vunpack.c.h.b16 %v311
    %v1167 = vunpack.c.l.b16 %v312
    %v1168 = vunpack.c.h.b16 %v312
    %v1169 = vunpack.c.l.b16 %v313
    %v1170 = vunpack.c.h.b16 %v313
    %v1171 = vunpack.c.l.b16 %v314
    %v1172 = vunpack.c.h.b16 %v314
    %v1173 = vunpack.c.l.b16 %v315
    %v1174 = vunpack.c.h.b16 %v315
    %v1175 = vunpack.c.l.b16 %v316
    %v1176 = vunpack.c.h.b16 %v316
    %v1177 = vunpack.c.l.b16 %v317
    %v1178 = vunpack.c.h.b16 %v317
    %v1179 = vunpack.c.l.b16 %v318
    %v1180 = vunpack.c.h.b16 %v318
    %v1181 = vunpack.c.l.b16 %v319
    %v1182 = vunpack.c.h.b16 %v319
    %v1183 = vunpack.c.l.b16 %v320
    %v1184 = vunpack.c.h.b16 %v320
    %v1185 = vunpack.c.l.b16 %v321
    %v1186 = vunpack.c.h.b16 %v321
    %v1187 = vunpack.c.l.b16 %v322
    %v1188 = vunpack.c.h.b16 %v322
    %v1189 = vunpack.c.l.b16 %v323
    %v1190 = vunpack.c.h.b16 %v323
    %v1191 = vunpack.c.l.b16 %v324
    %v1192 = vunpack.c.h.b16 %v324
    %v1193 = vunpack.c.l.b16 %v325
    %v1194 = vunpack.c.h.b16 %v325
    %v1195 = vunpack.c.l.b16 %v326
    %v1196 = vunpack.c.h.b16 %v326
    %v1197 = vunpack.c.l.b16 %v327
    %v1198 = vunpack.c.h.b16 %v327
    %v1199 = vunpack.c.l.b16 %v328
    %v1200 = vunpack.c.h.b16 %v328
    %v1201 = vunpack.c.l.b16 %v329
    %v1202 = vunpack.c.h.b16 %v329
    %v1203 = vunpack.c.l.b16 %v330
    %v1204 = vunpack.c.h.b16 %v330
    %v1205 = vunpack.c.l.b16 %v331
    %v1206 = vunpack.c.h.b16 %v331
    %v1207 = vunpack.c.l.b16 %v332
    %v1208 = vunpack.c.h.b16 %v332
    %v1209 = vunpack.c.l.b16 %v333
    %v1210 = vunpack.c.h.b16 %v333
    %v1211 = vunpack.c.l.b16 %v334
    %v1212 = vunpack.c.h.b16 %v334
    %v1213 = vunpack.c.l.b16 %v335
    %v1214 = vunpack.c.h.b16 %v335
    %v1215 = vunpack.c.l.b16 %v336
    %v1216 = vunpack.c.h.b16 %v336
    %v1217 = vunpack.c.l.b16 %v337
    %v1218 = vunpack.c.h.b16 %v337
    %v1219 = vunpack.c.l.b16 %v338
    %v1220 = vunpack.c.h.b16 %v338
    %v1221 = vunpack.c.l.b16 %v339
    %v1222 = vunpack.c.h.b16 %v339
    %v1223 = vunpack.c.l.b16 %v340
    %v1224 = vunpack.c.h.b16 %v340
    %v1225 = vunpack.c.l.b16 %v341
    %v1226 = vunpack.c.h.b16 %v341
    %v1227 = vunpack.c.l.b16 %v342
    %v1228 = vunpack.c.h.b16 %v342
    %v1229 = vunpack.c.l.b16 %v343
    %v1230 = vunpack.c.h.b16 %v343
    %v1231 = vunpack.c.l.b16 %v344
    %v1232 = vunpack.c.h.b16 %v344
    %v1233 = vunpack.c.l.b16 %v345
    %v1234 = vunpack.c.h.b16 %v345
    %v1235 = vunpack.c.l.b16 %v346
    %v1236 = vunpack.c.h.b16 %v346
    %v1237 = vunpack.c.l.b16 %v347
    %v1238 = vunpack.c.h.b16 %v347
    %v1239 = vunpack.c.l.b16 %v348
    %v1240 = vunpack.c.h.b16 %v348
    %v1241 = vunpack.c.l.b16 %v349
    %v1242 = vunpack.c.h.b16 %v349
    %v1243 = vunpack.c.l.b16 %v350
    %v1244 = vunpack.c.h.b16 %v350
    %v1245 = vunpack.c.l.b16 %v351
    %v1246 = vunpack.c.h.b16 %v351
    %v1247 = vunpack.c.l.b16 %v352
    %v1248 = vunpack.c.h.b16 %v352
    %v1249 = vunpack.c.l.b16 %v353
    %v1250 = vunpack.c.h.b16 %v353
    %v1251 = vunpack.c.l.b16 %v354
    %v1252 = vunpack.c.h.b16 %v354
    %v1253 = vunpack.c.l.b16 %v355
    %v1254 = vunpack.c.h.b16 %v355
    %v1255 = vunpack.c.l.b16 %v356
    %v1256 = vunpack.c.h.b16 %v356
    %v1257 = vunpack.c.l.b16 %v357
    %v1258 = vunpack.c.h.b16 %v357
    %v1259 = vunpack.c.l.b16 %v358
    %v1260 = vunpack.c.h.b16 %v358
    %v1261 = vunpack.c.l.b16 %v359
    %v1262 = vunpack.c.h.b16 %v359
    %v1263 = vunpack.c.l.b16 %v360
    %v1264 = vunpack.c.h.b16 %v360
    %v1265 = vunpack.c.l.b16 %v361
    %v1266 = vunpack.c.h.b16 %v361
    %v1267 = vunpack.c.l.b16 %v362
    %v1268 = vunpack.c.h.b16 %v362
    %v1269 = vunpack.c.l.b16 %v363
    %v1270 = vunpack.c.h.b16 %v363
    %v1271 = vunpack.c.l.b16 %v364
    %v1272 = vunpack.c.h.b16 %v364
    %v1273 = vunpack.c.l.b16 %v365
    %v1274 = vunpack.c.h.b16 %v365
    %v1275 = vunpack.c.l.b16 %v366
    %v1276 = vunpack.c.h.b16 %v366
    %v1277 = vunpack.c.l.b16 %v367
    %v1278 = vunpack.c.h.b16 %v367
    %v1279 = vunpack.c.l.b16 %v368
    %v1280 = vunpack.c.h.b16 %v368
    %v1281 = vunpack.c.l.b16 %v369
    %v1282 = vunpack.c.h.b16 %v369
    %v1283 = vunpack.c.l.b16 %v370
    %v1284 = vunpack.c.h.b16 %v370
    %v1285 = vunpack.c.l.b16 %v371
    %v1286 = vunpack.c.h.b16 %v371
    %v1287 = vunpack.c.l.b16 %v372
    %v1288 = vunpack.c.h.b16 %v372
    %v1289 = vunpack.c.l.b16 %v373
    %v1290 = vunpack.c.h.b16 %v373
    %v1291 = vpack.c.b16 %v721, %v715
    %v1292 = vpack.c.b16 %v722, %v716
    %v1293 = vpack.c.b16 %v723, %v717
    %v1294 = vpack.c.b16 %v724, %v718
    %v1295 = vpack.c.b16 %v725, %v719
    %v1296 = vpack.c.b16 %v726, %v720
    %v1297 = vpack.c.b16 %v733, %v727
    %v1298 = vpack.c.b16 %v734, %v728
    %v1299 = vpack.c.b16 %v735, %v729
    %v1300 = vpack.c.b16 %v736, %v730
    %v1301 = vpack.c.b16 %v737, %v731
    %v1302 = vpack.c.b16 %v738, %v732
    %v1303 = vpack.c.b16 %v745, %v739
    %v1304 = vpack.c.b16 %v746, %v740
    %v1305 = vpack.c.b16 %v747, %v741
    %v1306 = vpack.c.b16 %v748, %v742
    %v1307 = vpack.c.b16 %v749, %v743
    %v1308 = vpack.c.b16 %v750, %v744
    %v1309 = vpack.c.b16 %v757, %v751
    %v1310 = vpack.c.b16 %v758, %v752
    %v1311 = vpack.c.b16 %v759, %v753
    %v1312 = vpack.c.b16 %v760, %v754
    %v1313 = vpack.c.b16 %v761, %v755
    %v1314 = vpack.c.b16 %v762, %v756
    %v1315 = vpack.c.b16 %v769, %v763
    %v1316 = vpack.c.b16 %v770, %v764
    %v1317 = vpack.c.b16 %v771, %v765
    %v1318 = vpack.c.b16 %v772, %v766
    %v1319 = vpack.c.b16 %v773, %v767
    %v1320 = vpack.c.b16 %v774, %v768
    %v1321 = vpack.c.b16 %v781, %v775
    %v1322 = vpack.c.b16 %v782, %v776
    %v1323 = vpack.c.b16 %v783, %v777
    %v1324 = vpack.c.b16 %v784, %v778
    %v1325 = vpack.c.b16 %v785, %v779
    %v1326 = vpack.c.b16 %v786, %v780
    %v1327 = vpack.c.b16 %v793, %v787
    %v1328 = vpack.c.b16 %v794, %v788
    %v1329 = vpack.c.b16 %v795, %v789
    %v1330 = vpack.c.b16 %v796, %v790
    %v1331 = vpack.c.b16 %v797, %v791
    %v1332 = vpack.c.b16 %v798, %v792
    %v1333 = vpack.c.b16 %v805, %v799
    %v1334 = vpack.c.b16 %v806, %v800
    %v1335 = vpack.c.b16 %v807, %v801
    %v1336 = vpack.c.b16 %v808, %v802
    %v1337 = vpack.c.b16 %v809, %v803
    %v1338 = vpack.c.b16 %v810, %v804
    %v1339 = vpack.c.b16 %v817, %v811
    %v1340 = vpack.c.b16 %v818, %v812
    %v1341 = vpack.c.b16 %v819, %v813
    %v1342 = vpack.c.b16 %v820, %v814
    %v1343 = vpack.c.b16 %v821, %v815
    %v1344 = vpack.c.b16 %v822, %v816
    %v1345 = vpack.c.b16 %v829, %v823
    %v1346 = vpack.c.b16 %v830, %v824
    %v1347 = vpack.c.b16 %v831, %v825
    %v1348 = vpack.c.b16 %v832, %v826
    %v1349 = vpack.c.b16 %v833, %v827
    %v1350 = vpack.c.b16 %v834, %v828
    %v1351 = vpack.c.b16 %v841, %v835
    %v1352 = vpack.c.b16 %v842, %v836
    %v1353 = vpack.c.b16 %v843, %v837
    %v1354 = vpack.c.b16 %v844, %v838
    %v1355 = vpack.c.b16 %v845, %v839
    %v1356 = vpack.c.b16 %v846, %v840
    %v1357 = vpack.c.b16 %v853, %v847
    %v1358 = vpack.c.b16 %v854, %v848
    %v1359 = vpack.c.b16 %v855, %v849
    %v1360 = vpack.c.b16 %v856, %v850
    %v1361 = vpack.c.b16 %v857, %v851
    %v1362 = vpack.c.b16 %v858, %v852
    %v1363 = vpack.c.b16 %v865, %v859
    %v1364 = vpack.c.b16 %v866, %v860
    %v1365 = vpack.c.b16 %v867, %v861
    %v1366 = vpack.c.b16 %v868, %v862
    %v1367 = vpack.c.b16 %v869, %v863
    %v1368 = vpack.c.b16 %v870, %v864
    %v1369 = vpack.c.b16 %v877, %v871
    %v1370 = vpack.c.b16 %v878, %v872
    %v1371 = vpack.c.b16 %v879, %v873
    %v1372 = vpack.c.b16 %v880, %v874
    %v1373 = vpack.c.b16 %v881, %v875
    %v1374 = vpack.c.b16 %v882, %v876
    %v1375 = vpack.c.b16 %v889, %v883
    %v1376 = vpack.c.b16 %v890, %v884
    %v1377 = vpack.c.b16 %v891, %v885
    %v1378 = vpack.c.b16 %v892, %v886
    %v1379 = vpack.c.b16 %v893, %v887
    %v1380 = vpack.c.b16 %v894, %v888
    %v1381 = vpack.c.b16 %v901, %v895
    %v1382 = vpack.c.b16 %v902, %v896
    %v1383 = vpack.c.b16 %v903, %v897
    %v1384 = vpack.c.b16 %v904, %v898
    %v1385 = vpack.c.b16 %v905, %v899
    %v1386 = vpack.c.b16 %v906, %v900
    %v1387 = vpack.c.b16 %v913, %v907
    %v1388 = vpack.c.b16 %v914, %v908
    %v1389 = vpack.c.b16 %v915, %v909
    %v1390 = vpack.c.b16 %v916, %v910
    %v1391 = vpack.c.b16 %v917, %v911
    %v1392 = vpack.c.b16 %v918, %v912
    %v1393 = vpack.c.b16 %v925, %v919
    %v1394 = vpack.c.b16 %v926, %v920
    %v1395 = vpack.c.b16 %v927, %v921
    %v1396 = vpack.c.b16 %v928, %v922
    %v1397 = vpack.c.b16 %v929, %v923
    %v1398 = vpack.c.b16 %v930, %v924
    %v1399 = vpack.c.b16 %v937, %v931
    %v1400 = vpack.c.b16 %v938, %v932
    %v1401 = vpack.c.b16 %v939, %v933
    %v1402 = vpack.c.b16 %v940, %v934
    %v1403 = vpack.c.b16 %v941, %v935
    %v1404 = vpack.c.b16 %v942, %v936
    %v1405 = vpack.c.b16 %v949, %v943
    %v1406 = vpack.c.b16 %v950, %v944
    %v1407 = vpack.c.b16 %v951, %v945
    %v1408 = vpack.c.b16 %v952, %v946
    %v1409 = vpack.c.b16 %v953, %v947
    %v1410 = vpack.c.b16 %v954, %v948
    %v1411 = vpack.c.b16 %v961, %v955
    %v1412 = vpack.c.b16 %v962, %v956
    %v1413 = vpack.c.b16 %v963, %v957
    %v1414 = vpack.c.b16 %v964, %v958
    %v1415 = vpack.c.b16 %v965, %v959
    %v1416 = vpack.c.b16 %v966, %v960
    %v1417 = vpack.c.b16 %v973, %v967
    %v1418 = vpack.c.b16 %v974, %v968
    %v1419 = vpack.c.b16 %v975, %v969
    %v1420 = vpack.c.b16 %v976, %v970
    %v1421 = vpack.c.b16 %v977, %v971
    %v1422 = vpack.c.b16 %v978, %v972
    %v1423 = vpack.c.b16 %v985, %v979
    %v1424 = vpack.c.b16 %v986, %v980
    %v1425 = vpack.c.b16 %v987, %v981
    %v1426 = vpack.c.b16 %v988, %v982
    %v1427 = vpack.c.b16 %v989, %v983
    %v1428 = vpack.c.b16 %v990, %v984
    %v1429 = vpack.c.b16 %v997, %v991
    %v1430 = vpack.c.b16 %v998, %v992
    %v1431 = vpack.c.b16 %v999, %v993
    %v1432 = vpack.c.b16 %v1000, %v994
    %v1433 = vpack.c.b16 %v1001, %v995
    %v1434 = vpack.c.b16 %v1002, %v996
    %v1435 = vpack.c.b16 %v1009, %v1003
    %v1436 = vpack.c.b16 %v1010, %v1004
    %v1437 = vpack.c.b16 %v1011, %v1005
    %v1438 = vpack.c.b16 %v1012, %v1006
    %v1439 = vpack.c.b16 %v1013, %v1007
    %v1440 = vpack.c.b16 %v1014, %v1008
    %v1441 = vpack.c.b16 %v1021, %v1015
    %v1442 = vpack.c.b16 %v1022, %v1016
    %v1443 = vpack.c.b16 %v1023, %v1017
    %v1444 = vpack.c.b16 %v1024, %v1018
    %v1445 = vpack.c.b16 %v1025, %v1019
    %v1446 = vpack.c.b16 %v1026, %v1020
    %v1447 = vpack.c.b16 %v1033, %v1027
    %v1448 = vpack.c.b16 %v1034, %v1028
    %v1449 = vpack.c.b16 %v1035, %v1029
    %v1450 = vpack.c.b16 %v1036, %v1030
    %v1451 = vpack.c.b16 %v1037, %v1031
    %v1452 = vpack.c.b16 %v1038, %v1032
    %v1453 = vpack.c.b16 %v1045, %v1039
    %v1454 = vpack.c.b16 %v1046, %v1040
    %v1455 = vpack.c.b16 %v1047, %v1041
    %v1456 = vpack.c.b16 %v1048, %v1042
    %v1457 = vpack.c.b16 %v1049, %v1043
    %v1458 = vpack.c.b16 %v1050, %v1044
    %v1459 = vpack.c.b16 %v1057, %v1051
    %v1460 = vpack.c.b16 %v1058, %v1052
    %v1461 = vpack.c.b16 %v1059, %v1053
    %v1462 = vpack.c.b16 %v1060, %v1054
    %v1463 = vpack.c.b16 %v1061, %v1055
    %v1464 = vpack.c.b16 %v1062, %v1056
    %v1465 = vpack.c.b16 %v1069, %v1063
    %v1466 = vpack.c.b16 %v1070, %v1064
    %v1467 = vpack.c.b16 %v1071, %v1065
    %v1468 = vpack.c.b16 %v1072, %v1066
    %v1469 = vpack.c.b16 %v1073, %v1067
    %v1470 = vpack.c.b16 %v1074, %v1068
    %v1471 = vpack.c.b16 %v1081, %v1075
    %v1472 = vpack.c.b16 %v1082, %v1076
    %v1473 = vpack.c.b16 %v1083, %v1077
    %v1474 = vpack.c.b16 %v1084, %v1078
    %v1475 = vpack.c.b16 %v1085, %v1079
    %v1476 = vpack.c.b16 %v1086, %v1080
    %v1477 = vpack.c.b16 %v1093, %v1087
    %v1478 = vpack.c.b16 %v1094, %v1088
    %v1479 = vpack.c.b16 %v1095, %v1089
    %v1480 = vpack.c.b16 %v1096, %v1090
    %v1481 = vpack.c.b16 %v1097, %v1091
    %v1482 = vpack.c.b16 %v1098, %v1092
    %v1483 = vpack.c.b16 %v1105, %v1099
    %v1484 = vpack.c.b16 %v1106, %v1100
    %v1485 = vpack.c.b16 %v1107, %v1101
    %v1486 = vpack.c.b16 %v1108, %v1102
    %v1487 = vpack.c.b16 %v1109, %v1103
    %v1488 = vpack.c.b16 %v1110, %v1104
    %v1489 = vpack.c.b16 %v1117, %v1111
    %v1490 = vpack.c.b16 %v1118, %v1112
    %v1491 = vpack.c.b16 %v1119, %v1113
    %v1492 = vpack.c.b16 %v1120, %v1114
    %v1493 = vpack.c.b16 %v1121, %v1115
    %v1494 = vpack.c.b16 %v1122, %v1116
    %v1495 = vpack.c.b16 %v1129, %v1123
    %v1496 = vpack.c.b16 %v1130, %v1124
    %v1497 = vpack.c.b16 %v1131, %v1125
    %v1498 = vpack.c.b16 %v1132, %v1126
    %v1499 = vpack.c.b16 %v1133, %v1127
    %v1500 = vpack.c.b16 %v1134, %v1128
    %v1501 = vpack.c.b16 %v1141, %v1135
    %v1502 = vpack.c.b16 %v1142, %v1136
    %v1503 = vpack.c.b16 %v1143, %v1137
    %v1504 = vpack.c.b16 %v1144, %v1138
    %v1505 = vpack.c.b16 %v1145, %v1139
    %v1506 = vpack.c.b16 %v1146, %v1140
    %v1507 = vpack.c.b16 %v1153, %v1147
    %v1508 = vpack.c.b16 %v1154, %v1148
    %v1509 = vpack.c.b16 %v1155, %v1149
    %v1510 = vpack.c.b16 %v1156, %v1150
    %v1511 = vpack.c.b16 %v1157, %v1151
    %v1512 = vpack.c.b16 %v1158, %v1152
    %v1513 = vpack.c.b16 %v1165, %v1159
    %v1514 = vpack.c.b16 %v1166, %v1160
    %v1515 = vpack.c.b16 %v1167, %v1161
    %v1516 = vpack.c.b16 %v1168, %v1162
    %v1517 = vpack.c.b16 %v1169, %v1163
    %v1518 = vpack.c.b16 %v1170, %v1164
    %v1519 = vpack.c.b16 %v1177, %v1171
    %v1520 = vpack.c.b16 %v1178, %v1172
    %v1521 = vpack.c.b16 %v1179, %v1173
    %v1522 = vpack.c.b16 %v1180, %v1174
    %v1523 = vpack.c.b16 %v1181, %v1175
    %v1524 = vpack.c.b16 %v1182, %v1176
    %v1525 = vpack.c.b16 %v1189, %v1183
    %v1526 = vpack.c.b16 %v1190, %v1184
    %v1527 = vpack.c.b16 %v1191, %v1185
    %v1528 = vpack.c.b16 %v1192, %v1186
    %v1529 = vpack.c.b16 %v1193, %v1187
    %v1530 = vpack.c.b16 %v1194, %v1188
    %v1531 = vpack.c.b16 %v1201, %v1195
    %v1532 = vpack.c.b16 %v1202, %v1196
    %v1533 = vpack.c.b16 %v1203, %v1197
    %v1534 = vpack.c.b16 %v1204, %v1198
    %v1535 = vpack.c.b16 %v1205, %v1199
    %v1536 = vpack.c.b16 %v1206, %v1200
    %v1537 = vpack.c.b16 %v1213, %v1207
    %v1538 = vpack.c.b16 %v1214, %v1208
    %v1539 = vpack.c.b16 %v1215, %v1209
    %v1540 = vpack.c.b16 %v1216, %v1210
    %v1541 = vpack.c.b16 %v1217, %v1211
    %v1542 = vpack.c.b16 %v1218, %v1212
    %v1543 = vpack.c.b16 %v1225, %v1219
    %v1544 = vpack.c.b16 %v1226, %v1220
    %v1545 = vpack.c.b16 %v1227, %v1221
    %v1546 = vpack.c.b16 %v1228, %v1222
    %v1547 = vpack.c.b16 %v1229, %v1223
    %v1548 = vpack.c.b16 %v1230, %v1224
    %v1549 = vpack.c.b16 %v1237, %v1231
    %v1550 = vpack.c.b16 %v1238, %v1232
    %v1551 = vpack.c.b16 %v1239, %v1233
    %v1552 = vpack.c.b16 %v1240, %v1234
    %v1553 = vpack.c.b16 %v1241, %v1235
    %v1554 = vpack.c.b16 %v1242, %v1236
    %v1555 = vpack.c.b16 %v1249, %v1243
    %v1556 = vpack.c.b16 %v1250, %v1244
    %v1557 = vpack.c.b16 %v1251, %v1245
    %v1558 = vpack.c.b16 %v1252, %v1246
    %v1559 = vpack.c.b16 %v1253, %v1247
    %v1560 = vpack.c.b16 %v1254, %v1248
    %v1561 = vpack.c.b16 %v1261, %v1255
    %v1562 = vpack.c.b16 %v1262, %v1256
    %v1563 = vpack.c.b16 %v1263, %v1257
    %v1564 = vpack.c.b16 %v1264, %v1258
    %v1565 = vpack.c.b16 %v1265, %v1259
    %v1566 = vpack.c.b16 %v1266, %v1260
    %v1567 = vpack.c.b16 %v1273, %v1267
    %v1568 = vpack.c.b16 %v1274, %v1268
    %v1569 = vpack.c.b16 %v1275, %v1269
    %v1570 = vpack.c.b16 %v1276, %v1270
    %v1571 = vpack.c.b16 %v1277, %v1271
    %v1572 = vpack.c.b16 %v1278, %v1272
    %v1573 = vpack.c.b16 %v1285, %v1279
    %v1574 = vpack.c.b16 %v1286, %v1280
    %v1575 = vpack.c.b16 %v1287, %v1281
    %v1576 = vpack.c.b16 %v1288, %v1282
    %v1577 = vpack.c.b16 %v1289, %v1283
    %v1578 = vpack.c.b16 %v1290, %v1284
    %1867 = vmatprep.subr.bf16.mxu0 %v1334
    %1868 = vmatpush1.bf16.msra.mxu0 %v1333
    %1869 = vmatprep.subr.bf16.mxu0 %v1328
    %1870 = vmatpush1.bf16.msra.mxu0 %v1327
    %1871 = vmatprep.subr.bf16.mxu0 %v1322
    %1872 = vmatpush1.bf16.msra.mxu0 %v1321
    %1873 = vmatprep.subr.bf16.mxu0 %v1316
    %1874 = vmatpush1.bf16.msra.mxu0 %v1315
    %1875 = vmatprep.subr.bf16.mxu0 %v1310
    %1876 = vmatpush1.bf16.msra.mxu0 %v1309
    %1877 = vmatprep.subr.bf16.mxu0 %v1304
    %1878 = vmatpush1.bf16.msra.mxu0 %v1303
    %1879 = vmatprep.subr.bf16.mxu0 %v1298
    %1880 = vmatpush1.bf16.msra.mxu0 %v1297
    %1881 = vmatprep.subr.bf16.mxu0 %v1292
    %1882 = vmatpush1.bf16.msra.mxu0 %v1291
    %1883 = vmatprep.subr.bf16.mxu0 %v1382
    %1884 = vmatpush2.bf16.msra.mxu0 %v1381
    %1885 = vmatprep.subr.bf16.mxu0 %v1376
    %1886 = vmatpush2.bf16.msra.mxu0 %v1375
    %1887 = vmatprep.subr.bf16.mxu0 %v1370
    %1888 = vmatpush2.bf16.msra.mxu0 %v1369
    %1889 = vmatprep.subr.bf16.mxu0 %v1364
    %1890 = vmatpush2.bf16.msra.mxu0 %v1363
    %1891 = vmatprep.subr.bf16.mxu0 %v1358
    %1892 = vmatpush2.bf16.msra.mxu0 %v1357
    %1893 = vmatprep.subr.bf16.mxu0 %v1352
    %1894 = vmatpush2.bf16.msra.mxu0 %v1351
    %1895 = vmatprep.subr.bf16.mxu0 %v1346
    %1896 = vmatpush2.bf16.msra.mxu0 %v1345
    %1897 = vmatprep.subr.bf16.mxu0 %v1340
    %1898 = vmatpush2.bf16.msra.mxu0 %v1339
    %1899 = vmatprep.mubr.bf16.mxu0 %v416
    %1900 = vmatmul.mubr.bf16.gmra.mxu0 %v415
    %v1901 = vpop.f32.mrf.mxu0
    %v1902 = vadd.f32 %v379, %v1901
    %v1903 = vpop.f32.mrf.mxu0
    %v1904 = vadd.f32 %v383, %v1903
    %v1905 = vpop.f32.mrf.mxu0
    %v1906 = vpop.f32.mrf.mxu0
    %1907 = vdwg.mxu0
    %1908 = vmatprep.subr.bf16.mxu0 %v1430
    %1909 = vmatpush1.bf16.msra.mxu0 %v1429
    %1910 = vmatprep.subr.bf16.mxu0 %v1424
    %1911 = vmatpush1.bf16.msra.mxu0 %v1423
    %1912 = vmatprep.subr.bf16.mxu0 %v1418
    %1913 = vmatpush1.bf16.msra.mxu0 %v1417
    %1914 = vmatprep.subr.bf16.mxu0 %v1412
    %1915 = vmatpush1.bf16.msra.mxu0 %v1411
    %1916 = vmatprep.subr.bf16.mxu0 %v1406
    %1917 = vmatpush1.bf16.msra.mxu0 %v1405
    %1918 = vmatprep.subr.bf16.mxu0 %v1400
    %1919 = vmatpush1.bf16.msra.mxu0 %v1399
    %1920 = vmatprep.subr.bf16.mxu0 %v1394
    %1921 = vmatpush1.bf16.msra.mxu0 %v1393
    %1922 = vmatprep.subr.bf16.mxu0 %v1388
    %1923 = vmatpush1.bf16.msra.mxu0 %v1387
    %1924 = vmatprep.subr.bf16.mxu0 %v1478
    %1925 = vmatpush2.bf16.msra.mxu0 %v1477
    %1926 = vmatprep.subr.bf16.mxu0 %v1472
    %1927 = vmatpush2.bf16.msra.mxu0 %v1471
    %1928 = vmatprep.subr.bf16.mxu0 %v1466
    %1929 = vmatpush2.bf16.msra.mxu0 %v1465
    %1930 = vmatprep.subr.bf16.mxu0 %v1460
    %1931 = vmatpush2.bf16.msra.mxu0 %v1459
    %1932 = vmatprep.subr.bf16.mxu0 %v1454
    %1933 = vmatpush2.bf16.msra.mxu0 %v1453
    %1934 = vmatprep.subr.bf16.mxu0 %v1448
    %1935 = vmatpush2.bf16.msra.mxu0 %v1447
    %1936 = vmatprep.subr.bf16.mxu0 %v1442
    %1937 = vmatpush2.bf16.msra.mxu0 %v1441
    %1938 = vmatprep.subr.bf16.mxu0 %v1436
    %1939 = vmatpush2.bf16.msra.mxu0 %v1435
    %1940 = vmatprep.mubr.bf16.mxu0 %v418
    %1941 = vmatmul.mubr.bf16.gmra.mxu0 %v417
    %v1942 = vpop.f32.mrf.mxu0
    %v1943 = vadd.f32 %v1902, %v1942
    %v1944 = vpop.f32.mrf.mxu0
    %v1945 = vadd.f32 %v1904, %v1944
    %v1946 = vpop.f32.mrf.mxu0
    %v1947 = vpop.f32.mrf.mxu0
    %1948 = vdwg.mxu0
    %1949 = vmatprep.subr.bf16.mxu0 %v1526
    %1950 = vmatpush1.bf16.msra.mxu0 %v1525
    %1951 = vmatprep.subr.bf16.mxu0 %v1520
    %1952 = vmatpush1.bf16.msra.mxu0 %v1519
    %1953 = vmatprep.subr.bf16.mxu0 %v1514
    %1954 = vmatpush1.bf16.msra.mxu0 %v1513
    %1955 = vmatprep.subr.bf16.mxu0 %v1508
    %1956 = vmatpush1.bf16.msra.mxu0 %v1507
    %1957 = vmatprep.subr.bf16.mxu0 %v1502
    %1958 = vmatpush1.bf16.msra.mxu0 %v1501
    %1959 = vmatprep.subr.bf16.mxu0 %v1496
    %1960 = vmatpush1.bf16.msra.mxu0 %v1495
    %1961 = vmatprep.subr.bf16.mxu0 %v1490
    %1962 = vmatpush1.bf16.msra.mxu0 %v1489
    %1963 = vmatprep.subr.bf16.mxu0 %v1484
    %1964 = vmatpush1.bf16.msra.mxu0 %v1483
    %1965 = vmatprep.subr.bf16.mxu0 %v1574
    %1966 = vmatpush2.bf16.msra.mxu0 %v1573
    %1967 = vmatprep.subr.bf16.mxu0 %v1568
    %1968 = vmatpush2.bf16.msra.mxu0 %v1567
    %1969 = vmatprep.subr.bf16.mxu0 %v1562
    %1970 = vmatpush2.bf16.msra.mxu0 %v1561
    %1971 = vmatprep.subr.bf16.mxu0 %v1556
    %1972 = vmatpush2.bf16.msra.mxu0 %v1555
    %1973 = vmatprep.subr.bf16.mxu0 %v1550
    %1974 = vmatpush2.bf16.msra.mxu0 %v1549
    %1975 = vmatprep.subr.bf16.mxu0 %v1544
    %1976 = vmatpush2.bf16.msra.mxu0 %v1543
    %1977 = vmatprep.subr.bf16.mxu0 %v1538
    %1978 = vmatpush2.bf16.msra.mxu0 %v1537
    %1979 = vmatprep.subr.bf16.mxu0 %v1532
    %1980 = vmatpush2.bf16.msra.mxu0 %v1531
    %1981 = vmatprep.mubr.bf16.mxu0 %v420
    %1982 = vmatmul.mubr.bf16.gmra.mxu0 %v419
    %v1983 = vpop.f32.mrf.mxu0
    %v1984 = vadd.f32 %v1943, %v1983
    %v1985 = vpop.f32.mrf.mxu0
    %v1986 = vadd.f32 %v1945, %v1985
    %v1987 = vpop.f32.mrf.mxu0
    %v1988 = vpop.f32.mrf.mxu0
    %1989 = vdwg.mxu0
    %1990 = vmatprep.subr.bf16.mxu0 %v1336
    %1991 = vmatpush1.bf16.msra.mxu0 %v1335
    %1992 = vmatprep.subr.bf16.mxu0 %v1330
    %1993 = vmatpush1.bf16.msra.mxu0 %v1329
    %1994 = vmatprep.subr.bf16.mxu0 %v1324
    %1995 = vmatpush1.bf16.msra.mxu0 %v1323
    %1996 = vmatprep.subr.bf16.mxu0 %v1318
    %1997 = vmatpush1.bf16.msra.mxu0 %v1317
    %1998 = vmatprep.subr.bf16.mxu0 %v1312
    %1999 = vmatpush1.bf16.msra.mxu0 %v1311
    %2000 = vmatprep.subr.bf16.mxu0 %v1306
    %2001 = vmatpush1.bf16.msra.mxu0 %v1305
    %2002 = vmatprep.subr.bf16.mxu0 %v1300
    %2003 = vmatpush1.bf16.msra.mxu0 %v1299
    %2004 = vmatprep.subr.bf16.mxu0 %v1294
    %2005 = vmatpush1.bf16.msra.mxu0 %v1293
    %2006 = vmatprep.subr.bf16.mxu0 %v1384
    %2007 = vmatpush2.bf16.msra.mxu0 %v1383
    %2008 = vmatprep.subr.bf16.mxu0 %v1378
    %2009 = vmatpush2.bf16.msra.mxu0 %v1377
    %2010 = vmatprep.subr.bf16.mxu0 %v1372
    %2011 = vmatpush2.bf16.msra.mxu0 %v1371
    %2012 = vmatprep.subr.bf16.mxu0 %v1366
    %2013 = vmatpush2.bf16.msra.mxu0 %v1365
    %2014 = vmatprep.subr.bf16.mxu0 %v1360
    %2015 = vmatpush2.bf16.msra.mxu0 %v1359
    %2016 = vmatprep.subr.bf16.mxu0 %v1354
    %2017 = vmatpush2.bf16.msra.mxu0 %v1353
    %2018 = vmatprep.subr.bf16.mxu0 %v1348
    %2019 = vmatpush2.bf16.msra.mxu0 %v1347
    %2020 = vmatprep.subr.bf16.mxu0 %v1342
    %2021 = vmatpush2.bf16.msra.mxu0 %v1341
    %2022 = vmatprep.mubr.bf16.mxu0 %v416
    %2023 = vmatmul.mubr.bf16.gmra.mxu0 %v415
    %v2024 = vpop.f32.mrf.mxu0
    %v2025 = vadd.f32 %v387, %v2024
    %v2026 = vpop.f32.mrf.mxu0
    %v2027 = vadd.f32 %v391, %v2026
    %v2028 = vpop.f32.mrf.mxu0
    %v2029 = vpop.f32.mrf.mxu0
    %2030 = vdwg.mxu0
    %2031 = vmatprep.subr.bf16.mxu0 %v1432
    %2032 = vmatpush1.bf16.msra.mxu0 %v1431
    %2033 = vmatprep.subr.bf16.mxu0 %v1426
    %2034 = vmatpush1.bf16.msra.mxu0 %v1425
    %2035 = vmatprep.subr.bf16.mxu0 %v1420
    %2036 = vmatpush1.bf16.msra.mxu0 %v1419
    %2037 = vmatprep.subr.bf16.mxu0 %v1414
    %2038 = vmatpush1.bf16.msra.mxu0 %v1413
    %2039 = vmatprep.subr.bf16.mxu0 %v1408
    %2040 = vmatpush1.bf16.msra.mxu0 %v1407
    %2041 = vmatprep.subr.bf16.mxu0 %v1402
    %2042 = vmatpush1.bf16.msra.mxu0 %v1401
    %2043 = vmatprep.subr.bf16.mxu0 %v1396
    %2044 = vmatpush1.bf16.msra.mxu0 %v1395
    %2045 = vmatprep.subr.bf16.mxu0 %v1390
    %2046 = vmatpush1.bf16.msra.mxu0 %v1389
    %2047 = vmatprep.subr.bf16.mxu0 %v1480
    %2048 = vmatpush2.bf16.msra.mxu0 %v1479
    %2049 = vmatprep.subr.bf16.mxu0 %v1474
    %2050 = vmatpush2.bf16.msra.mxu0 %v1473
    %2051 = vmatprep.subr.bf16.mxu0 %v1468
    %2052 = vmatpush2.bf16.msra.mxu0 %v1467
    %2053 = vmatprep.subr.bf16.mxu0 %v1462
    %2054 = vmatpush2.bf16.msra.mxu0 %v1461
    %2055 = vmatprep.subr.bf16.mxu0 %v1456
    %2056 = vmatpush2.bf16.msra.mxu0 %v1455
    %2057 = vmatprep.subr.bf16.mxu0 %v1450
    %2058 = vmatpush2.bf16.msra.mxu0 %v1449
    %2059 = vmatprep.subr.bf16.mxu0 %v1444
    %2060 = vmatpush2.bf16.msra.mxu0 %v1443
    %2061 = vmatprep.subr.bf16.mxu0 %v1438
    %2062 = vmatpush2.bf16.msra.mxu0 %v1437
    %2063 = vmatprep.mubr.bf16.mxu0 %v418
    %2064 = vmatmul.mubr.bf16.gmra.mxu0 %v417
    %v2065 = vpop.f32.mrf.mxu0
    %v2066 = vadd.f32 %v2025, %v2065
    %v2067 = vpop.f32.mrf.mxu0
    %v2068 = vadd.f32 %v2027, %v2067
    %v2069 = vpop.f32.mrf.mxu0
    %v2070 = vpop.f32.mrf.mxu0
    %2071 = vdwg.mxu0
    %2072 = vmatprep.subr.bf16.mxu0 %v1528
    %2073 = vmatpush1.bf16.msra.mxu0 %v1527
    %2074 = vmatprep.subr.bf16.mxu0 %v1522
    %2075 = vmatpush1.bf16.msra.mxu0 %v1521
    %2076 = vmatprep.subr.bf16.mxu0 %v1516
    %2077 = vmatpush1.bf16.msra.mxu0 %v1515
    %2078 = vmatprep.subr.bf16.mxu0 %v1510
    %2079 = vmatpush1.bf16.msra.mxu0 %v1509
    %2080 = vmatprep.subr.bf16.mxu0 %v1504
    %2081 = vmatpush1.bf16.msra.mxu0 %v1503
    %2082 = vmatprep.subr.bf16.mxu0 %v1498
    %2083 = vmatpush1.bf16.msra.mxu0 %v1497
    %2084 = vmatprep.subr.bf16.mxu0 %v1492
    %2085 = vmatpush1.bf16.msra.mxu0 %v1491
    %2086 = vmatprep.subr.bf16.mxu0 %v1486
    %2087 = vmatpush1.bf16.msra.mxu0 %v1485
    %2088 = vmatprep.subr.bf16.mxu0 %v1576
    %2089 = vmatpush2.bf16.msra.mxu0 %v1575
    %2090 = vmatprep.subr.bf16.mxu0 %v1570
    %2091 = vmatpush2.bf16.msra.mxu0 %v1569
    %2092 = vmatprep.subr.bf16.mxu0 %v1564
    %2093 = vmatpush2.bf16.msra.mxu0 %v1563
    %2094 = vmatprep.subr.bf16.mxu0 %v1558
    %2095 = vmatpush2.bf16.msra.mxu0 %v1557
    %2096 = vmatprep.subr.bf16.mxu0 %v1552
    %2097 = vmatpush2.bf16.msra.mxu0 %v1551
    %2098 = vmatprep.subr.bf16.mxu0 %v1546
    %2099 = vmatpush2.bf16.msra.mxu0 %v1545
    %2100 = vmatprep.subr.bf16.mxu0 %v1540
    %2101 = vmatpush2.bf16.msra.mxu0 %v1539
    %2102 = vmatprep.subr.bf16.mxu0 %v1534
    %2103 = vmatpush2.bf16.msra.mxu0 %v1533
    %2104 = vmatprep.mubr.bf16.mxu0 %v420
    %2105 = vmatmul.mubr.bf16.gmra.mxu0 %v419
    %v2106 = vpop.f32.mrf.mxu0
    %v2107 = vadd.f32 %v2066, %v2106
    %v2108 = vpop.f32.mrf.mxu0
    %v2109 = vadd.f32 %v2068, %v2108
    %v2110 = vpop.f32.mrf.mxu0
    %v2111 = vpop.f32.mrf.mxu0
    %2112 = vdwg.mxu0
    %2113 = vmatprep.subr.bf16.mxu0 %v1338
    %2114 = vmatpush1.bf16.msra.mxu0 %v1337
    %2115 = vmatprep.subr.bf16.mxu0 %v1332
    %2116 = vmatpush1.bf16.msra.mxu0 %v1331
    %2117 = vmatprep.subr.bf16.mxu0 %v1326
    %2118 = vmatpush1.bf16.msra.mxu0 %v1325
    %2119 = vmatprep.subr.bf16.mxu0 %v1320
    %2120 = vmatpush1.bf16.msra.mxu0 %v1319
    %2121 = vmatprep.subr.bf16.mxu0 %v1314
    %2122 = vmatpush1.bf16.msra.mxu0 %v1313
    %2123 = vmatprep.subr.bf16.mxu0 %v1308
    %2124 = vmatpush1.bf16.msra.mxu0 %v1307
    %2125 = vmatprep.subr.bf16.mxu0 %v1302
    %2126 = vmatpush1.bf16.msra.mxu0 %v1301
    %2127 = vmatprep.subr.bf16.mxu0 %v1296
    %2128 = vmatpush1.bf16.msra.mxu0 %v1295
    %2129 = vmatprep.subr.bf16.mxu0 %v1386
    %2130 = vmatpush2.bf16.msra.mxu0 %v1385
    %2131 = vmatprep.subr.bf16.mxu0 %v1380
    %2132 = vmatpush2.bf16.msra.mxu0 %v1379
    %2133 = vmatprep.subr.bf16.mxu0 %v1374
    %2134 = vmatpush2.bf16.msra.mxu0 %v1373
    %2135 = vmatprep.subr.bf16.mxu0 %v1368
    %2136 = vmatpush2.bf16.msra.mxu0 %v1367
    %2137 = vmatprep.subr.bf16.mxu0 %v1362
    %2138 = vmatpush2.bf16.msra.mxu0 %v1361
    %2139 = vmatprep.subr.bf16.mxu0 %v1356
    %2140 = vmatpush2.bf16.msra.mxu0 %v1355
    %2141 = vmatprep.subr.bf16.mxu0 %v1350
    %2142 = vmatpush2.bf16.msra.mxu0 %v1349
    %2143 = vmatprep.subr.bf16.mxu0 %v1344
    %2144 = vmatpush2.bf16.msra.mxu0 %v1343
    %2145 = vmatprep.mubr.bf16.mxu0 %v416
    %2146 = vmatmul.mubr.bf16.gmra.mxu0 %v415
    %v2147 = vpop.f32.mrf.mxu0
    %v2148 = vadd.f32 %v395, %v2147
    %v2149 = vpop.f32.mrf.mxu0
    %v2150 = vadd.f32 %v399, %v2149
    %v2151 = vpop.f32.mrf.mxu0
    %v2152 = vpop.f32.mrf.mxu0
    %2153 = vdwg.mxu0
    %2154 = vmatprep.subr.bf16.mxu0 %v1434
    %2155 = vmatpush1.bf16.msra.mxu0 %v1433
    %2156 = vmatprep.subr.bf16.mxu0 %v1428
    %2157 = vmatpush1.bf16.msra.mxu0 %v1427
    %2158 = vmatprep.subr.bf16.mxu0 %v1422
    %2159 = vmatpush1.bf16.msra.mxu0 %v1421
    %2160 = vmatprep.subr.bf16.mxu0 %v1416
    %2161 = vmatpush1.bf16.msra.mxu0 %v1415
    %2162 = vmatprep.subr.bf16.mxu0 %v1410
    %2163 = vmatpush1.bf16.msra.mxu0 %v1409
    %2164 = vmatprep.subr.bf16.mxu0 %v1404
    %2165 = vmatpush1.bf16.msra.mxu0 %v1403
    %2166 = vmatprep.subr.bf16.mxu0 %v1398
    %2167 = vmatpush1.bf16.msra.mxu0 %v1397
    %2168 = vmatprep.subr.bf16.mxu0 %v1392
    %2169 = vmatpush1.bf16.msra.mxu0 %v1391
    %2170 = vmatprep.subr.bf16.mxu0 %v1482
    %2171 = vmatpush2.bf16.msra.mxu0 %v1481
    %2172 = vmatprep.subr.bf16.mxu0 %v1476
    %2173 = vmatpush2.bf16.msra.mxu0 %v1475
    %2174 = vmatprep.subr.bf16.mxu0 %v1470
    %2175 = vmatpush2.bf16.msra.mxu0 %v1469
    %2176 = vmatprep.subr.bf16.mxu0 %v1464
    %2177 = vmatpush2.bf16.msra.mxu0 %v1463
    %2178 = vmatprep.subr.bf16.mxu0 %v1458
    %2179 = vmatpush2.bf16.msra.mxu0 %v1457
    %2180 = vmatprep.subr.bf16.mxu0 %v1452
    %2181 = vmatpush2.bf16.msra.mxu0 %v1451
    %2182 = vmatprep.subr.bf16.mxu0 %v1446
    %2183 = vmatpush2.bf16.msra.mxu0 %v1445
    %2184 = vmatprep.subr.bf16.mxu0 %v1440
    %2185 = vmatpush2.bf16.msra.mxu0 %v1439
    %2186 = vmatprep.mubr.bf16.mxu0 %v418
    %2187 = vmatmul.mubr.bf16.gmra.mxu0 %v417
    %v2188 = vpop.f32.mrf.mxu0
    %v2189 = vadd.f32 %v2148, %v2188
    %v2190 = vpop.f32.mrf.mxu0
    %v2191 = vadd.f32 %v2150, %v2190
    %v2192 = vpop.f32.mrf.mxu0
    %v2193 = vpop.f32.mrf.mxu0
    %2194 = vdwg.mxu0
    %2195 = vmatprep.subr.bf16.mxu0 %v1530
    %2196 = vmatpush1.bf16.msra.mxu0 %v1529
    %2197 = vmatprep.subr.bf16.mxu0 %v1524
    %2198 = vmatpush1.bf16.msra.mxu0 %v1523
    %2199 = vmatprep.subr.bf16.mxu0 %v1518
    %2200 = vmatpush1.bf16.msra.mxu0 %v1517
    %2201 = vmatprep.subr.bf16.mxu0 %v1512
    %2202 = vmatpush1.bf16.msra.mxu0 %v1511
    %2203 = vmatprep.subr.bf16.mxu0 %v1506
    %2204 = vmatpush1.bf16.msra.mxu0 %v1505
    %2205 = vmatprep.subr.bf16.mxu0 %v1500
    %2206 = vmatpush1.bf16.msra.mxu0 %v1499
    %2207 = vmatprep.subr.bf16.mxu0 %v1494
    %2208 = vmatpush1.bf16.msra.mxu0 %v1493
    %2209 = vmatprep.subr.bf16.mxu0 %v1488
    %2210 = vmatpush1.bf16.msra.mxu0 %v1487
    %2211 = vmatprep.subr.bf16.mxu0 %v1578
    %2212 = vmatpush2.bf16.msra.mxu0 %v1577
    %2213 = vmatprep.subr.bf16.mxu0 %v1572
    %2214 = vmatpush2.bf16.msra.mxu0 %v1571
    %2215 = vmatprep.subr.bf16.mxu0 %v1566
    %2216 = vmatpush2.bf16.msra.mxu0 %v1565
    %2217 = vmatprep.subr.bf16.mxu0 %v1560
    %2218 = vmatpush2.bf16.msra.mxu0 %v1559
    %2219 = vmatprep.subr.bf16.mxu0 %v1554
    %2220 = vmatpush2.bf16.msra.mxu0 %v1553
    %2221 = vmatprep.subr.bf16.mxu0 %v1548
    %2222 = vmatpush2.bf16.msra.mxu0 %v1547
    %2223 = vmatprep.subr.bf16.mxu0 %v1542
    %2224 = vmatpush2.bf16.msra.mxu0 %v1541
    %2225 = vmatprep.subr.bf16.mxu0 %v1536
    %2226 = vmatpush2.bf16.msra.mxu0 %v1535
    %2227 = vmatprep.mubr.bf16.mxu0 %v420
    %2228 = vmatmul.mubr.bf16.gmra.mxu0 %v419
    %v2229 = vpop.f32.mrf.mxu0
    %v2230 = vadd.f32 %v2189, %v2229
    %v2231 = vpop.f32.mrf.mxu0
    %v2232 = vadd.f32 %v2191, %v2231
    %v2233 = vpop.f32.mrf.mxu0
    %v2234 = vpop.f32.mrf.mxu0
    %2235 = vdwg.mxu0
    %v2236 = vmax.f32 %v1984, 0.0
    %v2237 = vmax.f32 %v1986, 0.0
    %v2238 = vmax.f32 %v2107, 0.0
    %v2239 = vmax.f32 %v2109, 0.0
    %v2240 = vmax.f32 %v2230, 0.0
    %v2241 = vmax.f32 %v2232, 0.0
    %v2242 = vpack.c.bf16 %v2236, %v2236
    %v2243 = vpack.c.bf16 %v2237, %v2237
    %v2244 = vpack.c.bf16 %v2238, %v2238
    %v2245 = vpack.c.bf16 %v2239, %v2239
    %v2246 = vpack.c.bf16 %v2240, %v2240
    %v2247 = vpack.c.bf16 %v2241, %v2241
    %v2248 = vld [vmem:[#allocation8] sm:$0xff]
    %v2249 = vld [vmem:[#allocation8 + $0x8] sm:$0xff]
    %v2250 = vld [vmem:[#allocation8 + $0x10] sm:$0xff]
    %v2251 = vld [vmem:[#allocation8 + $0x18] sm:$0xff]
    %v2252 = vld [vmem:[#allocation8 + $0x20] sm:$0xff]
    %v2253 = vld [vmem:[#allocation8 + $0x28] sm:$0xff]
    %v2254 = vld [vmem:[#allocation8 + $0x30] sm:$0xff]
    %v2255 = vld [vmem:[#allocation8 + $0x38] sm:$0xff]
    %v2256 = vld [vmem:[#allocation8 + $0x40] sm:$0xff]
    %v2257 = vld [vmem:[#allocation8 + $0x48] sm:$0xff]
    %v2258 = vld [vmem:[#allocation8 + $0x50] sm:$0xff]
    %v2259 = vld [vmem:[#allocation8 + $0x58] sm:$0xff]
    %v2260 = vld [vmem:[#allocation8 + $0x60] sm:$0xff]
    %v2261 = vld [vmem:[#allocation8 + $0x68] sm:$0xff]
    %v2262 = vld [vmem:[#allocation8 + $0x70] sm:$0xff]
    %v2263 = vld [vmem:[#allocation8 + $0x78] sm:$0xff]
    %v2264 = vld [vmem:[#allocation8 + $0x80] sm:$0xff]
    %v2265 = vld [vmem:[#allocation8 + $0x88] sm:$0xff]
    %v2266 = vld [vmem:[#allocation8 + $0x90] sm:$0xff]
    %v2267 = vld [vmem:[#allocation8 + $0x98] sm:$0xff]
    %v2268 = vld [vmem:[#allocation8 + $0xa0] sm:$0xff]
    %v2269 = vld [vmem:[#allocation8 + $0xa8] sm:$0xff]
    %v2270 = vld [vmem:[#allocation8 + $0xb0] sm:$0xff]
    %v2271 = vld [vmem:[#allocation8 + $0xb8] sm:$0xff]
    %v2272 = vld [vmem:[#allocation8 + $0xc0] sm:$0xff]
    %v2273 = vld [vmem:[#allocation8 + $0xc8] sm:$0xff]
    %v2274 = vld [vmem:[#allocation8 + $0xd0] sm:$0xff]
    %v2275 = vld [vmem:[#allocation8 + $0xd8] sm:$0xff]
    %v2276 = vld [vmem:[#allocation8 + $0xe0] sm:$0xff]
    %v2277 = vld [vmem:[#allocation8 + $0xe8] sm:$0xff]
    %v2278 = vld [vmem:[#allocation8 + $0xf0] sm:$0xff]
    %v2279 = vld [vmem:[#allocation8 + $0xf8] sm:$0xff]
    %v2280 = vld [vmem:[#allocation8 + $0x100] sm:$0xff]
    %v2281 = vld [vmem:[#allocation8 + $0x108] sm:$0xff]
    %v2282 = vld [vmem:[#allocation8 + $0x110] sm:$0xff]
    %v2283 = vld [vmem:[#allocation8 + $0x118] sm:$0xff]
    %v2284 = vld [vmem:[#allocation8 + $0x120] sm:$0xff]
    %v2285 = vld [vmem:[#allocation8 + $0x128] sm:$0xff]
    %v2286 = vld [vmem:[#allocation8 + $0x130] sm:$0xff]
    %v2287 = vld [vmem:[#allocation8 + $0x138] sm:$0xff]
    %v2288 = vld [vmem:[#allocation8 + $0x140] sm:$0xff]
    %v2289 = vld [vmem:[#allocation8 + $0x148] sm:$0xff]
    %v2290 = vld [vmem:[#allocation8 + $0x150] sm:$0xff]
    %v2291 = vld [vmem:[#allocation8 + $0x158] sm:$0xff]
    %v2292 = vld [vmem:[#allocation8 + $0x160] sm:$0xff]
    %v2293 = vld [vmem:[#allocation8 + $0x168] sm:$0xff]
    %v2294 = vld [vmem:[#allocation8 + $0x170] sm:$0xff]
    %v2295 = vld [vmem:[#allocation8 + $0x178] sm:$0xff]
    %v2296 = vld [vmem:[#allocation8 + $0x180] sm:$0xff]
    %v2297 = vld [vmem:[#allocation8 + $0x188] sm:$0xff]
    %v2298 = vld [vmem:[#allocation8 + $0x190] sm:$0xff]
    %v2299 = vld [vmem:[#allocation8 + $0x198] sm:$0xff]
    %v2300 = vld [vmem:[#allocation8 + $0x1a0] sm:$0xff]
    %v2301 = vld [vmem:[#allocation8 + $0x1a8] sm:$0xff]
    %v2302 = vld [vmem:[#allocation8 + $0x1b0] sm:$0xff]
    %v2303 = vld [vmem:[#allocation8 + $0x1b8] sm:$0xff]
    %v2304 = vld [vmem:[#allocation8 + $0x1c0] sm:$0xff]
    %v2305 = vld [vmem:[#allocation8 + $0x1c8] sm:$0xff]
    %v2306 = vld [vmem:[#allocation8 + $0x1d0] sm:$0xff]
    %v2307 = vld [vmem:[#allocation8 + $0x1d8] sm:$0xff]
    %v2308 = vld [vmem:[#allocation8 + $0x1e0] sm:$0xff]
    %v2309 = vld [vmem:[#allocation8 + $0x1e8] sm:$0xff]
    %v2310 = vld [vmem:[#allocation8 + $0x1f0] sm:$0xff]
    %v2311 = vld [vmem:[#allocation8 + $0x1f8] sm:$0xff]
    %v2312 = vld [vmem:[#allocation8 + $0x200] sm:$0xff]
    %v2313 = vld [vmem:[#allocation8 + $0x208] sm:$0xff]
    %v2314 = vld [vmem:[#allocation8 + $0x210] sm:$0xff]
    %v2315 = vld [vmem:[#allocation8 + $0x218] sm:$0xff]
    %v2316 = vld [vmem:[#allocation8 + $0x220] sm:$0xff]
    %v2317 = vld [vmem:[#allocation8 + $0x228] sm:$0xff]
    %v2318 = vld [vmem:[#allocation8 + $0x230] sm:$0xff]
    %v2319 = vld [vmem:[#allocation8 + $0x238] sm:$0xff]
    %v2320 = vld [vmem:[#allocation8 + $0x240] sm:$0xff]
    %v2321 = vld [vmem:[#allocation8 + $0x248] sm:$0xff]
    %v2322 = vld [vmem:[#allocation8 + $0x250] sm:$0xff]
    %v2323 = vld [vmem:[#allocation8 + $0x258] sm:$0xff]
    %v2324 = vld [vmem:[#allocation8 + $0x260] sm:$0xff]
    %v2325 = vld [vmem:[#allocation8 + $0x268] sm:$0xff]
    %v2326 = vld [vmem:[#allocation8 + $0x270] sm:$0xff]
    %v2327 = vld [vmem:[#allocation8 + $0x278] sm:$0xff]
    %v2328 = vld [vmem:[#allocation8 + $0x280] sm:$0xff]
    %v2329 = vld [vmem:[#allocation8 + $0x288] sm:$0xff]
    %v2330 = vld [vmem:[#allocation8 + $0x290] sm:$0xff]
    %v2331 = vld [vmem:[#allocation8 + $0x298] sm:$0xff]
    %v2332 = vld [vmem:[#allocation8 + $0x2a0] sm:$0xff]
    %v2333 = vld [vmem:[#allocation8 + $0x2a8] sm:$0xff]
    %v2334 = vld [vmem:[#allocation8 + $0x2b0] sm:$0xff]
    %v2335 = vld [vmem:[#allocation8 + $0x2b8] sm:$0xff]
    %v2336 = vld [vmem:[#allocation8 + $0x2c0] sm:$0xff]
    %v2337 = vld [vmem:[#allocation8 + $0x2c8] sm:$0xff]
    %v2338 = vld [vmem:[#allocation8 + $0x2d0] sm:$0xff]
    %v2339 = vld [vmem:[#allocation8 + $0x2d8] sm:$0xff]
    %v2340 = vld [vmem:[#allocation8 + $0x2e0] sm:$0xff]
    %v2341 = vld [vmem:[#allocation8 + $0x2e8] sm:$0xff]
    %v2342 = vld [vmem:[#allocation8 + $0x2f0] sm:$0xff]
    %v2343 = vld [vmem:[#allocation8 + $0x2f8] sm:$0xff]
    %v2344 = vld [vmem:[#allocation8 + $0x300] sm:$0xff]
    %v2345 = vld [vmem:[#allocation8 + $0x308] sm:$0xff]
    %v2346 = vld [vmem:[#allocation8 + $0x310] sm:$0xff]
    %v2347 = vld [vmem:[#allocation8 + $0x318] sm:$0xff]
    %v2348 = vld [vmem:[#allocation8 + $0x320] sm:$0xff]
    %v2349 = vld [vmem:[#allocation8 + $0x328] sm:$0xff]
    %v2350 = vld [vmem:[#allocation8 + $0x330] sm:$0xff]
    %v2351 = vld [vmem:[#allocation8 + $0x338] sm:$0xff]
    %v2352 = vld [vmem:[#allocation8 + $0x340] sm:$0xff]
    %v2353 = vld [vmem:[#allocation8 + $0x348] sm:$0xff]
    %v2354 = vld [vmem:[#allocation8 + $0x350] sm:$0xff]
    %v2355 = vld [vmem:[#allocation8 + $0x358] sm:$0xff]
    %v2356 = vld [vmem:[#allocation8 + $0x360] sm:$0xff]
    %v2357 = vld [vmem:[#allocation8 + $0x368] sm:$0xff]
    %v2358 = vld [vmem:[#allocation8 + $0x370] sm:$0xff]
    %v2359 = vld [vmem:[#allocation8 + $0x378] sm:$0xff]
    %v2360 = vld [vmem:[#allocation8 + $0x380] sm:$0xff]
    %v2361 = vld [vmem:[#allocation8 + $0x388] sm:$0xff]
    %v2362 = vld [vmem:[#allocation8 + $0x390] sm:$0xff]
    %v2363 = vld [vmem:[#allocation8 + $0x398] sm:$0xff]
    %v2364 = vld [vmem:[#allocation8 + $0x3a0] sm:$0xff]
    %v2365 = vld [vmem:[#allocation8 + $0x3a8] sm:$0xff]
    %v2366 = vld [vmem:[#allocation8 + $0x3b0] sm:$0xff]
    %v2367 = vld [vmem:[#allocation8 + $0x3b8] sm:$0xff]
    %v2368 = vld [vmem:[#allocation8 + $0x3c0] sm:$0xff]
    %v2369 = vld [vmem:[#allocation8 + $0x3c8] sm:$0xff]
    %v2370 = vld [vmem:[#allocation8 + $0x3d0] sm:$0xff]
    %v2371 = vld [vmem:[#allocation8 + $0x3d8] sm:$0xff]
    %v2372 = vld [vmem:[#allocation8 + $0x3e0] sm:$0xff]
    %v2373 = vld [vmem:[#allocation8 + $0x3e8] sm:$0xff]
    %v2374 = vld [vmem:[#allocation8 + $0x3f0] sm:$0xff]
    %v2375 = vld [vmem:[#allocation8 + $0x3f8] sm:$0xff]
    %v2376 = vld [vmem:[#allocation8 + $0x400] sm:$0xff]
    %v2377 = vld [vmem:[#allocation8 + $0x408] sm:$0xff]
    %v2378 = vld [vmem:[#allocation8 + $0x410] sm:$0xff]
    %v2379 = vld [vmem:[#allocation8 + $0x418] sm:$0xff]
    %v2380 = vld [vmem:[#allocation8 + $0x420] sm:$0xff]
    %v2381 = vld [vmem:[#allocation8 + $0x428] sm:$0xff]
    %v2382 = vld [vmem:[#allocation8 + $0x430] sm:$0xff]
    %v2383 = vld [vmem:[#allocation8 + $0x438] sm:$0xff]
    %v2384 = vld [vmem:[#allocation8 + $0x440] sm:$0xff]
    %v2385 = vld [vmem:[#allocation8 + $0x448] sm:$0xff]
    %v2386 = vld [vmem:[#allocation8 + $0x450] sm:$0xff]
    %v2387 = vld [vmem:[#allocation8 + $0x458] sm:$0xff]
    %v2388 = vld [vmem:[#allocation8 + $0x460] sm:$0xff]
    %v2389 = vld [vmem:[#allocation8 + $0x468] sm:$0xff]
    %v2390 = vld [vmem:[#allocation8 + $0x470] sm:$0xff]
    %v2391 = vld [vmem:[#allocation8 + $0x478] sm:$0xff]
    %v2392 = vld [vmem:[#allocation8 + $0x480] sm:$0xff]
    %v2393 = vld [vmem:[#allocation8 + $0x488] sm:$0xff]
    %v2394 = vld [vmem:[#allocation8 + $0x490] sm:$0xff]
    %v2395 = vld [vmem:[#allocation8 + $0x498] sm:$0xff]
    %v2396 = vld [vmem:[#allocation8 + $0x4a0] sm:$0xff]
    %v2397 = vld [vmem:[#allocation8 + $0x4a8] sm:$0xff]
    %v2398 = vld [vmem:[#allocation8 + $0x4b0] sm:$0xff]
    %v2399 = vld [vmem:[#allocation8 + $0x4b8] sm:$0xff]
    %v2400 = vld [vmem:[#allocation8 + $0x4c0] sm:$0xff]
    %v2401 = vld [vmem:[#allocation8 + $0x4c8] sm:$0xff]
    %v2402 = vld [vmem:[#allocation8 + $0x4d0] sm:$0xff]
    %v2403 = vld [vmem:[#allocation8 + $0x4d8] sm:$0xff]
    %v2404 = vld [vmem:[#allocation8 + $0x4e0] sm:$0xff]
    %v2405 = vld [vmem:[#allocation8 + $0x4e8] sm:$0xff]
    %v2406 = vld [vmem:[#allocation8 + $0x4f0] sm:$0xff]
    %v2407 = vld [vmem:[#allocation8 + $0x4f8] sm:$0xff]
    %v2408 = vld [vmem:[#allocation8 + $0x500] sm:$0xff]
    %v2409 = vld [vmem:[#allocation8 + $0x508] sm:$0xff]
    %v2410 = vld [vmem:[#allocation8 + $0x510] sm:$0xff]
    %v2411 = vld [vmem:[#allocation8 + $0x518] sm:$0xff]
    %v2412 = vld [vmem:[#allocation8 + $0x520] sm:$0xff]
    %v2413 = vld [vmem:[#allocation8 + $0x528] sm:$0xff]
    %v2414 = vld [vmem:[#allocation8 + $0x530] sm:$0xff]
    %v2415 = vld [vmem:[#allocation8 + $0x538] sm:$0xff]
    %v2416 = vld [vmem:[#allocation8 + $0x540] sm:$0xff]
    %v2417 = vld [vmem:[#allocation8 + $0x548] sm:$0xff]
    %v2418 = vld [vmem:[#allocation8 + $0x550] sm:$0xff]
    %v2419 = vld [vmem:[#allocation8 + $0x558] sm:$0xff]
    %v2420 = vld [vmem:[#allocation8 + $0x560] sm:$0xff]
    %v2421 = vld [vmem:[#allocation8 + $0x568] sm:$0xff]
    %v2422 = vld [vmem:[#allocation8 + $0x570] sm:$0xff]
    %v2423 = vld [vmem:[#allocation8 + $0x578] sm:$0xff]
    %v2424 = vld [vmem:[#allocation8 + $0x580] sm:$0xff]
    %v2425 = vld [vmem:[#allocation8 + $0x588] sm:$0xff]
    %v2426 = vld [vmem:[#allocation8 + $0x590] sm:$0xff]
    %v2427 = vld [vmem:[#allocation8 + $0x598] sm:$0xff]
    %v2428 = vld [vmem:[#allocation8 + $0x5a0] sm:$0xff]
    %v2429 = vld [vmem:[#allocation8 + $0x5a8] sm:$0xff]
    %v2430 = vld [vmem:[#allocation8 + $0x5b0] sm:$0xff]
    %v2431 = vld [vmem:[#allocation8 + $0x5b8] sm:$0xff]
    %v2432 = vld [vmem:[#allocation8 + $0x5c0] sm:$0xff]
    %v2433 = vld [vmem:[#allocation8 + $0x5c8] sm:$0xff]
    %v2434 = vld [vmem:[#allocation8 + $0x5d0] sm:$0xff]
    %v2435 = vld [vmem:[#allocation8 + $0x5d8] sm:$0xff]
    %v2436 = vld [vmem:[#allocation8 + $0x5e0] sm:$0xff]
    %v2437 = vld [vmem:[#allocation8 + $0x5e8] sm:$0xff]
    %v2438 = vld [vmem:[#allocation8 + $0x5f0] sm:$0xff]
    %v2439 = vld [vmem:[#allocation8 + $0x5f8] sm:$0xff]
    %v2440 = vld [vmem:[#allocation8 + $0x600] sm:$0xff]
    %v2441 = vld [vmem:[#allocation8 + $0x608] sm:$0xff]
    %v2442 = vld [vmem:[#allocation8 + $0x610] sm:$0xff]
    %v2443 = vld [vmem:[#allocation8 + $0x618] sm:$0xff]
    %v2444 = vld [vmem:[#allocation8 + $0x620] sm:$0xff]
    %v2445 = vld [vmem:[#allocation8 + $0x628] sm:$0xff]
    %v2446 = vld [vmem:[#allocation8 + $0x630] sm:$0xff]
    %v2447 = vld [vmem:[#allocation8 + $0x638] sm:$0xff]
    %v2448 = vld [vmem:[#allocation8 + $0x640] sm:$0xff]
    %v2449 = vld [vmem:[#allocation8 + $0x648] sm:$0xff]
    %v2450 = vld [vmem:[#allocation8 + $0x650] sm:$0xff]
    %v2451 = vld [vmem:[#allocation8 + $0x658] sm:$0xff]
    %v2452 = vld [vmem:[#allocation8 + $0x660] sm:$0xff]
    %v2453 = vld [vmem:[#allocation8 + $0x668] sm:$0xff]
    %v2454 = vld [vmem:[#allocation8 + $0x670] sm:$0xff]
    %v2455 = vld [vmem:[#allocation8 + $0x678] sm:$0xff]
    %v2456 = vld [vmem:[#allocation8 + $0x680] sm:$0xff]
    %v2457 = vld [vmem:[#allocation8 + $0x688] sm:$0xff]
    %v2458 = vld [vmem:[#allocation8 + $0x690] sm:$0xff]
    %v2459 = vld [vmem:[#allocation8 + $0x698] sm:$0xff]
    %v2460 = vld [vmem:[#allocation8 + $0x6a0] sm:$0xff]
    %v2461 = vld [vmem:[#allocation8 + $0x6a8] sm:$0xff]
    %v2462 = vld [vmem:[#allocation8 + $0x6b0] sm:$0xff]
    %v2463 = vld [vmem:[#allocation8 + $0x6b8] sm:$0xff]
    %v2464 = vld [vmem:[#allocation8 + $0x6c0] sm:$0xff]
    %v2465 = vld [vmem:[#allocation8 + $0x6c8] sm:$0xff]
    %v2466 = vld [vmem:[#allocation8 + $0x6d0] sm:$0xff]
    %v2467 = vld [vmem:[#allocation8 + $0x6d8] sm:$0xff]
    %v2468 = vld [vmem:[#allocation8 + $0x6e0] sm:$0xff]
    %v2469 = vld [vmem:[#allocation8 + $0x6e8] sm:$0xff]
    %v2470 = vld [vmem:[#allocation8 + $0x6f0] sm:$0xff]
    %v2471 = vld [vmem:[#allocation8 + $0x6f8] sm:$0xff]
    %v2472 = vld [vmem:[#allocation8 + $0x700] sm:$0xff]
    %v2473 = vld [vmem:[#allocation8 + $0x708] sm:$0xff]
    %v2474 = vld [vmem:[#allocation8 + $0x710] sm:$0xff]
    %v2475 = vld [vmem:[#allocation8 + $0x718] sm:$0xff]
    %v2476 = vld [vmem:[#allocation8 + $0x720] sm:$0xff]
    %v2477 = vld [vmem:[#allocation8 + $0x728] sm:$0xff]
    %v2478 = vld [vmem:[#allocation8 + $0x730] sm:$0xff]
    %v2479 = vld [vmem:[#allocation8 + $0x738] sm:$0xff]
    %v2480 = vld [vmem:[#allocation8 + $0x740] sm:$0xff]
    %v2481 = vld [vmem:[#allocation8 + $0x748] sm:$0xff]
    %v2482 = vld [vmem:[#allocation8 + $0x750] sm:$0xff]
    %v2483 = vld [vmem:[#allocation8 + $0x758] sm:$0xff]
    %v2484 = vld [vmem:[#allocation8 + $0x760] sm:$0xff]
    %v2485 = vld [vmem:[#allocation8 + $0x768] sm:$0xff]
    %v2486 = vld [vmem:[#allocation8 + $0x770] sm:$0xff]
    %v2487 = vld [vmem:[#allocation8 + $0x778] sm:$0xff]
    %v2488 = vld [vmem:[#allocation8 + $0x780] sm:$0xff]
    %v2489 = vld [vmem:[#allocation8 + $0x788] sm:$0xff]
    %v2490 = vld [vmem:[#allocation8 + $0x790] sm:$0xff]
    %v2491 = vld [vmem:[#allocation8 + $0x798] sm:$0xff]
    %v2492 = vld [vmem:[#allocation8 + $0x7a0] sm:$0xff]
    %v2493 = vld [vmem:[#allocation8 + $0x7a8] sm:$0xff]
    %v2494 = vld [vmem:[#allocation8 + $0x7b0] sm:$0xff]
    %v2495 = vld [vmem:[#allocation8 + $0x7b8] sm:$0xff]
    %v2496 = vld [vmem:[#allocation8 + $0x7c0] sm:$0xff]
    %v2497 = vld [vmem:[#allocation8 + $0x7c8] sm:$0xff]
    %v2498 = vld [vmem:[#allocation8 + $0x7d0] sm:$0xff]
    %v2499 = vld [vmem:[#allocation8 + $0x7d8] sm:$0xff]
    %v2500 = vld [vmem:[#allocation8 + $0x7e0] sm:$0xff]
    %v2501 = vld [vmem:[#allocation8 + $0x7e8] sm:$0xff]
    %v2502 = vld [vmem:[#allocation8 + $0x7f0] sm:$0xff]
    %v2503 = vld [vmem:[#allocation8 + $0x7f8] sm:$0xff]
    %v2504 = vld [vmem:[#allocation8 + $0x800] sm:$0xff]
    %v2505 = vld [vmem:[#allocation8 + $0x808] sm:$0xff]
    %v2506 = vld [vmem:[#allocation8 + $0x810] sm:$0xff]
    %v2507 = vld [vmem:[#allocation8 + $0x818] sm:$0xff]
    %v2508 = vld [vmem:[#allocation8 + $0x820] sm:$0xff]
    %v2509 = vld [vmem:[#allocation8 + $0x828] sm:$0xff]
    %v2510 = vld [vmem:[#allocation8 + $0x830] sm:$0xff]
    %v2511 = vld [vmem:[#allocation8 + $0x838] sm:$0xff]
    %v2512 = vld [vmem:[#allocation8 + $0x840] sm:$0xff]
    %v2513 = vld [vmem:[#allocation8 + $0x848] sm:$0xff]
    %v2514 = vld [vmem:[#allocation8 + $0x850] sm:$0xff]
    %v2515 = vld [vmem:[#allocation8 + $0x858] sm:$0xff]
    %v2516 = vld [vmem:[#allocation8 + $0x860] sm:$0xff]
    %v2517 = vld [vmem:[#allocation8 + $0x868] sm:$0xff]
    %v2518 = vld [vmem:[#allocation8 + $0x870] sm:$0xff]
    %v2519 = vld [vmem:[#allocation8 + $0x878] sm:$0xff]
    %v2520 = vld [vmem:[#allocation8 + $0x880] sm:$0xff]
    %v2521 = vld [vmem:[#allocation8 + $0x888] sm:$0xff]
    %v2522 = vld [vmem:[#allocation8 + $0x890] sm:$0xff]
    %v2523 = vld [vmem:[#allocation8 + $0x898] sm:$0xff]
    %v2524 = vld [vmem:[#allocation8 + $0x8a0] sm:$0xff]
    %v2525 = vld [vmem:[#allocation8 + $0x8a8] sm:$0xff]
    %v2526 = vld [vmem:[#allocation8 + $0x8b0] sm:$0xff]
    %v2527 = vld [vmem:[#allocation8 + $0x8b8] sm:$0xff]
    %v2528 = vld [vmem:[#allocation8 + $0x8c0] sm:$0xff]
    %v2529 = vld [vmem:[#allocation8 + $0x8c8] sm:$0xff]
    %v2530 = vld [vmem:[#allocation8 + $0x8d0] sm:$0xff]
    %v2531 = vld [vmem:[#allocation8 + $0x8d8] sm:$0xff]
    %v2532 = vld [vmem:[#allocation8 + $0x8e0] sm:$0xff]
    %v2533 = vld [vmem:[#allocation8 + $0x8e8] sm:$0xff]
    %v2534 = vld [vmem:[#allocation8 + $0x8f0] sm:$0xff]
    %v2535 = vld [vmem:[#allocation8 + $0x8f8] sm:$0xff]
    %v2536 = vld [vmem:[#allocation10] sm:$0x3f]
    %v2538 = vlaneseq
    %v2539 = vshrl.u32 %v2538, 7
    %v2540 = vsub.s32 0, %v2539
    %v2541 = vrot.slane %v2536, %v2540
    %v2542 = vlaneseq
    %v2543 = vshrl.u32 %v2542, 7
    %v2544 = vsub.s32 1, %v2543
    %v2545 = vrot.slane %v2536, %v2544
    %v2546 = vlaneseq
    %v2547 = vshrl.u32 %v2546, 7
    %v2548 = vsub.s32 2, %v2547
    %v2549 = vrot.slane %v2536, %v2548
    %v2550 = vlaneseq
    %v2551 = vshrl.u32 %v2550, 7
    %v2552 = vsub.s32 3, %v2551
    %v2553 = vrot.slane %v2536, %v2552
    %v2554 = vlaneseq
    %v2555 = vshrl.u32 %v2554, 7
    %v2556 = vsub.s32 4, %v2555
    %v2557 = vrot.slane %v2536, %v2556
    %v2558 = vlaneseq
    %v2559 = vshrl.u32 %v2558, 7
    %v2560 = vsub.s32 5, %v2559
    %v2561 = vrot.slane %v2536, %v2560
    %v2856 = vunpack.c.l.b16 %v2248
    %v2857 = vunpack.c.h.b16 %v2248
    %v2858 = vunpack.c.l.b16 %v2249
    %v2859 = vunpack.c.h.b16 %v2249
    %v2860 = vunpack.c.l.b16 %v2250
    %v2861 = vunpack.c.h.b16 %v2250
    %v2862 = vunpack.c.l.b16 %v2251
    %v2863 = vunpack.c.h.b16 %v2251
    %v2864 = vunpack.c.l.b16 %v2252
    %v2865 = vunpack.c.h.b16 %v2252
    %v2866 = vunpack.c.l.b16 %v2253
    %v2867 = vunpack.c.h.b16 %v2253
    %v2868 = vunpack.c.l.b16 %v2254
    %v2869 = vunpack.c.h.b16 %v2254
    %v2870 = vunpack.c.l.b16 %v2255
    %v2871 = vunpack.c.h.b16 %v2255
    %v2872 = vunpack.c.l.b16 %v2256
    %v2873 = vunpack.c.h.b16 %v2256
    %v2874 = vunpack.c.l.b16 %v2257
    %v2875 = vunpack.c.h.b16 %v2257
    %v2876 = vunpack.c.l.b16 %v2258
    %v2877 = vunpack.c.h.b16 %v2258
    %v2878 = vunpack.c.l.b16 %v2259
    %v2879 = vunpack.c.h.b16 %v2259
    %v2880 = vunpack.c.l.b16 %v2260
    %v2881 = vunpack.c.h.b16 %v2260
    %v2882 = vunpack.c.l.b16 %v2261
    %v2883 = vunpack.c.h.b16 %v2261
    %v2884 = vunpack.c.l.b16 %v2262
    %v2885 = vunpack.c.h.b16 %v2262
    %v2886 = vunpack.c.l.b16 %v2263
    %v2887 = vunpack.c.h.b16 %v2263
    %v2888 = vunpack.c.l.b16 %v2264
    %v2889 = vunpack.c.h.b16 %v2264
    %v2890 = vunpack.c.l.b16 %v2265
    %v2891 = vunpack.c.h.b16 %v2265
    %v2892 = vunpack.c.l.b16 %v2266
    %v2893 = vunpack.c.h.b16 %v2266
    %v2894 = vunpack.c.l.b16 %v2267
    %v2895 = vunpack.c.h.b16 %v2267
    %v2896 = vunpack.c.l.b16 %v2268
    %v2897 = vunpack.c.h.b16 %v2268
    %v2898 = vunpack.c.l.b16 %v2269
    %v2899 = vunpack.c.h.b16 %v2269
    %v2900 = vunpack.c.l.b16 %v2270
    %v2901 = vunpack.c.h.b16 %v2270
    %v2902 = vunpack.c.l.b16 %v2271
    %v2903 = vunpack.c.h.b16 %v2271
    %v2904 = vunpack.c.l.b16 %v2272
    %v2905 = vunpack.c.h.b16 %v2272
    %v2906 = vunpack.c.l.b16 %v2273
    %v2907 = vunpack.c.h.b16 %v2273
    %v2908 = vunpack.c.l.b16 %v2274
    %v2909 = vunpack.c.h.b16 %v2274
    %v2910 = vunpack.c.l.b16 %v2275
    %v2911 = vunpack.c.h.b16 %v2275
    %v2912 = vunpack.c.l.b16 %v2276
    %v2913 = vunpack.c.h.b16 %v2276
    %v2914 = vunpack.c.l.b16 %v2277
    %v2915 = vunpack.c.h.b16 %v2277
    %v2916 = vunpack.c.l.b16 %v2278
    %v2917 = vunpack.c.h.b16 %v2278
    %v2918 = vunpack.c.l.b16 %v2279
    %v2919 = vunpack.c.h.b16 %v2279
    %v2920 = vunpack.c.l.b16 %v2280
    %v2921 = vunpack.c.h.b16 %v2280
    %v2922 = vunpack.c.l.b16 %v2281
    %v2923 = vunpack.c.h.b16 %v2281
    %v2924 = vunpack.c.l.b16 %v2282
    %v2925 = vunpack.c.h.b16 %v2282
    %v2926 = vunpack.c.l.b16 %v2283
    %v2927 = vunpack.c.h.b16 %v2283
    %v2928 = vunpack.c.l.b16 %v2284
    %v2929 = vunpack.c.h.b16 %v2284
    %v2930 = vunpack.c.l.b16 %v2285
    %v2931 = vunpack.c.h.b16 %v2285
    %v2932 = vunpack.c.l.b16 %v2286
    %v2933 = vunpack.c.h.b16 %v2286
    %v2934 = vunpack.c.l.b16 %v2287
    %v2935 = vunpack.c.h.b16 %v2287
    %v2936 = vunpack.c.l.b16 %v2288
    %v2937 = vunpack.c.h.b16 %v2288
    %v2938 = vunpack.c.l.b16 %v2289
    %v2939 = vunpack.c.h.b16 %v2289
    %v2940 = vunpack.c.l.b16 %v2290
    %v2941 = vunpack.c.h.b16 %v2290
    %v2942 = vunpack.c.l.b16 %v2291
    %v2943 = vunpack.c.h.b16 %v2291
    %v2944 = vunpack.c.l.b16 %v2292
    %v2945 = vunpack.c.h.b16 %v2292
    %v2946 = vunpack.c.l.b16 %v2293
    %v2947 = vunpack.c.h.b16 %v2293
    %v2948 = vunpack.c.l.b16 %v2294
    %v2949 = vunpack.c.h.b16 %v2294
    %v2950 = vunpack.c.l.b16 %v2295
    %v2951 = vunpack.c.h.b16 %v2295
    %v2952 = vunpack.c.l.b16 %v2296
    %v2953 = vunpack.c.h.b16 %v2296
    %v2954 = vunpack.c.l.b16 %v2297
    %v2955 = vunpack.c.h.b16 %v2297
    %v2956 = vunpack.c.l.b16 %v2298
    %v2957 = vunpack.c.h.b16 %v2298
    %v2958 = vunpack.c.l.b16 %v2299
    %v2959 = vunpack.c.h.b16 %v2299
    %v2960 = vunpack.c.l.b16 %v2300
    %v2961 = vunpack.c.h.b16 %v2300
    %v2962 = vunpack.c.l.b16 %v2301
    %v2963 = vunpack.c.h.b16 %v2301
    %v2964 = vunpack.c.l.b16 %v2302
    %v2965 = vunpack.c.h.b16 %v2302
    %v2966 = vunpack.c.l.b16 %v2303
    %v2967 = vunpack.c.h.b16 %v2303
    %v2968 = vunpack.c.l.b16 %v2304
    %v2969 = vunpack.c.h.b16 %v2304
    %v2970 = vunpack.c.l.b16 %v2305
    %v2971 = vunpack.c.h.b16 %v2305
    %v2972 = vunpack.c.l.b16 %v2306
    %v2973 = vunpack.c.h.b16 %v2306
    %v2974 = vunpack.c.l.b16 %v2307
    %v2975 = vunpack.c.h.b16 %v2307
    %v2976 = vunpack.c.l.b16 %v2308
    %v2977 = vunpack.c.h.b16 %v2308
    %v2978 = vunpack.c.l.b16 %v2309
    %v2979 = vunpack.c.h.b16 %v2309
    %v2980 = vunpack.c.l.b16 %v2310
    %v2981 = vunpack.c.h.b16 %v2310
    %v2982 = vunpack.c.l.b16 %v2311
    %v2983 = vunpack.c.h.b16 %v2311
    %v2984 = vunpack.c.l.b16 %v2312
    %v2985 = vunpack.c.h.b16 %v2312
    %v2986 = vunpack.c.l.b16 %v2313
    %v2987 = vunpack.c.h.b16 %v2313
    %v2988 = vunpack.c.l.b16 %v2314
    %v2989 = vunpack.c.h.b16 %v2314
    %v2990 = vunpack.c.l.b16 %v2315
    %v2991 = vunpack.c.h.b16 %v2315
    %v2992 = vunpack.c.l.b16 %v2316
    %v2993 = vunpack.c.h.b16 %v2316
    %v2994 = vunpack.c.l.b16 %v2317
    %v2995 = vunpack.c.h.b16 %v2317
    %v2996 = vunpack.c.l.b16 %v2318
    %v2997 = vunpack.c.h.b16 %v2318
    %v2998 = vunpack.c.l.b16 %v2319
    %v2999 = vunpack.c.h.b16 %v2319
    %v3000 = vunpack.c.l.b16 %v2320
    %v3001 = vunpack.c.h.b16 %v2320
    %v3002 = vunpack.c.l.b16 %v2321
    %v3003 = vunpack.c.h.b16 %v2321
    %v3004 = vunpack.c.l.b16 %v2322
    %v3005 = vunpack.c.h.b16 %v2322
    %v3006 = vunpack.c.l.b16 %v2323
    %v3007 = vunpack.c.h.b16 %v2323
    %v3008 = vunpack.c.l.b16 %v2324
    %v3009 = vunpack.c.h.b16 %v2324
    %v3010 = vunpack.c.l.b16 %v2325
    %v3011 = vunpack.c.h.b16 %v2325
    %v3012 = vunpack.c.l.b16 %v2326
    %v3013 = vunpack.c.h.b16 %v2326
    %v3014 = vunpack.c.l.b16 %v2327
    %v3015 = vunpack.c.h.b16 %v2327
    %v3016 = vunpack.c.l.b16 %v2328
    %v3017 = vunpack.c.h.b16 %v2328
    %v3018 = vunpack.c.l.b16 %v2329
    %v3019 = vunpack.c.h.b16 %v2329
    %v3020 = vunpack.c.l.b16 %v2330
    %v3021 = vunpack.c.h.b16 %v2330
    %v3022 = vunpack.c.l.b16 %v2331
    %v3023 = vunpack.c.h.b16 %v2331
    %v3024 = vunpack.c.l.b16 %v2332
    %v3025 = vunpack.c.h.b16 %v2332
    %v3026 = vunpack.c.l.b16 %v2333
    %v3027 = vunpack.c.h.b16 %v2333
    %v3028 = vunpack.c.l.b16 %v2334
    %v3029 = vunpack.c.h.b16 %v2334
    %v3030 = vunpack.c.l.b16 %v2335
    %v3031 = vunpack.c.h.b16 %v2335
    %v3032 = vunpack.c.l.b16 %v2336
    %v3033 = vunpack.c.h.b16 %v2336
    %v3034 = vunpack.c.l.b16 %v2337
    %v3035 = vunpack.c.h.b16 %v2337
    %v3036 = vunpack.c.l.b16 %v2338
    %v3037 = vunpack.c.h.b16 %v2338
    %v3038 = vunpack.c.l.b16 %v2339
    %v3039 = vunpack.c.h.b16 %v2339
    %v3040 = vunpack.c.l.b16 %v2340
    %v3041 = vunpack.c.h.b16 %v2340
    %v3042 = vunpack.c.l.b16 %v2341
    %v3043 = vunpack.c.h.b16 %v2341
    %v3044 = vunpack.c.l.b16 %v2342
    %v3045 = vunpack.c.h.b16 %v2342
    %v3046 = vunpack.c.l.b16 %v2343
    %v3047 = vunpack.c.h.b16 %v2343
    %v3048 = vunpack.c.l.b16 %v2344
    %v3049 = vunpack.c.h.b16 %v2344
    %v3050 = vunpack.c.l.b16 %v2345
    %v3051 = vunpack.c.h.b16 %v2345
    %v3052 = vunpack.c.l.b16 %v2346
    %v3053 = vunpack.c.h.b16 %v2346
    %v3054 = vunpack.c.l.b16 %v2347
    %v3055 = vunpack.c.h.b16 %v2347
    %v3056 = vunpack.c.l.b16 %v2348
    %v3057 = vunpack.c.h.b16 %v2348
    %v3058 = vunpack.c.l.b16 %v2349
    %v3059 = vunpack.c.h.b16 %v2349
    %v3060 = vunpack.c.l.b16 %v2350
    %v3061 = vunpack.c.h.b16 %v2350
    %v3062 = vunpack.c.l.b16 %v2351
    %v3063 = vunpack.c.h.b16 %v2351
    %v3064 = vunpack.c.l.b16 %v2352
    %v3065 = vunpack.c.h.b16 %v2352
    %v3066 = vunpack.c.l.b16 %v2353
    %v3067 = vunpack.c.h.b16 %v2353
    %v3068 = vunpack.c.l.b16 %v2354
    %v3069 = vunpack.c.h.b16 %v2354
    %v3070 = vunpack.c.l.b16 %v2355
    %v3071 = vunpack.c.h.b16 %v2355
    %v3072 = vunpack.c.l.b16 %v2356
    %v3073 = vunpack.c.h.b16 %v2356
    %v3074 = vunpack.c.l.b16 %v2357
    %v3075 = vunpack.c.h.b16 %v2357
    %v3076 = vunpack.c.l.b16 %v2358
    %v3077 = vunpack.c.h.b16 %v2358
    %v3078 = vunpack.c.l.b16 %v2359
    %v3079 = vunpack.c.h.b16 %v2359
    %v3080 = vunpack.c.l.b16 %v2360
    %v3081 = vunpack.c.h.b16 %v2360
    %v3082 = vunpack.c.l.b16 %v2361
    %v3083 = vunpack.c.h.b16 %v2361
    %v3084 = vunpack.c.l.b16 %v2362
    %v3085 = vunpack.c.h.b16 %v2362
    %v3086 = vunpack.c.l.b16 %v2363
    %v3087 = vunpack.c.h.b16 %v2363
    %v3088 = vunpack.c.l.b16 %v2364
    %v3089 = vunpack.c.h.b16 %v2364
    %v3090 = vunpack.c.l.b16 %v2365
    %v3091 = vunpack.c.h.b16 %v2365
    %v3092 = vunpack.c.l.b16 %v2366
    %v3093 = vunpack.c.h.b16 %v2366
    %v3094 = vunpack.c.l.b16 %v2367
    %v3095 = vunpack.c.h.b16 %v2367
    %v3096 = vunpack.c.l.b16 %v2368
    %v3097 = vunpack.c.h.b16 %v2368
    %v3098 = vunpack.c.l.b16 %v2369
    %v3099 = vunpack.c.h.b16 %v2369
    %v3100 = vunpack.c.l.b16 %v2370
    %v3101 = vunpack.c.h.b16 %v2370
    %v3102 = vunpack.c.l.b16 %v2371
    %v3103 = vunpack.c.h.b16 %v2371
    %v3104 = vunpack.c.l.b16 %v2372
    %v3105 = vunpack.c.h.b16 %v2372
    %v3106 = vunpack.c.l.b16 %v2373
    %v3107 = vunpack.c.h.b16 %v2373
    %v3108 = vunpack.c.l.b16 %v2374
    %v3109 = vunpack.c.h.b16 %v2374
    %v3110 = vunpack.c.l.b16 %v2375
    %v3111 = vunpack.c.h.b16 %v2375
    %v3112 = vunpack.c.l.b16 %v2376
    %v3113 = vunpack.c.h.b16 %v2376
    %v3114 = vunpack.c.l.b16 %v2377
    %v3115 = vunpack.c.h.b16 %v2377
    %v3116 = vunpack.c.l.b16 %v2378
    %v3117 = vunpack.c.h.b16 %v2378
    %v3118 = vunpack.c.l.b16 %v2379
    %v3119 = vunpack.c.h.b16 %v2379
    %v3120 = vunpack.c.l.b16 %v2380
    %v3121 = vunpack.c.h.b16 %v2380
    %v3122 = vunpack.c.l.b16 %v2381
    %v3123 = vunpack.c.h.b16 %v2381
    %v3124 = vunpack.c.l.b16 %v2382
    %v3125 = vunpack.c.h.b16 %v2382
    %v3126 = vunpack.c.l.b16 %v2383
    %v3127 = vunpack.c.h.b16 %v2383
    %v3128 = vunpack.c.l.b16 %v2384
    %v3129 = vunpack.c.h.b16 %v2384
    %v3130 = vunpack.c.l.b16 %v2385
    %v3131 = vunpack.c.h.b16 %v2385
    %v3132 = vunpack.c.l.b16 %v2386
    %v3133 = vunpack.c.h.b16 %v2386
    %v3134 = vunpack.c.l.b16 %v2387
    %v3135 = vunpack.c.h.b16 %v2387
    %v3136 = vunpack.c.l.b16 %v2388
    %v3137 = vunpack.c.h.b16 %v2388
    %v3138 = vunpack.c.l.b16 %v2389
    %v3139 = vunpack.c.h.b16 %v2389
    %v3140 = vunpack.c.l.b16 %v2390
    %v3141 = vunpack.c.h.b16 %v2390
    %v3142 = vunpack.c.l.b16 %v2391
    %v3143 = vunpack.c.h.b16 %v2391
    %v3144 = vunpack.c.l.b16 %v2392
    %v3145 = vunpack.c.h.b16 %v2392
    %v3146 = vunpack.c.l.b16 %v2393
    %v3147 = vunpack.c.h.b16 %v2393
    %v3148 = vunpack.c.l.b16 %v2394
    %v3149 = vunpack.c.h.b16 %v2394
    %v3150 = vunpack.c.l.b16 %v2395
    %v3151 = vunpack.c.h.b16 %v2395
    %v3152 = vunpack.c.l.b16 %v2396
    %v3153 = vunpack.c.h.b16 %v2396
    %v3154 = vunpack.c.l.b16 %v2397
    %v3155 = vunpack.c.h.b16 %v2397
    %v3156 = vunpack.c.l.b16 %v2398
    %v3157 = vunpack.c.h.b16 %v2398
    %v3158 = vunpack.c.l.b16 %v2399
    %v3159 = vunpack.c.h.b16 %v2399
    %v3160 = vunpack.c.l.b16 %v2400
    %v3161 = vunpack.c.h.b16 %v2400
    %v3162 = vunpack.c.l.b16 %v2401
    %v3163 = vunpack.c.h.b16 %v2401
    %v3164 = vunpack.c.l.b16 %v2402
    %v3165 = vunpack.c.h.b16 %v2402
    %v3166 = vunpack.c.l.b16 %v2403
    %v3167 = vunpack.c.h.b16 %v2403
    %v3168 = vunpack.c.l.b16 %v2404
    %v3169 = vunpack.c.h.b16 %v2404
    %v3170 = vunpack.c.l.b16 %v2405
    %v3171 = vunpack.c.h.b16 %v2405
    %v3172 = vunpack.c.l.b16 %v2406
    %v3173 = vunpack.c.h.b16 %v2406
    %v3174 = vunpack.c.l.b16 %v2407
    %v3175 = vunpack.c.h.b16 %v2407
    %v3176 = vunpack.c.l.b16 %v2408
    %v3177 = vunpack.c.h.b16 %v2408
    %v3178 = vunpack.c.l.b16 %v2409
    %v3179 = vunpack.c.h.b16 %v2409
    %v3180 = vunpack.c.l.b16 %v2410
    %v3181 = vunpack.c.h.b16 %v2410
    %v3182 = vunpack.c.l.b16 %v2411
    %v3183 = vunpack.c.h.b16 %v2411
    %v3184 = vunpack.c.l.b16 %v2412
    %v3185 = vunpack.c.h.b16 %v2412
    %v3186 = vunpack.c.l.b16 %v2413
    %v3187 = vunpack.c.h.b16 %v2413
    %v3188 = vunpack.c.l.b16 %v2414
    %v3189 = vunpack.c.h.b16 %v2414
    %v3190 = vunpack.c.l.b16 %v2415
    %v3191 = vunpack.c.h.b16 %v2415
    %v3192 = vunpack.c.l.b16 %v2416
    %v3193 = vunpack.c.h.b16 %v2416
    %v3194 = vunpack.c.l.b16 %v2417
    %v3195 = vunpack.c.h.b16 %v2417
    %v3196 = vunpack.c.l.b16 %v2418
    %v3197 = vunpack.c.h.b16 %v2418
    %v3198 = vunpack.c.l.b16 %v2419
    %v3199 = vunpack.c.h.b16 %v2419
    %v3200 = vunpack.c.l.b16 %v2420
    %v3201 = vunpack.c.h.b16 %v2420
    %v3202 = vunpack.c.l.b16 %v2421
    %v3203 = vunpack.c.h.b16 %v2421
    %v3204 = vunpack.c.l.b16 %v2422
    %v3205 = vunpack.c.h.b16 %v2422
    %v3206 = vunpack.c.l.b16 %v2423
    %v3207 = vunpack.c.h.b16 %v2423
    %v3208 = vunpack.c.l.b16 %v2424
    %v3209 = vunpack.c.h.b16 %v2424
    %v3210 = vunpack.c.l.b16 %v2425
    %v3211 = vunpack.c.h.b16 %v2425
    %v3212 = vunpack.c.l.b16 %v2426
    %v3213 = vunpack.c.h.b16 %v2426
    %v3214 = vunpack.c.l.b16 %v2427
    %v3215 = vunpack.c.h.b16 %v2427
    %v3216 = vunpack.c.l.b16 %v2428
    %v3217 = vunpack.c.h.b16 %v2428
    %v3218 = vunpack.c.l.b16 %v2429
    %v3219 = vunpack.c.h.b16 %v2429
    %v3220 = vunpack.c.l.b16 %v2430
    %v3221 = vunpack.c.h.b16 %v2430
    %v3222 = vunpack.c.l.b16 %v2431
    %v3223 = vunpack.c.h.b16 %v2431
    %v3224 = vunpack.c.l.b16 %v2432
    %v3225 = vunpack.c.h.b16 %v2432
    %v3226 = vunpack.c.l.b16 %v2433
    %v3227 = vunpack.c.h.b16 %v2433
    %v3228 = vunpack.c.l.b16 %v2434
    %v3229 = vunpack.c.h.b16 %v2434
    %v3230 = vunpack.c.l.b16 %v2435
    %v3231 = vunpack.c.h.b16 %v2435
    %v3232 = vunpack.c.l.b16 %v2436
    %v3233 = vunpack.c.h.b16 %v2436
    %v3234 = vunpack.c.l.b16 %v2437
    %v3235 = vunpack.c.h.b16 %v2437
    %v3236 = vunpack.c.l.b16 %v2438
    %v3237 = vunpack.c.h.b16 %v2438
    %v3238 = vunpack.c.l.b16 %v2439
    %v3239 = vunpack.c.h.b16 %v2439
    %v3240 = vunpack.c.l.b16 %v2440
    %v3241 = vunpack.c.h.b16 %v2440
    %v3242 = vunpack.c.l.b16 %v2441
    %v3243 = vunpack.c.h.b16 %v2441
    %v3244 = vunpack.c.l.b16 %v2442
    %v3245 = vunpack.c.h.b16 %v2442
    %v3246 = vunpack.c.l.b16 %v2443
    %v3247 = vunpack.c.h.b16 %v2443
    %v3248 = vunpack.c.l.b16 %v2444
    %v3249 = vunpack.c.h.b16 %v2444
    %v3250 = vunpack.c.l.b16 %v2445
    %v3251 = vunpack.c.h.b16 %v2445
    %v3252 = vunpack.c.l.b16 %v2446
    %v3253 = vunpack.c.h.b16 %v2446
    %v3254 = vunpack.c.l.b16 %v2447
    %v3255 = vunpack.c.h.b16 %v2447
    %v3256 = vunpack.c.l.b16 %v2448
    %v3257 = vunpack.c.h.b16 %v2448
    %v3258 = vunpack.c.l.b16 %v2449
    %v3259 = vunpack.c.h.b16 %v2449
    %v3260 = vunpack.c.l.b16 %v2450
    %v3261 = vunpack.c.h.b16 %v2450
    %v3262 = vunpack.c.l.b16 %v2451
    %v3263 = vunpack.c.h.b16 %v2451
    %v3264 = vunpack.c.l.b16 %v2452
    %v3265 = vunpack.c.h.b16 %v2452
    %v3266 = vunpack.c.l.b16 %v2453
    %v3267 = vunpack.c.h.b16 %v2453
    %v3268 = vunpack.c.l.b16 %v2454
    %v3269 = vunpack.c.h.b16 %v2454
    %v3270 = vunpack.c.l.b16 %v2455
    %v3271 = vunpack.c.h.b16 %v2455
    %v3272 = vunpack.c.l.b16 %v2456
    %v3273 = vunpack.c.h.b16 %v2456
    %v3274 = vunpack.c.l.b16 %v2457
    %v3275 = vunpack.c.h.b16 %v2457
    %v3276 = vunpack.c.l.b16 %v2458
    %v3277 = vunpack.c.h.b16 %v2458
    %v3278 = vunpack.c.l.b16 %v2459
    %v3279 = vunpack.c.h.b16 %v2459
    %v3280 = vunpack.c.l.b16 %v2460
    %v3281 = vunpack.c.h.b16 %v2460
    %v3282 = vunpack.c.l.b16 %v2461
    %v3283 = vunpack.c.h.b16 %v2461
    %v3284 = vunpack.c.l.b16 %v2462
    %v3285 = vunpack.c.h.b16 %v2462
    %v3286 = vunpack.c.l.b16 %v2463
    %v3287 = vunpack.c.h.b16 %v2463
    %v3288 = vunpack.c.l.b16 %v2464
    %v3289 = vunpack.c.h.b16 %v2464
    %v3290 = vunpack.c.l.b16 %v2465
    %v3291 = vunpack.c.h.b16 %v2465
    %v3292 = vunpack.c.l.b16 %v2466
    %v3293 = vunpack.c.h.b16 %v2466
    %v3294 = vunpack.c.l.b16 %v2467
    %v3295 = vunpack.c.h.b16 %v2467
    %v3296 = vunpack.c.l.b16 %v2468
    %v3297 = vunpack.c.h.b16 %v2468
    %v3298 = vunpack.c.l.b16 %v2469
    %v3299 = vunpack.c.h.b16 %v2469
    %v3300 = vunpack.c.l.b16 %v2470
    %v3301 = vunpack.c.h.b16 %v2470
    %v3302 = vunpack.c.l.b16 %v2471
    %v3303 = vunpack.c.h.b16 %v2471
    %v3304 = vunpack.c.l.b16 %v2472
    %v3305 = vunpack.c.h.b16 %v2472
    %v3306 = vunpack.c.l.b16 %v2473
    %v3307 = vunpack.c.h.b16 %v2473
    %v3308 = vunpack.c.l.b16 %v2474
    %v3309 = vunpack.c.h.b16 %v2474
    %v3310 = vunpack.c.l.b16 %v2475
    %v3311 = vunpack.c.h.b16 %v2475
    %v3312 = vunpack.c.l.b16 %v2476
    %v3313 = vunpack.c.h.b16 %v2476
    %v3314 = vunpack.c.l.b16 %v2477
    %v3315 = vunpack.c.h.b16 %v2477
    %v3316 = vunpack.c.l.b16 %v2478
    %v3317 = vunpack.c.h.b16 %v2478
    %v3318 = vunpack.c.l.b16 %v2479
    %v3319 = vunpack.c.h.b16 %v2479
    %v3320 = vunpack.c.l.b16 %v2480
    %v3321 = vunpack.c.h.b16 %v2480
    %v3322 = vunpack.c.l.b16 %v2481
    %v3323 = vunpack.c.h.b16 %v2481
    %v3324 = vunpack.c.l.b16 %v2482
    %v3325 = vunpack.c.h.b16 %v2482
    %v3326 = vunpack.c.l.b16 %v2483
    %v3327 = vunpack.c.h.b16 %v2483
    %v3328 = vunpack.c.l.b16 %v2484
    %v3329 = vunpack.c.h.b16 %v2484
    %v3330 = vunpack.c.l.b16 %v2485
    %v3331 = vunpack.c.h.b16 %v2485
    %v3332 = vunpack.c.l.b16 %v2486
    %v3333 = vunpack.c.h.b16 %v2486
    %v3334 = vunpack.c.l.b16 %v2487
    %v3335 = vunpack.c.h.b16 %v2487
    %v3336 = vunpack.c.l.b16 %v2488
    %v3337 = vunpack.c.h.b16 %v2488
    %v3338 = vunpack.c.l.b16 %v2489
    %v3339 = vunpack.c.h.b16 %v2489
    %v3340 = vunpack.c.l.b16 %v2490
    %v3341 = vunpack.c.h.b16 %v2490
    %v3342 = vunpack.c.l.b16 %v2491
    %v3343 = vunpack.c.h.b16 %v2491
    %v3344 = vunpack.c.l.b16 %v2492
    %v3345 = vunpack.c.h.b16 %v2492
    %v3346 = vunpack.c.l.b16 %v2493
    %v3347 = vunpack.c.h.b16 %v2493
    %v3348 = vunpack.c.l.b16 %v2494
    %v3349 = vunpack.c.h.b16 %v2494
    %v3350 = vunpack.c.l.b16 %v2495
    %v3351 = vunpack.c.h.b16 %v2495
    %v3352 = vunpack.c.l.b16 %v2496
    %v3353 = vunpack.c.h.b16 %v2496
    %v3354 = vunpack.c.l.b16 %v2497
    %v3355 = vunpack.c.h.b16 %v2497
    %v3356 = vunpack.c.l.b16 %v2498
    %v3357 = vunpack.c.h.b16 %v2498
    %v3358 = vunpack.c.l.b16 %v2499
    %v3359 = vunpack.c.h.b16 %v2499
    %v3360 = vunpack.c.l.b16 %v2500
    %v3361 = vunpack.c.h.b16 %v2500
    %v3362 = vunpack.c.l.b16 %v2501
    %v3363 = vunpack.c.h.b16 %v2501
    %v3364 = vunpack.c.l.b16 %v2502
    %v3365 = vunpack.c.h.b16 %v2502
    %v3366 = vunpack.c.l.b16 %v2503
    %v3367 = vunpack.c.h.b16 %v2503
    %v3368 = vunpack.c.l.b16 %v2504
    %v3369 = vunpack.c.h.b16 %v2504
    %v3370 = vunpack.c.l.b16 %v2505
    %v3371 = vunpack.c.h.b16 %v2505
    %v3372 = vunpack.c.l.b16 %v2506
    %v3373 = vunpack.c.h.b16 %v2506
    %v3374 = vunpack.c.l.b16 %v2507
    %v3375 = vunpack.c.h.b16 %v2507
    %v3376 = vunpack.c.l.b16 %v2508
    %v3377 = vunpack.c.h.b16 %v2508
    %v3378 = vunpack.c.l.b16 %v2509
    %v3379 = vunpack.c.h.b16 %v2509
    %v3380 = vunpack.c.l.b16 %v2510
    %v3381 = vunpack.c.h.b16 %v2510
    %v3382 = vunpack.c.l.b16 %v2511
    %v3383 = vunpack.c.h.b16 %v2511
    %v3384 = vunpack.c.l.b16 %v2512
    %v3385 = vunpack.c.h.b16 %v2512
    %v3386 = vunpack.c.l.b16 %v2513
    %v3387 = vunpack.c.h.b16 %v2513
    %v3388 = vunpack.c.l.b16 %v2514
    %v3389 = vunpack.c.h.b16 %v2514
    %v3390 = vunpack.c.l.b16 %v2515
    %v3391 = vunpack.c.h.b16 %v2515
    %v3392 = vunpack.c.l.b16 %v2516
    %v3393 = vunpack.c.h.b16 %v2516
    %v3394 = vunpack.c.l.b16 %v2517
    %v3395 = vunpack.c.h.b16 %v2517
    %v3396 = vunpack.c.l.b16 %v2518
    %v3397 = vunpack.c.h.b16 %v2518
    %v3398 = vunpack.c.l.b16 %v2519
    %v3399 = vunpack.c.h.b16 %v2519
    %v3400 = vunpack.c.l.b16 %v2520
    %v3401 = vunpack.c.h.b16 %v2520
    %v3402 = vunpack.c.l.b16 %v2521
    %v3403 = vunpack.c.h.b16 %v2521
    %v3404 = vunpack.c.l.b16 %v2522
    %v3405 = vunpack.c.h.b16 %v2522
    %v3406 = vunpack.c.l.b16 %v2523
    %v3407 = vunpack.c.h.b16 %v2523
    %v3408 = vunpack.c.l.b16 %v2524
    %v3409 = vunpack.c.h.b16 %v2524
    %v3410 = vunpack.c.l.b16 %v2525
    %v3411 = vunpack.c.h.b16 %v2525
    %v3412 = vunpack.c.l.b16 %v2526
    %v3413 = vunpack.c.h.b16 %v2526
    %v3414 = vunpack.c.l.b16 %v2527
    %v3415 = vunpack.c.h.b16 %v2527
    %v3416 = vunpack.c.l.b16 %v2528
    %v3417 = vunpack.c.h.b16 %v2528
    %v3418 = vunpack.c.l.b16 %v2529
    %v3419 = vunpack.c.h.b16 %v2529
    %v3420 = vunpack.c.l.b16 %v2530
    %v3421 = vunpack.c.h.b16 %v2530
    %v3422 = vunpack.c.l.b16 %v2531
    %v3423 = vunpack.c.h.b16 %v2531
    %v3424 = vunpack.c.l.b16 %v2532
    %v3425 = vunpack.c.h.b16 %v2532
    %v3426 = vunpack.c.l.b16 %v2533
    %v3427 = vunpack.c.h.b16 %v2533
    %v3428 = vunpack.c.l.b16 %v2534
    %v3429 = vunpack.c.h.b16 %v2534
    %v3430 = vunpack.c.l.b16 %v2535
    %v3431 = vunpack.c.h.b16 %v2535
    %v3432 = vpack.c.b16 %v2862, %v2856
    %v3433 = vpack.c.b16 %v2863, %v2857
    %v3434 = vpack.c.b16 %v2864, %v2858
    %v3435 = vpack.c.b16 %v2865, %v2859
    %v3436 = vpack.c.b16 %v2866, %v2860
    %v3437 = vpack.c.b16 %v2867, %v2861
    %v3438 = vpack.c.b16 %v2874, %v2868
    %v3439 = vpack.c.b16 %v2875, %v2869
    %v3440 = vpack.c.b16 %v2876, %v2870
    %v3441 = vpack.c.b16 %v2877, %v2871
    %v3442 = vpack.c.b16 %v2878, %v2872
    %v3443 = vpack.c.b16 %v2879, %v2873
    %v3444 = vpack.c.b16 %v2886, %v2880
    %v3445 = vpack.c.b16 %v2887, %v2881
    %v3446 = vpack.c.b16 %v2888, %v2882
    %v3447 = vpack.c.b16 %v2889, %v2883
    %v3448 = vpack.c.b16 %v2890, %v2884
    %v3449 = vpack.c.b16 %v2891, %v2885
    %v3450 = vpack.c.b16 %v2898, %v2892
    %v3451 = vpack.c.b16 %v2899, %v2893
    %v3452 = vpack.c.b16 %v2900, %v2894
    %v3453 = vpack.c.b16 %v2901, %v2895
    %v3454 = vpack.c.b16 %v2902, %v2896
    %v3455 = vpack.c.b16 %v2903, %v2897
    %v3456 = vpack.c.b16 %v2910, %v2904
    %v3457 = vpack.c.b16 %v2911, %v2905
    %v3458 = vpack.c.b16 %v2912, %v2906
    %v3459 = vpack.c.b16 %v2913, %v2907
    %v3460 = vpack.c.b16 %v2914, %v2908
    %v3461 = vpack.c.b16 %v2915, %v2909
    %v3462 = vpack.c.b16 %v2922, %v2916
    %v3463 = vpack.c.b16 %v2923, %v2917
    %v3464 = vpack.c.b16 %v2924, %v2918
    %v3465 = vpack.c.b16 %v2925, %v2919
    %v3466 = vpack.c.b16 %v2926, %v2920
    %v3467 = vpack.c.b16 %v2927, %v2921
    %v3468 = vpack.c.b16 %v2934, %v2928
    %v3469 = vpack.c.b16 %v2935, %v2929
    %v3470 = vpack.c.b16 %v2936, %v2930
    %v3471 = vpack.c.b16 %v2937, %v2931
    %v3472 = vpack.c.b16 %v2938, %v2932
    %v3473 = vpack.c.b16 %v2939, %v2933
    %v3474 = vpack.c.b16 %v2946, %v2940
    %v3475 = vpack.c.b16 %v2947, %v2941
    %v3476 = vpack.c.b16 %v2948, %v2942
    %v3477 = vpack.c.b16 %v2949, %v2943
    %v3478 = vpack.c.b16 %v2950, %v2944
    %v3479 = vpack.c.b16 %v2951, %v2945
    %v3480 = vpack.c.b16 %v2958, %v2952
    %v3481 = vpack.c.b16 %v2959, %v2953
    %v3482 = vpack.c.b16 %v2960, %v2954
    %v3483 = vpack.c.b16 %v2961, %v2955
    %v3484 = vpack.c.b16 %v2962, %v2956
    %v3485 = vpack.c.b16 %v2963, %v2957
    %v3486 = vpack.c.b16 %v2970, %v2964
    %v3487 = vpack.c.b16 %v2971, %v2965
    %v3488 = vpack.c.b16 %v2972, %v2966
    %v3489 = vpack.c.b16 %v2973, %v2967
    %v3490 = vpack.c.b16 %v2974, %v2968
    %v3491 = vpack.c.b16 %v2975, %v2969
    %v3492 = vpack.c.b16 %v2982, %v2976
    %v3493 = vpack.c.b16 %v2983, %v2977
    %v3494 = vpack.c.b16 %v2984, %v2978
    %v3495 = vpack.c.b16 %v2985, %v2979
    %v3496 = vpack.c.b16 %v2986, %v2980
    %v3497 = vpack.c.b16 %v2987, %v2981
    %v3498 = vpack.c.b16 %v2994, %v2988
    %v3499 = vpack.c.b16 %v2995, %v2989
    %v3500 = vpack.c.b16 %v2996, %v2990
    %v3501 = vpack.c.b16 %v2997, %v2991
    %v3502 = vpack.c.b16 %v2998, %v2992
    %v3503 = vpack.c.b16 %v2999, %v2993
    %v3504 = vpack.c.b16 %v3006, %v3000
    %v3505 = vpack.c.b16 %v3007, %v3001
    %v3506 = vpack.c.b16 %v3008, %v3002
    %v3507 = vpack.c.b16 %v3009, %v3003
    %v3508 = vpack.c.b16 %v3010, %v3004
    %v3509 = vpack.c.b16 %v3011, %v3005
    %v3510 = vpack.c.b16 %v3018, %v3012
    %v3511 = vpack.c.b16 %v3019, %v3013
    %v3512 = vpack.c.b16 %v3020, %v3014
    %v3513 = vpack.c.b16 %v3021, %v3015
    %v3514 = vpack.c.b16 %v3022, %v3016
    %v3515 = vpack.c.b16 %v3023, %v3017
    %v3516 = vpack.c.b16 %v3030, %v3024
    %v3517 = vpack.c.b16 %v3031, %v3025
    %v3518 = vpack.c.b16 %v3032, %v3026
    %v3519 = vpack.c.b16 %v3033, %v3027
    %v3520 = vpack.c.b16 %v3034, %v3028
    %v3521 = vpack.c.b16 %v3035, %v3029
    %v3522 = vpack.c.b16 %v3042, %v3036
    %v3523 = vpack.c.b16 %v3043, %v3037
    %v3524 = vpack.c.b16 %v3044, %v3038
    %v3525 = vpack.c.b16 %v3045, %v3039
    %v3526 = vpack.c.b16 %v3046, %v3040
    %v3527 = vpack.c.b16 %v3047, %v3041
    %v3528 = vpack.c.b16 %v3054, %v3048
    %v3529 = vpack.c.b16 %v3055, %v3049
    %v3530 = vpack.c.b16 %v3056, %v3050
    %v3531 = vpack.c.b16 %v3057, %v3051
    %v3532 = vpack.c.b16 %v3058, %v3052
    %v3533 = vpack.c.b16 %v3059, %v3053
    %v3534 = vpack.c.b16 %v3066, %v3060
    %v3535 = vpack.c.b16 %v3067, %v3061
    %v3536 = vpack.c.b16 %v3068, %v3062
    %v3537 = vpack.c.b16 %v3069, %v3063
    %v3538 = vpack.c.b16 %v3070, %v3064
    %v3539 = vpack.c.b16 %v3071, %v3065
    %v3540 = vpack.c.b16 %v3078, %v3072
    %v3541 = vpack.c.b16 %v3079, %v3073
    %v3542 = vpack.c.b16 %v3080, %v3074
    %v3543 = vpack.c.b16 %v3081, %v3075
    %v3544 = vpack.c.b16 %v3082, %v3076
    %v3545 = vpack.c.b16 %v3083, %v3077
    %v3546 = vpack.c.b16 %v3090, %v3084
    %v3547 = vpack.c.b16 %v3091, %v3085
    %v3548 = vpack.c.b16 %v3092, %v3086
    %v3549 = vpack.c.b16 %v3093, %v3087
    %v3550 = vpack.c.b16 %v3094, %v3088
    %v3551 = vpack.c.b16 %v3095, %v3089
    %v3552 = vpack.c.b16 %v3102, %v3096
    %v3553 = vpack.c.b16 %v3103, %v3097
    %v3554 = vpack.c.b16 %v3104, %v3098
    %v3555 = vpack.c.b16 %v3105, %v3099
    %v3556 = vpack.c.b16 %v3106, %v3100
    %v3557 = vpack.c.b16 %v3107, %v3101
    %v3558 = vpack.c.b16 %v3114, %v3108
    %v3559 = vpack.c.b16 %v3115, %v3109
    %v3560 = vpack.c.b16 %v3116, %v3110
    %v3561 = vpack.c.b16 %v3117, %v3111
    %v3562 = vpack.c.b16 %v3118, %v3112
    %v3563 = vpack.c.b16 %v3119, %v3113
    %v3564 = vpack.c.b16 %v3126, %v3120
    %v3565 = vpack.c.b16 %v3127, %v3121
    %v3566 = vpack.c.b16 %v3128, %v3122
    %v3567 = vpack.c.b16 %v3129, %v3123
    %v3568 = vpack.c.b16 %v3130, %v3124
    %v3569 = vpack.c.b16 %v3131, %v3125
    %v3570 = vpack.c.b16 %v3138, %v3132
    %v3571 = vpack.c.b16 %v3139, %v3133
    %v3572 = vpack.c.b16 %v3140, %v3134
    %v3573 = vpack.c.b16 %v3141, %v3135
    %v3574 = vpack.c.b16 %v3142, %v3136
    %v3575 = vpack.c.b16 %v3143, %v3137
    %v3576 = vpack.c.b16 %v3150, %v3144
    %v3577 = vpack.c.b16 %v3151, %v3145
    %v3578 = vpack.c.b16 %v3152, %v3146
    %v3579 = vpack.c.b16 %v3153, %v3147
    %v3580 = vpack.c.b16 %v3154, %v3148
    %v3581 = vpack.c.b16 %v3155, %v3149
    %v3582 = vpack.c.b16 %v3162, %v3156
    %v3583 = vpack.c.b16 %v3163, %v3157
    %v3584 = vpack.c.b16 %v3164, %v3158
    %v3585 = vpack.c.b16 %v3165, %v3159
    %v3586 = vpack.c.b16 %v3166, %v3160
    %v3587 = vpack.c.b16 %v3167, %v3161
    %v3588 = vpack.c.b16 %v3174, %v3168
    %v3589 = vpack.c.b16 %v3175, %v3169
    %v3590 = vpack.c.b16 %v3176, %v3170
    %v3591 = vpack.c.b16 %v3177, %v3171
    %v3592 = vpack.c.b16 %v3178, %v3172
    %v3593 = vpack.c.b16 %v3179, %v3173
    %v3594 = vpack.c.b16 %v3186, %v3180
    %v3595 = vpack.c.b16 %v3187, %v3181
    %v3596 = vpack.c.b16 %v3188, %v3182
    %v3597 = vpack.c.b16 %v3189, %v3183
    %v3598 = vpack.c.b16 %v3190, %v3184
    %v3599 = vpack.c.b16 %v3191, %v3185
    %v3600 = vpack.c.b16 %v3198, %v3192
    %v3601 = vpack.c.b16 %v3199, %v3193
    %v3602 = vpack.c.b16 %v3200, %v3194
    %v3603 = vpack.c.b16 %v3201, %v3195
    %v3604 = vpack.c.b16 %v3202, %v3196
    %v3605 = vpack.c.b16 %v3203, %v3197
    %v3606 = vpack.c.b16 %v3210, %v3204
    %v3607 = vpack.c.b16 %v3211, %v3205
    %v3608 = vpack.c.b16 %v3212, %v3206
    %v3609 = vpack.c.b16 %v3213, %v3207
    %v3610 = vpack.c.b16 %v3214, %v3208
    %v3611 = vpack.c.b16 %v3215, %v3209
    %v3612 = vpack.c.b16 %v3222, %v3216
    %v3613 = vpack.c.b16 %v3223, %v3217
    %v3614 = vpack.c.b16 %v3224, %v3218
    %v3615 = vpack.c.b16 %v3225, %v3219
    %v3616 = vpack.c.b16 %v3226, %v3220
    %v3617 = vpack.c.b16 %v3227, %v3221
    %v3618 = vpack.c.b16 %v3234, %v3228
    %v3619 = vpack.c.b16 %v3235, %v3229
    %v3620 = vpack.c.b16 %v3236, %v3230
    %v3621 = vpack.c.b16 %v3237, %v3231
    %v3622 = vpack.c.b16 %v3238, %v3232
    %v3623 = vpack.c.b16 %v3239, %v3233
    %v3624 = vpack.c.b16 %v3246, %v3240
    %v3625 = vpack.c.b16 %v3247, %v3241
    %v3626 = vpack.c.b16 %v3248, %v3242
    %v3627 = vpack.c.b16 %v3249, %v3243
    %v3628 = vpack.c.b16 %v3250, %v3244
    %v3629 = vpack.c.b16 %v3251, %v3245
    %v3630 = vpack.c.b16 %v3258, %v3252
    %v3631 = vpack.c.b16 %v3259, %v3253
    %v3632 = vpack.c.b16 %v3260, %v3254
    %v3633 = vpack.c.b16 %v3261, %v3255
    %v3634 = vpack.c.b16 %v3262, %v3256
    %v3635 = vpack.c.b16 %v3263, %v3257
    %v3636 = vpack.c.b16 %v3270, %v3264
    %v3637 = vpack.c.b16 %v3271, %v3265
    %v3638 = vpack.c.b16 %v3272, %v3266
    %v3639 = vpack.c.b16 %v3273, %v3267
    %v3640 = vpack.c.b16 %v3274, %v3268
    %v3641 = vpack.c.b16 %v3275, %v3269
    %v3642 = vpack.c.b16 %v3282, %v3276
    %v3643 = vpack.c.b16 %v3283, %v3277
    %v3644 = vpack.c.b16 %v3284, %v3278
    %v3645 = vpack.c.b16 %v3285, %v3279
    %v3646 = vpack.c.b16 %v3286, %v3280
    %v3647 = vpack.c.b16 %v3287, %v3281
    %v3648 = vpack.c.b16 %v3294, %v3288
    %v3649 = vpack.c.b16 %v3295, %v3289
    %v3650 = vpack.c.b16 %v3296, %v3290
    %v3651 = vpack.c.b16 %v3297, %v3291
    %v3652 = vpack.c.b16 %v3298, %v3292
    %v3653 = vpack.c.b16 %v3299, %v3293
    %v3654 = vpack.c.b16 %v3306, %v3300
    %v3655 = vpack.c.b16 %v3307, %v3301
    %v3656 = vpack.c.b16 %v3308, %v3302
    %v3657 = vpack.c.b16 %v3309, %v3303
    %v3658 = vpack.c.b16 %v3310, %v3304
    %v3659 = vpack.c.b16 %v3311, %v3305
    %v3660 = vpack.c.b16 %v3318, %v3312
    %v3661 = vpack.c.b16 %v3319, %v3313
    %v3662 = vpack.c.b16 %v3320, %v3314
    %v3663 = vpack.c.b16 %v3321, %v3315
    %v3664 = vpack.c.b16 %v3322, %v3316
    %v3665 = vpack.c.b16 %v3323, %v3317
    %v3666 = vpack.c.b16 %v3330, %v3324
    %v3667 = vpack.c.b16 %v3331, %v3325
    %v3668 = vpack.c.b16 %v3332, %v3326
    %v3669 = vpack.c.b16 %v3333, %v3327
    %v3670 = vpack.c.b16 %v3334, %v3328
    %v3671 = vpack.c.b16 %v3335, %v3329
    %v3672 = vpack.c.b16 %v3342, %v3336
    %v3673 = vpack.c.b16 %v3343, %v3337
    %v3674 = vpack.c.b16 %v3344, %v3338
    %v3675 = vpack.c.b16 %v3345, %v3339
    %v3676 = vpack.c.b16 %v3346, %v3340
    %v3677 = vpack.c.b16 %v3347, %v3341
    %v3678 = vpack.c.b16 %v3354, %v3348
    %v3679 = vpack.c.b16 %v3355, %v3349
    %v3680 = vpack.c.b16 %v3356, %v3350
    %v3681 = vpack.c.b16 %v3357, %v3351
    %v3682 = vpack.c.b16 %v3358, %v3352
    %v3683 = vpack.c.b16 %v3359, %v3353
    %v3684 = vpack.c.b16 %v3366, %v3360
    %v3685 = vpack.c.b16 %v3367, %v3361
    %v3686 = vpack.c.b16 %v3368, %v3362
    %v3687 = vpack.c.b16 %v3369, %v3363
    %v3688 = vpack.c.b16 %v3370, %v3364
    %v3689 = vpack.c.b16 %v3371, %v3365
    %v3690 = vpack.c.b16 %v3378, %v3372
    %v3691 = vpack.c.b16 %v3379, %v3373
    %v3692 = vpack.c.b16 %v3380, %v3374
    %v3693 = vpack.c.b16 %v3381, %v3375
    %v3694 = vpack.c.b16 %v3382, %v3376
    %v3695 = vpack.c.b16 %v3383, %v3377
    %v3696 = vpack.c.b16 %v3390, %v3384
    %v3697 = vpack.c.b16 %v3391, %v3385
    %v3698 = vpack.c.b16 %v3392, %v3386
    %v3699 = vpack.c.b16 %v3393, %v3387
    %v3700 = vpack.c.b16 %v3394, %v3388
    %v3701 = vpack.c.b16 %v3395, %v3389
    %v3702 = vpack.c.b16 %v3402, %v3396
    %v3703 = vpack.c.b16 %v3403, %v3397
    %v3704 = vpack.c.b16 %v3404, %v3398
    %v3705 = vpack.c.b16 %v3405, %v3399
    %v3706 = vpack.c.b16 %v3406, %v3400
    %v3707 = vpack.c.b16 %v3407, %v3401
    %v3708 = vpack.c.b16 %v3414, %v3408
    %v3709 = vpack.c.b16 %v3415, %v3409
    %v3710 = vpack.c.b16 %v3416, %v3410
    %v3711 = vpack.c.b16 %v3417, %v3411
    %v3712 = vpack.c.b16 %v3418, %v3412
    %v3713 = vpack.c.b16 %v3419, %v3413
    %v3714 = vpack.c.b16 %v3426, %v3420
    %v3715 = vpack.c.b16 %v3427, %v3421
    %v3716 = vpack.c.b16 %v3428, %v3422
    %v3717 = vpack.c.b16 %v3429, %v3423
    %v3718 = vpack.c.b16 %v3430, %v3424
    %v3719 = vpack.c.b16 %v3431, %v3425
    %4008 = vmatprep.subr.bf16.mxu0 %v3475
    %4009 = vmatpush1.bf16.msra.mxu0 %v3474
    %4010 = vmatprep.subr.bf16.mxu0 %v3469
    %4011 = vmatpush1.bf16.msra.mxu0 %v3468
    %4012 = vmatprep.subr.bf16.mxu0 %v3463
    %4013 = vmatpush1.bf16.msra.mxu0 %v3462
    %4014 = vmatprep.subr.bf16.mxu0 %v3457
    %4015 = vmatpush1.bf16.msra.mxu0 %v3456
    %4016 = vmatprep.subr.bf16.mxu0 %v3451
    %4017 = vmatpush1.bf16.msra.mxu0 %v3450
    %4018 = vmatprep.subr.bf16.mxu0 %v3445
    %4019 = vmatpush1.bf16.msra.mxu0 %v3444
    %4020 = vmatprep.subr.bf16.mxu0 %v3439
    %4021 = vmatpush1.bf16.msra.mxu0 %v3438
    %4022 = vmatprep.subr.bf16.mxu0 %v3433
    %4023 = vmatpush1.bf16.msra.mxu0 %v3432
    %4024 = vmatprep.subr.bf16.mxu0 %v3523
    %4025 = vmatpush2.bf16.msra.mxu0 %v3522
    %4026 = vmatprep.subr.bf16.mxu0 %v3517
    %4027 = vmatpush2.bf16.msra.mxu0 %v3516
    %4028 = vmatprep.subr.bf16.mxu0 %v3511
    %4029 = vmatpush2.bf16.msra.mxu0 %v3510
    %4030 = vmatprep.subr.bf16.mxu0 %v3505
    %4031 = vmatpush2.bf16.msra.mxu0 %v3504
    %4032 = vmatprep.subr.bf16.mxu0 %v3499
    %4033 = vmatpush2.bf16.msra.mxu0 %v3498
    %4034 = vmatprep.subr.bf16.mxu0 %v3493
    %4035 = vmatpush2.bf16.msra.mxu0 %v3492
    %4036 = vmatprep.subr.bf16.mxu0 %v3487
    %4037 = vmatpush2.bf16.msra.mxu0 %v3486
    %4038 = vmatprep.subr.bf16.mxu0 %v3481
    %4039 = vmatpush2.bf16.msra.mxu0 %v3480
    %4040 = vmatprep.mubr.bf16.mxu0 %v2243
    %4041 = vmatmul.mubr.bf16.gmra.mxu0 %v2242
    %v4042 = vpop.f32.mrf.mxu0
    %v4043 = vadd.f32 %v2541, %v4042
    %v4044 = vpop.f32.mrf.mxu0
    %v4045 = vadd.f32 %v2545, %v4044
    %v4046 = vpop.f32.mrf.mxu0
    %v4047 = vpop.f32.mrf.mxu0
    %4048 = vdwg.mxu0
    %4049 = vmatprep.subr.bf16.mxu0 %v3571
    %4050 = vmatpush1.bf16.msra.mxu0 %v3570
    %4051 = vmatprep.subr.bf16.mxu0 %v3565
    %4052 = vmatpush1.bf16.msra.mxu0 %v3564
    %4053 = vmatprep.subr.bf16.mxu0 %v3559
    %4054 = vmatpush1.bf16.msra.mxu0 %v3558
    %4055 = vmatprep.subr.bf16.mxu0 %v3553
    %4056 = vmatpush1.bf16.msra.mxu0 %v3552
    %4057 = vmatprep.subr.bf16.mxu0 %v3547
    %4058 = vmatpush1.bf16.msra.mxu0 %v3546
    %4059 = vmatprep.subr.bf16.mxu0 %v3541
    %4060 = vmatpush1.bf16.msra.mxu0 %v3540
    %4061 = vmatprep.subr.bf16.mxu0 %v3535
    %4062 = vmatpush1.bf16.msra.mxu0 %v3534
    %4063 = vmatprep.subr.bf16.mxu0 %v3529
    %4064 = vmatpush1.bf16.msra.mxu0 %v3528
    %4065 = vmatprep.subr.bf16.mxu0 %v3619
    %4066 = vmatpush2.bf16.msra.mxu0 %v3618
    %4067 = vmatprep.subr.bf16.mxu0 %v3613
    %4068 = vmatpush2.bf16.msra.mxu0 %v3612
    %4069 = vmatprep.subr.bf16.mxu0 %v3607
    %4070 = vmatpush2.bf16.msra.mxu0 %v3606
    %4071 = vmatprep.subr.bf16.mxu0 %v3601
    %4072 = vmatpush2.bf16.msra.mxu0 %v3600
    %4073 = vmatprep.subr.bf16.mxu0 %v3595
    %4074 = vmatpush2.bf16.msra.mxu0 %v3594
    %4075 = vmatprep.subr.bf16.mxu0 %v3589
    %4076 = vmatpush2.bf16.msra.mxu0 %v3588
    %4077 = vmatprep.subr.bf16.mxu0 %v3583
    %4078 = vmatpush2.bf16.msra.mxu0 %v3582
    %4079 = vmatprep.subr.bf16.mxu0 %v3577
    %4080 = vmatpush2.bf16.msra.mxu0 %v3576
    %4081 = vmatprep.mubr.bf16.mxu0 %v2245
    %4082 = vmatmul.mubr.bf16.gmra.mxu0 %v2244
    %v4083 = vpop.f32.mrf.mxu0
    %v4084 = vadd.f32 %v4043, %v4083
    %v4085 = vpop.f32.mrf.mxu0
    %v4086 = vadd.f32 %v4045, %v4085
    %v4087 = vpop.f32.mrf.mxu0
    %v4088 = vpop.f32.mrf.mxu0
    %4089 = vdwg.mxu0
    %4090 = vmatprep.subr.bf16.mxu0 %v3667
    %4091 = vmatpush1.bf16.msra.mxu0 %v3666
    %4092 = vmatprep.subr.bf16.mxu0 %v3661
    %4093 = vmatpush1.bf16.msra.mxu0 %v3660
    %4094 = vmatprep.subr.bf16.mxu0 %v3655
    %4095 = vmatpush1.bf16.msra.mxu0 %v3654
    %4096 = vmatprep.subr.bf16.mxu0 %v3649
    %4097 = vmatpush1.bf16.msra.mxu0 %v3648
    %4098 = vmatprep.subr.bf16.mxu0 %v3643
    %4099 = vmatpush1.bf16.msra.mxu0 %v3642
    %4100 = vmatprep.subr.bf16.mxu0 %v3637
    %4101 = vmatpush1.bf16.msra.mxu0 %v3636
    %4102 = vmatprep.subr.bf16.mxu0 %v3631
    %4103 = vmatpush1.bf16.msra.mxu0 %v3630
    %4104 = vmatprep.subr.bf16.mxu0 %v3625
    %4105 = vmatpush1.bf16.msra.mxu0 %v3624
    %4106 = vmatprep.subr.bf16.mxu0 %v3715
    %4107 = vmatpush2.bf16.msra.mxu0 %v3714
    %4108 = vmatprep.subr.bf16.mxu0 %v3709
    %4109 = vmatpush2.bf16.msra.mxu0 %v3708
    %4110 = vmatprep.subr.bf16.mxu0 %v3703
    %4111 = vmatpush2.bf16.msra.mxu0 %v3702
    %4112 = vmatprep.subr.bf16.mxu0 %v3697
    %4113 = vmatpush2.bf16.msra.mxu0 %v3696
    %4114 = vmatprep.subr.bf16.mxu0 %v3691
    %4115 = vmatpush2.bf16.msra.mxu0 %v3690
    %4116 = vmatprep.subr.bf16.mxu0 %v3685
    %4117 = vmatpush2.bf16.msra.mxu0 %v3684
    %4118 = vmatprep.subr.bf16.mxu0 %v3679
    %4119 = vmatpush2.bf16.msra.mxu0 %v3678
    %4120 = vmatprep.subr.bf16.mxu0 %v3673
    %4121 = vmatpush2.bf16.msra.mxu0 %v3672
    %4122 = vmatprep.mubr.bf16.mxu0 %v2247
    %4123 = vmatmul.mubr.bf16.gmra.mxu0 %v2246
    %v4124 = vpop.f32.mrf.mxu0
    %v4125 = vadd.f32 %v4084, %v4124
    %v4126 = vpop.f32.mrf.mxu0
    %v4127 = vadd.f32 %v4086, %v4126
    %v4128 = vpop.f32.mrf.mxu0
    %v4129 = vpop.f32.mrf.mxu0
    %4130 = vdwg.mxu0
    %4131 = vmatprep.subr.bf16.mxu0 %v3477
    %4132 = vmatpush1.bf16.msra.mxu0 %v3476
    %4133 = vmatprep.subr.bf16.mxu0 %v3471
    %4134 = vmatpush1.bf16.msra.mxu0 %v3470
    %4135 = vmatprep.subr.bf16.mxu0 %v3465
    %4136 = vmatpush1.bf16.msra.mxu0 %v3464
    %4137 = vmatprep.subr.bf16.mxu0 %v3459
    %4138 = vmatpush1.bf16.msra.mxu0 %v3458
    %4139 = vmatprep.subr.bf16.mxu0 %v3453
    %4140 = vmatpush1.bf16.msra.mxu0 %v3452
    %4141 = vmatprep.subr.bf16.mxu0 %v3447
    %4142 = vmatpush1.bf16.msra.mxu0 %v3446
    %4143 = vmatprep.subr.bf16.mxu0 %v3441
    %4144 = vmatpush1.bf16.msra.mxu0 %v3440
    %4145 = vmatprep.subr.bf16.mxu0 %v3435
    %4146 = vmatpush1.bf16.msra.mxu0 %v3434
    %4147 = vmatprep.subr.bf16.mxu0 %v3525
    %4148 = vmatpush2.bf16.msra.mxu0 %v3524
    %4149 = vmatprep.subr.bf16.mxu0 %v3519
    %4150 = vmatpush2.bf16.msra.mxu0 %v3518
    %4151 = vmatprep.subr.bf16.mxu0 %v3513
    %4152 = vmatpush2.bf16.msra.mxu0 %v3512
    %4153 = vmatprep.subr.bf16.mxu0 %v3507
    %4154 = vmatpush2.bf16.msra.mxu0 %v3506
    %4155 = vmatprep.subr.bf16.mxu0 %v3501
    %4156 = vmatpush2.bf16.msra.mxu0 %v3500
    %4157 = vmatprep.subr.bf16.mxu0 %v3495
    %4158 = vmatpush2.bf16.msra.mxu0 %v3494
    %4159 = vmatprep.subr.bf16.mxu0 %v3489
    %4160 = vmatpush2.bf16.msra.mxu0 %v3488
    %4161 = vmatprep.subr.bf16.mxu0 %v3483
    %4162 = vmatpush2.bf16.msra.mxu0 %v3482
    %4163 = vmatprep.mubr.bf16.mxu0 %v2243
    %4164 = vmatmul.mubr.bf16.gmra.mxu0 %v2242
    %v4165 = vpop.f32.mrf.mxu0
    %v4166 = vadd.f32 %v2549, %v4165
    %v4167 = vpop.f32.mrf.mxu0
    %v4168 = vadd.f32 %v2553, %v4167
    %v4169 = vpop.f32.mrf.mxu0
    %v4170 = vpop.f32.mrf.mxu0
    %4171 = vdwg.mxu0
    %4172 = vmatprep.subr.bf16.mxu0 %v3573
    %4173 = vmatpush1.bf16.msra.mxu0 %v3572
    %4174 = vmatprep.subr.bf16.mxu0 %v3567
    %4175 = vmatpush1.bf16.msra.mxu0 %v3566
    %4176 = vmatprep.subr.bf16.mxu0 %v3561
    %4177 = vmatpush1.bf16.msra.mxu0 %v3560
    %4178 = vmatprep.subr.bf16.mxu0 %v3555
    %4179 = vmatpush1.bf16.msra.mxu0 %v3554
    %4180 = vmatprep.subr.bf16.mxu0 %v3549
    %4181 = vmatpush1.bf16.msra.mxu0 %v3548
    %4182 = vmatprep.subr.bf16.mxu0 %v3543
    %4183 = vmatpush1.bf16.msra.mxu0 %v3542
    %4184 = vmatprep.subr.bf16.mxu0 %v3537
    %4185 = vmatpush1.bf16.msra.mxu0 %v3536
    %4186 = vmatprep.subr.bf16.mxu0 %v3531
    %4187 = vmatpush1.bf16.msra.mxu0 %v3530
    %4188 = vmatprep.subr.bf16.mxu0 %v3621
    %4189 = vmatpush2.bf16.msra.mxu0 %v3620
    %4190 = vmatprep.subr.bf16.mxu0 %v3615
    %4191 = vmatpush2.bf16.msra.mxu0 %v3614
    %4192 = vmatprep.subr.bf16.mxu0 %v3609
    %4193 = vmatpush2.bf16.msra.mxu0 %v3608
    %4194 = vmatprep.subr.bf16.mxu0 %v3603
    %4195 = vmatpush2.bf16.msra.mxu0 %v3602
    %4196 = vmatprep.subr.bf16.mxu0 %v3597
    %4197 = vmatpush2.bf16.msra.mxu0 %v3596
    %4198 = vmatprep.subr.bf16.mxu0 %v3591
    %4199 = vmatpush2.bf16.msra.mxu0 %v3590
    %4200 = vmatprep.subr.bf16.mxu0 %v3585
    %4201 = vmatpush2.bf16.msra.mxu0 %v3584
    %4202 = vmatprep.subr.bf16.mxu0 %v3579
    %4203 = vmatpush2.bf16.msra.mxu0 %v3578
    %4204 = vmatprep.mubr.bf16.mxu0 %v2245
    %4205 = vmatmul.mubr.bf16.gmra.mxu0 %v2244
    %v4206 = vpop.f32.mrf.mxu0
    %v4207 = vadd.f32 %v4166, %v4206
    %v4208 = vpop.f32.mrf.mxu0
    %v4209 = vadd.f32 %v4168, %v4208
    %v4210 = vpop.f32.mrf.mxu0
    %v4211 = vpop.f32.mrf.mxu0
    %4212 = vdwg.mxu0
    %4213 = vmatprep.subr.bf16.mxu0 %v3669
    %4214 = vmatpush1.bf16.msra.mxu0 %v3668
    %4215 = vmatprep.subr.bf16.mxu0 %v3663
    %4216 = vmatpush1.bf16.msra.mxu0 %v3662
    %4217 = vmatprep.subr.bf16.mxu0 %v3657
    %4218 = vmatpush1.bf16.msra.mxu0 %v3656
    %4219 = vmatprep.subr.bf16.mxu0 %v3651
    %4220 = vmatpush1.bf16.msra.mxu0 %v3650
    %4221 = vmatprep.subr.bf16.mxu0 %v3645
    %4222 = vmatpush1.bf16.msra.mxu0 %v3644
    %4223 = vmatprep.subr.bf16.mxu0 %v3639
    %4224 = vmatpush1.bf16.msra.mxu0 %v3638
    %4225 = vmatprep.subr.bf16.mxu0 %v3633
    %4226 = vmatpush1.bf16.msra.mxu0 %v3632
    %4227 = vmatprep.subr.bf16.mxu0 %v3627
    %4228 = vmatpush1.bf16.msra.mxu0 %v3626
    %4229 = vmatprep.subr.bf16.mxu0 %v3717
    %4230 = vmatpush2.bf16.msra.mxu0 %v3716
    %4231 = vmatprep.subr.bf16.mxu0 %v3711
    %4232 = vmatpush2.bf16.msra.mxu0 %v3710
    %4233 = vmatprep.subr.bf16.mxu0 %v3705
    %4234 = vmatpush2.bf16.msra.mxu0 %v3704
    %4235 = vmatprep.subr.bf16.mxu0 %v3699
    %4236 = vmatpush2.bf16.msra.mxu0 %v3698
    %4237 = vmatprep.subr.bf16.mxu0 %v3693
    %4238 = vmatpush2.bf16.msra.mxu0 %v3692
    %4239 = vmatprep.subr.bf16.mxu0 %v3687
    %4240 = vmatpush2.bf16.msra.mxu0 %v3686
    %4241 = vmatprep.subr.bf16.mxu0 %v3681
    %4242 = vmatpush2.bf16.msra.mxu0 %v3680
    %4243 = vmatprep.subr.bf16.mxu0 %v3675
    %4244 = vmatpush2.bf16.msra.mxu0 %v3674
    %4245 = vmatprep.mubr.bf16.mxu0 %v2247
    %4246 = vmatmul.mubr.bf16.gmra.mxu0 %v2246
    %v4247 = vpop.f32.mrf.mxu0
    %v4248 = vadd.f32 %v4207, %v4247
    %v4249 = vpop.f32.mrf.mxu0
    %v4250 = vadd.f32 %v4209, %v4249
    %v4251 = vpop.f32.mrf.mxu0
    %v4252 = vpop.f32.mrf.mxu0
    %4253 = vdwg.mxu0
    %4254 = vmatprep.subr.bf16.mxu0 %v3479
    %4255 = vmatpush1.bf16.msra.mxu0 %v3478
    %4256 = vmatprep.subr.bf16.mxu0 %v3473
    %4257 = vmatpush1.bf16.msra.mxu0 %v3472
    %4258 = vmatprep.subr.bf16.mxu0 %v3467
    %4259 = vmatpush1.bf16.msra.mxu0 %v3466
    %4260 = vmatprep.subr.bf16.mxu0 %v3461
    %4261 = vmatpush1.bf16.msra.mxu0 %v3460
    %4262 = vmatprep.subr.bf16.mxu0 %v3455
    %4263 = vmatpush1.bf16.msra.mxu0 %v3454
    %4264 = vmatprep.subr.bf16.mxu0 %v3449
    %4265 = vmatpush1.bf16.msra.mxu0 %v3448
    %4266 = vmatprep.subr.bf16.mxu0 %v3443
    %4267 = vmatpush1.bf16.msra.mxu0 %v3442
    %4268 = vmatprep.subr.bf16.mxu0 %v3437
    %4269 = vmatpush1.bf16.msra.mxu0 %v3436
    %4270 = vmatprep.subr.bf16.mxu0 %v3527
    %4271 = vmatpush2.bf16.msra.mxu0 %v3526
    %4272 = vmatprep.subr.bf16.mxu0 %v3521
    %4273 = vmatpush2.bf16.msra.mxu0 %v3520
    %4274 = vmatprep.subr.bf16.mxu0 %v3515
    %4275 = vmatpush2.bf16.msra.mxu0 %v3514
    %4276 = vmatprep.subr.bf16.mxu0 %v3509
    %4277 = vmatpush2.bf16.msra.mxu0 %v3508
    %4278 = vmatprep.subr.bf16.mxu0 %v3503
    %4279 = vmatpush2.bf16.msra.mxu0 %v3502
    %4280 = vmatprep.subr.bf16.mxu0 %v3497
    %4281 = vmatpush2.bf16.msra.mxu0 %v3496
    %4282 = vmatprep.subr.bf16.mxu0 %v3491
    %4283 = vmatpush2.bf16.msra.mxu0 %v3490
    %4284 = vmatprep.subr.bf16.mxu0 %v3485
    %4285 = vmatpush2.bf16.msra.mxu0 %v3484
    %4286 = vmatprep.mubr.bf16.mxu0 %v2243
    %4287 = vmatmul.mubr.bf16.gmra.mxu0 %v2242
    %v4288 = vpop.f32.mrf.mxu0
    %v4289 = vadd.f32 %v2557, %v4288
    %v4290 = vpop.f32.mrf.mxu0
    %v4291 = vadd.f32 %v2561, %v4290
    %v4292 = vpop.f32.mrf.mxu0
    %v4293 = vpop.f32.mrf.mxu0
    %4294 = vdwg.mxu0
    %4295 = vmatprep.subr.bf16.mxu0 %v3575
    %4296 = vmatpush1.bf16.msra.mxu0 %v3574
    %4297 = vmatprep.subr.bf16.mxu0 %v3569
    %4298 = vmatpush1.bf16.msra.mxu0 %v3568
    %4299 = vmatprep.subr.bf16.mxu0 %v3563
    %4300 = vmatpush1.bf16.msra.mxu0 %v3562
    %4301 = vmatprep.subr.bf16.mxu0 %v3557
    %4302 = vmatpush1.bf16.msra.mxu0 %v3556
    %4303 = vmatprep.subr.bf16.mxu0 %v3551
    %4304 = vmatpush1.bf16.msra.mxu0 %v3550
    %4305 = vmatprep.subr.bf16.mxu0 %v3545
    %4306 = vmatpush1.bf16.msra.mxu0 %v3544
    %4307 = vmatprep.subr.bf16.mxu0 %v3539
    %4308 = vmatpush1.bf16.msra.mxu0 %v3538
    %4309 = vmatprep.subr.bf16.mxu0 %v3533
    %4310 = vmatpush1.bf16.msra.mxu0 %v3532
    %4311 = vmatprep.subr.bf16.mxu0 %v3623
    %4312 = vmatpush2.bf16.msra.mxu0 %v3622
    %4313 = vmatprep.subr.bf16.mxu0 %v3617
    %4314 = vmatpush2.bf16.msra.mxu0 %v3616
    %4315 = vmatprep.subr.bf16.mxu0 %v3611
    %4316 = vmatpush2.bf16.msra.mxu0 %v3610
    %4317 = vmatprep.subr.bf16.mxu0 %v3605
    %4318 = vmatpush2.bf16.msra.mxu0 %v3604
    %4319 = vmatprep.subr.bf16.mxu0 %v3599
    %4320 = vmatpush2.bf16.msra.mxu0 %v3598
    %4321 = vmatprep.subr.bf16.mxu0 %v3593
    %4322 = vmatpush2.bf16.msra.mxu0 %v3592
    %4323 = vmatprep.subr.bf16.mxu0 %v3587
    %4324 = vmatpush2.bf16.msra.mxu0 %v3586
    %4325 = vmatprep.subr.bf16.mxu0 %v3581
    %4326 = vmatpush2.bf16.msra.mxu0 %v3580
    %4327 = vmatprep.mubr.bf16.mxu0 %v2245
    %4328 = vmatmul.mubr.bf16.gmra.mxu0 %v2244
    %v4329 = vpop.f32.mrf.mxu0
    %v4330 = vadd.f32 %v4289, %v4329
    %v4331 = vpop.f32.mrf.mxu0
    %v4332 = vadd.f32 %v4291, %v4331
    %v4333 = vpop.f32.mrf.mxu0
    %v4334 = vpop.f32.mrf.mxu0
    %4335 = vdwg.mxu0
    %4336 = vmatprep.subr.bf16.mxu0 %v3671
    %4337 = vmatpush1.bf16.msra.mxu0 %v3670
    %4338 = vmatprep.subr.bf16.mxu0 %v3665
    %4339 = vmatpush1.bf16.msra.mxu0 %v3664
    %4340 = vmatprep.subr.bf16.mxu0 %v3659
    %4341 = vmatpush1.bf16.msra.mxu0 %v3658
    %4342 = vmatprep.subr.bf16.mxu0 %v3653
    %4343 = vmatpush1.bf16.msra.mxu0 %v3652
    %4344 = vmatprep.subr.bf16.mxu0 %v3647
    %4345 = vmatpush1.bf16.msra.mxu0 %v3646
    %4346 = vmatprep.subr.bf16.mxu0 %v3641
    %4347 = vmatpush1.bf16.msra.mxu0 %v3640
    %4348 = vmatprep.subr.bf16.mxu0 %v3635
    %4349 = vmatpush1.bf16.msra.mxu0 %v3634
    %4350 = vmatprep.subr.bf16.mxu0 %v3629
    %4351 = vmatpush1.bf16.msra.mxu0 %v3628
    %4352 = vmatprep.subr.bf16.mxu0 %v3719
    %4353 = vmatpush2.bf16.msra.mxu0 %v3718
    %4354 = vmatprep.subr.bf16.mxu0 %v3713
    %4355 = vmatpush2.bf16.msra.mxu0 %v3712
    %4356 = vmatprep.subr.bf16.mxu0 %v3707
    %4357 = vmatpush2.bf16.msra.mxu0 %v3706
    %4358 = vmatprep.subr.bf16.mxu0 %v3701
    %4359 = vmatpush2.bf16.msra.mxu0 %v3700
    %4360 = vmatprep.subr.bf16.mxu0 %v3695
    %4361 = vmatpush2.bf16.msra.mxu0 %v3694
    %4362 = vmatprep.subr.bf16.mxu0 %v3689
    %4363 = vmatpush2.bf16.msra.mxu0 %v3688
    %4364 = vmatprep.subr.bf16.mxu0 %v3683
    %4365 = vmatpush2.bf16.msra.mxu0 %v3682
    %4366 = vmatprep.subr.bf16.mxu0 %v3677
    %4367 = vmatpush2.bf16.msra.mxu0 %v3676
    %4368 = vmatprep.mubr.bf16.mxu0 %v2247
    %4369 = vmatmul.mubr.bf16.gmra.mxu0 %v2246
    %v4370 = vpop.f32.mrf.mxu0
    %v4371 = vadd.f32 %v4330, %v4370
    %v4372 = vpop.f32.mrf.mxu0
    %v4373 = vadd.f32 %v4332, %v4372
    %v4374 = vpop.f32.mrf.mxu0
    %v4375 = vpop.f32.mrf.mxu0
    %4376 = vdwg.mxu0
    %v4377 = vsub.f32 0.0, %v4125
    %v4378 = vsub.f32 0.0, %v4127
    %v4379 = vsub.f32 0.0, %v4248
    %v4380 = vsub.f32 0.0, %v4250
    %v4381 = vsub.f32 0.0, %v4371
    %v4382 = vsub.f32 0.0, %v4373
    %v4383 = vmul.f32 %v4377, 1.442695
    %v4384 = vpow.pop %v4383
    %v4385 = vmul.f32 %v4378, 1.442695
    %v4386 = vpow.pop %v4385
    %v4387 = vmul.f32 %v4379, 1.442695
    %v4388 = vpow.pop %v4387
    %v4389 = vmul.f32 %v4380, 1.442695
    %v4390 = vpow.pop %v4389
    %v4391 = vmul.f32 %v4381, 1.442695
    %v4392 = vpow.pop %v4391
    %v4393 = vmul.f32 %v4382, 1.442695
    %v4394 = vpow.pop %v4393
    %v4395 = vadd.f32 %v4384, 1.0
    %v4396 = vadd.f32 %v4386, 1.0
    %v4397 = vadd.f32 %v4388, 1.0
    %v4398 = vadd.f32 %v4390, 1.0
    %v4399 = vadd.f32 %v4392, 1.0
    %v4400 = vadd.f32 %v4394, 1.0
    %v4401 = vrcp.pop %v4395
    %v4402 = vrcp.pop %v4396
    %v4403 = vrcp.pop %v4397
    %v4404 = vrcp.pop %v4398
    %v4405 = vrcp.pop %v4399
    %v4406 = vrcp.pop %v4400
    %4407 = vst [vmem:[#allocation11] sm:$0xff] %v4401
    %4408 = vst [vmem:[#allocation11 + $0x8] sm:$0xff] %v4402
    %4409 = vst [vmem:[#allocation11 + $0x10] sm:$0xff] %v4403
    %4410 = vst [vmem:[#allocation11 + $0x18] sm:$0xff] %v4404
    %4411 = vst [vmem:[#allocation11 + $0x20] sm:$0xff] %v4405
    %4412 = vst [vmem:[#allocation11 + $0x28] sm:$0xff] %v4406
    // Predicated region
    $region42: #{tpu_custom_call.1} parent=1 // pred_check
      _
    $region43: #{tpu_custom_call.1} parent=1 // pred_check_branch
      %4414 = sbr.rel (0) target = $region45
    $region44: #{tpu_custom_call.1} parent=1 // pred_region
      %s4416 = ssub.s32 768, 768
      %4417 = vsyncadd [#allocation4], %s4416
      %s4419 = sshll.u32 [#allocation11], 4
      %s4420 = int_to_ptr.vmem [resolvable:$true] %s4419
      %4422 = dma.vmem_to_hbm [thread:$0]  %s4420, 768, %s5, [#allocation4]
    $region45: #{tpu_custom_call.1} parent=1 // pred_fallthru
      _
    // Predicated region
    $region46: #{tpu_custom_call.1} parent=1 // pred_check
      _
    $region47: #{tpu_custom_call.1} parent=1 // pred_check_branch
      %4424 = sbr.rel (0) target = $region49
    $region48: #{tpu_custom_call.1} parent=1 // pred_region
      %4425 = dma.done [#allocation4], 768
    $region49: #{tpu_custom_call.1} parent=1 // pred_fallthru
      _
    %4426 = vsyncpa [#allocation3], 1
    %4427 = vsyncpa [#allocation6], 1
    %4428 = vsyncpa [#allocation9], 1
    %4429 = vsyncpa [#allocation4], 1

</llo_original>
